<compile_context>
chip_gen: v7x
topology: tpu7x:2x2x1
jax: 0.10.0
libtpu: 0.0.40
codegen_flags: <defaults>
</compile_context>

<pallas_src>
import jax
import jax.numpy as jnp
from jax import lax
from jax.experimental import pallas as pl
from jax.experimental.pallas import tpu as pltpu

NEG_SLOPE = 0.01  # PyTorch LeakyReLU default negative slope


def _leaky(v):
    return jnp.where(v > 0, v, NEG_SLOPE * v)


# ----------------------------------------------------------------------------
# Kernel: one grid step == one OneLayerScoreNetwork layer over the full batch.
# ----------------------------------------------------------------------------
def score_net_kernel(x_ref, adj0_ref, fcol_ref, pmask_ref, bdmask_ref,
                     wnode_ref, w0ij_ref, w1_ref, w2_ref, w3_ref,
                     s256_ref, s128_ref, bg_ref, smem_ref,
                     out_ref, adj_scr):
    l = pl.program_id(0)
    B, N, _ = adj0_ref.shape
    BN, F = x_ref.shape
    H8 = w0ij_ref.shape[-1] // 2       # 8F  (read || res fused hidden width)
    H4 = H8 // 2                       # 4F

    # Initialize the carried adjacency on the first layer.
    @pl.when(l == 0)
    def _():
        adj_scr[...] = adj0_ref[...]

    xb = x_ref[...]                    # (B*N, F)   bf16
    A = adj_scr[...]                   # (B, N, N)  f32 adjacency for this layer
    fcol = fcol_ref[...]               # (B*N, 1)   node flags (column)
    pmask = pmask_ref[...]             # (B, N, N)  flag outer product, zero diag
    bdmask = bdmask_ref[...]           # (B*N, B*N) block-diagonal mask

    # Per-layer packed params; weight slabs are VMEM-resident, indexed by l.
    s256 = s256_ref[l]                 # (4, 8F) f32
    s128 = s128_ref[l]                 # (3, 4F) f32
    bg = bg_ref[l]                     # (1, F)  f32

    # --- node features -------------------------------------------------------
    # TODO(synk): GraphNeuralNetwork.get_node_feature is defined outside the
    # given module; substituted by a deterministic one-layer GCN-style
    # transform  h = LeakyReLU(A @ x @ Wg + x @ Ws + b) * node_flags.
    A_rows = A.reshape(BN, N)
    Abd = (jnp.concatenate([A_rows] * B, axis=1) * bdmask).astype(jnp.bfloat16)
    t = jnp.dot(Abd, xb, preferred_element_type=jnp.float32)        # (BN, F)
    h_in = jnp.concatenate([t.astype(jnp.bfloat16), xb], axis=1)    # (BN, 2F)
    h = _leaky(jnp.dot(h_in, wnode_ref[l],
                       preferred_element_type=jnp.float32) + bg) * fcol

    # --- fused pair MLPs (read_score || score_res) ---------------------------
    # First Linear over cat([h_i, h_j, adj]) split into h_i / h_j / adj
    # contributions so the (B,N,N,2F+1) concat is never materialized; the two
    # MLPs are fused along the channel axis (block-diagonal deeper weights).
    hb = h.astype(jnp.bfloat16)
    z_ij = jnp.dot(hb, w0ij_ref[l], preferred_element_type=jnp.float32)  # (BN,16F)
    zi = z_ij[:, :H8].reshape(B, N, H8)
    zj = z_ij[:, H8:].reshape(B, N, H8)

    w0a = s256[0]                      # adj column of both first Linears
    b0 = s256[1]
    pre = zi[:, :, None, :] + zj[:, None, :, :] + A[..., None] * w0a + b0
    z = _leaky(pre).reshape(B * N * N, H8)                           # (B*N*N, 8F)

    z = _leaky(jnp.dot(z.astype(jnp.bfloat16), w1_ref[l],
                       preferred_element_type=jnp.float32) + s256[2])
    z = _leaky(jnp.dot(z.astype(jnp.bfloat16), w2_ref[l],
                       preferred_element_type=jnp.float32) + s256[3])
    z = _leaky(jnp.dot(z.astype(jnp.bfloat16), w3_ref[l],
                       preferred_element_type=jnp.float32) + s128[0])
    z3 = z.reshape(B, N, N, H4)

    # Final Linear (out dim 1) as masked lane reductions; biases from SMEM.
    s1 = jnp.sum(z3 * s128[1], axis=-1) + smem_ref[l, 21]
    sres = jnp.sum(z3 * s128[2], axis=-1) + smem_ref[l, 22]

    # --- score_gate: Linear(1,4)+Tanh -> Linear(4,2)+Tanh -> Linear(2,1)+Tanh,
    # fully unrolled on the VPU with SMEM scalars (no MXU).
    g = [jnp.tanh(A * smem_ref[l, k] + smem_ref[l, 4 + k]) for k in range(4)]
    u = []
    for m in range(2):
        acc = g[0] * smem_ref[l, 8 + m]
        for k in range(1, 4):
            acc = acc + g[k] * smem_ref[l, 8 + 2 * k + m]
        u.append(jnp.tanh(acc + smem_ref[l, 16 + m]))
    gate = jnp.tanh(u[0] * smem_ref[l, 18] + u[1] * smem_ref[l, 19]
                    + smem_ref[l, 20])

    score = sres * gate + s1                                         # (B, N, N)

    # triu(1)+tril(-1) (zero diag) and mask_adjs folded into pmask; symmetrize.
    score = score * pmask
    score = score + jnp.swapaxes(score, -1, -2)

    out_ref[...] = score               # only last layer survives to HBM
    adj_scr[...] = A + 0.1 * score     # adjs update for next layer


# ----------------------------------------------------------------------------
# Parameter initialization (PyTorch nn.Linear default init) and packing.
# ----------------------------------------------------------------------------
def _linear(key, fan_in, fan_out):
    kw, kb = jax.random.split(key)
    bound = 1.0 / (fan_in ** 0.5)
    w = jax.random.uniform(kw, (fan_in, fan_out), jnp.float32, -bound, bound)
    b = jax.random.uniform(kb, (1, fan_out), jnp.float32, -bound, bound)
    return w, b


def init_layer_params(key, feature_num):
    F = feature_num
    Din = 2 * F + 1
    ks = jax.random.split(key, 16)
    p = {}
    # GNN stand-in (aggregate + self transform)
    p["wg"], _ = _linear(ks[0], F, F)
    p["ws"], p["bg"] = _linear(ks[1], F, F)
    # read_score MLP: Din -> 4F -> 4F -> 4F -> 2F -> 1
    w0, p["rb0"] = _linear(ks[2], Din, 4 * F)
    p["rw0i"], p["rw0j"], p["rw0a"] = w0[:F], w0[F:2 * F], w0[2 * F:]
    p["rw1"], p["rb1"] = _linear(ks[3], 4 * F, 4 * F)
    p["rw2"], p["rb2"] = _linear(ks[4], 4 * F, 4 * F)
    p["rw3"], p["rb3"] = _linear(ks[5], 4 * F, 2 * F)
    w4, p["rb4"] = _linear(ks[6], 2 * F, 1)
    p["rw4t"] = w4.T                       # (1, 2F)
    # score_gate: 1 -> 4 -> 2 -> 1
    p["gw0"], p["gb0"] = _linear(ks[7], 1, 4)
    p["gw1"], p["gb1"] = _linear(ks[8], 4, 2)
    gw2, p["gb2"] = _linear(ks[9], 2, 1)
    p["gw2t"] = gw2.T                      # (1, 2)
    # score_res MLP: same shapes as read_score
    w0, p["sb0"] = _linear(ks[10], Din, 4 * F)
    p["sw0i"], p["sw0j"], p["sw0a"] = w0[:F], w0[F:2 * F], w0[2 * F:]
    p["sw1"], p["sb1"] = _linear(ks[11], 4 * F, 4 * F)
    p["sw2"], p["sb2"] = _linear(ks[12], 4 * F, 4 * F)
    p["sw3"], p["sb3"] = _linear(ks[13], 4 * F, 2 * F)
    w4, p["sb4"] = _linear(ks[14], 2 * F, 1)
    p["sw4t"] = w4.T
    return p


def _blockdiag(a, b):
    za = jnp.zeros((a.shape[0], b.shape[1]), jnp.float32)
    zb = jnp.zeros((b.shape[0], a.shape[1]), jnp.float32)
    return jnp.concatenate([jnp.concatenate([a, za], 1),
                            jnp.concatenate([zb, b], 1)], 0)


def pack_params(layer_params_list):
    """Stack per-layer params along a leading layer axis and fuse read/res."""
    F = layer_params_list[0]["wg"].shape[0]
    cols = {k: [] for k in ("wnode", "w0ij", "w1", "w2", "w3",
                            "s256", "s128", "bg", "smem")}
    for p in layer_params_list:
        # [A@x | x] @ [Wg ; Ws]  ->  one (2F, F) node-feature weight
        cols["wnode"].append(jnp.concatenate([p["wg"], p["ws"]], axis=0))
        # fused first pair-Linear: columns = [read_i | res_i | read_j | res_j]
        w0i = jnp.concatenate([p["rw0i"], p["sw0i"]], axis=1)        # (F, 8F)
        w0j = jnp.concatenate([p["rw0j"], p["sw0j"]], axis=1)        # (F, 8F)
        cols["w0ij"].append(jnp.concatenate([w0i, w0j], axis=1))     # (F, 16F)
        cols["w1"].append(_blockdiag(p["rw1"], p["sw1"]))
        cols["w2"].append(_blockdiag(p["rw2"], p["sw2"]))
        cols["w3"].append(_blockdiag(p["rw3"], p["sw3"]))
        cols["s256"].append(jnp.stack([
            jnp.concatenate([p["rw0a"].ravel(), p["sw0a"].ravel()]),
            jnp.concatenate([p["rb0"].ravel(), p["sb0"].ravel()]),
            jnp.concatenate([p["rb1"].ravel(), p["sb1"].ravel()]),
            jnp.concatenate([p["rb2"].ravel(), p["sb2"].ravel()])]))
        z2f = jnp.zeros((2 * F,), jnp.float32)
        cols["s128"].append(jnp.stack([
            jnp.concatenate([p["rb3"].ravel(), p["sb3"].ravel()]),
            jnp.concatenate([p["rw4t"].ravel(), z2f]),   # read w4 (masked)
            jnp.concatenate([z2f, p["sw4t"].ravel()])])) # res  w4 (masked)
        cols["bg"].append(p["bg"])
        cols["smem"].append(jnp.concatenate([
            p["gw0"].ravel(), p["gb0"].ravel(), p["gw1"].ravel(),
            p["gb1"].ravel(), p["gw2t"].ravel(), p["gb2"].ravel(),
            p["rb4"].ravel(), p["sb4"].ravel(),
            jnp.zeros((9,), jnp.float32)]))              # pad to 32 scalars
    packed = {k: jnp.stack(v, 0) for k, v in cols.items()}
    for k in ("wnode", "w0ij", "w1", "w2", "w3"):
        packed[k] = packed[k].astype(jnp.bfloat16)
    return packed


# ----------------------------------------------------------------------------
# Wrapper: single fused pallas_call over all layers; all weights VMEM-resident.
# ----------------------------------------------------------------------------
@jax.jit
def score_network_forward(packed, x, adjs, node_flags):
    B, N, F = x.shape
    L = packed["w1"].shape[0]

    x2 = x.reshape(B * N, F).astype(jnp.bfloat16)
    fcol = node_flags.reshape(B * N, 1).astype(jnp.float32)
    pm = (node_flags[:, :, None] * node_flags[:, None, :]).astype(jnp.float32)
    pmask_nd = pm * (1.0 - jnp.eye(N, dtype=jnp.float32))[None]      # diag folded in
    bdmask = jnp.kron(jnp.eye(B, dtype=jnp.float32),
                      jnp.ones((N, N), jnp.float32))                 # (B*N, B*N)
    adj0 = adjs.astype(jnp.float32)

    def const_spec(arr):
        nd = arr.ndim
        return pl.BlockSpec(arr.shape, lambda l, nd=nd: (0,) * nd)

    data = [x2, adj0, fcol, pmask_nd, bdmask]
    wkeys = ("wnode", "w0ij", "w1", "w2", "w3", "s256", "s128", "bg")
    weights = [packed[k] for k in wkeys]

    in_specs = ([const_spec(a) for a in data]
                + [const_spec(w) for w in weights]
                + [pl.BlockSpec(memory_space=pltpu.MemorySpace.SMEM)])

    return pl.pallas_call(
        score_net_kernel,
        out_shape=jax.ShapeDtypeStruct((B, N, N), jnp.float32),
        grid=(L,),
        in_specs=in_specs,
        out_specs=pl.BlockSpec((B, N, N), lambda l: (0, 0, 0)),
        scratch_shapes=[pltpu.VMEM((B, N, N), jnp.float32)],
        compiler_params=pltpu.CompilerParams(
            dimension_semantics=("arbitrary",),
            vmem_limit_bytes=32 * 1024 * 1024),
    )(*data, *weights, packed["smem"])


if __name__ == "__main__":
    B, N, F = 2, 8, 32
    stack_num = 2

    key = jax.random.PRNGKey(0)
    kx, ka, kp = jax.random.split(key, 3)

    x = jax.random.normal(kx, (B, N, F), jnp.float32)
    valid = jnp.array([8, 6])
    node_flags = (jnp.arange(N)[None, :] < valid[:, None]).astype(jnp.float32)

    a = jax.random.uniform(ka, (B, N, N), jnp.float32)
    a = (((a + jnp.swapaxes(a, -1, -2)) * 0.5) > 0.5).astype(jnp.float32)
    adjs = a * (1.0 - jnp.eye(N)[None])
    adjs = adjs * node_flags[:, :, None] * node_flags[:, None, :]

    keys = jax.random.split(kp, stack_num)
    layer_params = [init_layer_params(keys[i], F) for i in range(stack_num)]
    packed = pack_params(layer_params)

    score = score_network_forward(packed, x, adjs, node_flags)
    jax.block_until_ready(score)
    assert score.shape == (B, N, N)
    assert bool(jnp.all(jnp.isfinite(score)))
    print("KERNEL_OK")
</pallas_src>

<mosaic_0001>
module attributes {stable_mosaic.version = 11 : i64} {
  func.func @score_net_kernel(%arg0: i32, %arg1: memref<16x32xbf16, #tpu.memory_space<vmem>>, %arg2: memref<2x8x8xf32, #tpu.memory_space<vmem>>, %arg3: memref<16x1xf32, #tpu.memory_space<vmem>>, %arg4: memref<2x8x8xf32, #tpu.memory_space<vmem>>, %arg5: memref<16x16xf32, #tpu.memory_space<vmem>>, %arg6: memref<2x64x32xbf16, #tpu.memory_space<vmem>>, %arg7: memref<2x32x512xbf16, #tpu.memory_space<vmem>>, %arg8: memref<2x256x256xbf16, #tpu.memory_space<vmem>>, %arg9: memref<2x256x256xbf16, #tpu.memory_space<vmem>>, %arg10: memref<2x256x128xbf16, #tpu.memory_space<vmem>>, %arg11: memref<2x4x256xf32, #tpu.memory_space<vmem>>, %arg12: memref<2x3x128xf32, #tpu.memory_space<vmem>>, %arg13: memref<2x1x32xf32, #tpu.memory_space<vmem>>, %arg14: memref<2x32xf32, #tpu.memory_space<smem>>, %arg15: memref<2x8x8xf32, #tpu.memory_space<vmem>>, %arg16: memref<2x8x8xf32, #tpu.memory_space<vmem>>) attributes {dimension_semantics = [#tpu.dimension_semantics<arbitrary>], iteration_bounds = array<i64: 2>, scalar_prefetch = 0 : i64, scratch_operands = 1 : i64, tpu.core_type = #tpu.core_type<tc>, window_params = [{pipeline_mode = #tpu.pipeline_mode<synchronous>, transform_indices = @transform_0, window_bounds = array<i64: 16, 32>}, {pipeline_mode = #tpu.pipeline_mode<synchronous>, transform_indices = @transform_1, window_bounds = array<i64: 2, 8, 8>}, {pipeline_mode = #tpu.pipeline_mode<synchronous>, transform_indices = @transform_2, window_bounds = array<i64: 16, 1>}, {pipeline_mode = #tpu.pipeline_mode<synchronous>, transform_indices = @transform_3, window_bounds = array<i64: 2, 8, 8>}, {pipeline_mode = #tpu.pipeline_mode<synchronous>, transform_indices = @transform_4, window_bounds = array<i64: 16, 16>}, {pipeline_mode = #tpu.pipeline_mode<synchronous>, transform_indices = @transform_5, window_bounds = array<i64: 2, 64, 32>}, {pipeline_mode = #tpu.pipeline_mode<synchronous>, transform_indices = @transform_6, window_bounds = array<i64: 2, 32, 512>}, {pipeline_mode = #tpu.pipeline_mode<synchronous>, transform_indices = @transform_7, window_bounds = array<i64: 2, 256, 256>}, {pipeline_mode = #tpu.pipeline_mode<synchronous>, transform_indices = @transform_8, window_bounds = array<i64: 2, 256, 256>}, {pipeline_mode = #tpu.pipeline_mode<synchronous>, transform_indices = @transform_9, window_bounds = array<i64: 2, 256, 128>}, {pipeline_mode = #tpu.pipeline_mode<synchronous>, transform_indices = @transform_10, window_bounds = array<i64: 2, 4, 256>}, {pipeline_mode = #tpu.pipeline_mode<synchronous>, transform_indices = @transform_11, window_bounds = array<i64: 2, 3, 128>}, {pipeline_mode = #tpu.pipeline_mode<synchronous>, transform_indices = @transform_12, window_bounds = array<i64: 2, 1, 32>}, {transform_indices = @transform_13, window_bounds = array<i64: 2, 32>}, {pipeline_mode = #tpu.pipeline_mode<synchronous>, transform_indices = @transform_14, window_bounds = array<i64: 2, 8, 8>}]} {
    %c0_i32 = arith.constant 0 : i32
    %0 = arith.cmpi eq, %arg0, %c0_i32 : i32
    %1 = arith.extui %0 : i1 to i32
    %c0_i32_0 = arith.constant 0 : i32
    %2 = arith.cmpi ne, %1, %c0_i32_0 : i32
    scf.if %2 {
      %c0_53 = arith.constant 0 : index
      %c0_54 = arith.constant 0 : index
      %c0_55 = arith.constant 0 : index
      %244 = vector.load %arg2[%c0_53, %c0_54, %c0_55] : memref<2x8x8xf32, #tpu.memory_space<vmem>>, vector<2x8x8xf32>
      %c0_56 = arith.constant 0 : index
      %c0_57 = arith.constant 0 : index
      %c0_58 = arith.constant 0 : index
      %245 = vector.load %arg16[%c0_56, %c0_57, %c0_58] : memref<2x8x8xf32, #tpu.memory_space<vmem>>, vector<2x8x8xf32>
      tpu.vector_store %arg16[%c0_56, %c0_57, %c0_58], %244 {strides = array<i32>} : memref<2x8x8xf32, #tpu.memory_space<vmem>>, vector<2x8x8xf32>,
    } else {
    }
    %c0 = arith.constant 0 : index
    %c0_1 = arith.constant 0 : index
    %3 = vector.load %arg1[%c0, %c0_1] : memref<16x32xbf16, #tpu.memory_space<vmem>>, vector<16x32xbf16>
    %c0_2 = arith.constant 0 : index
    %c0_3 = arith.constant 0 : index
    %c0_4 = arith.constant 0 : index
    %4 = vector.load %arg16[%c0_2, %c0_3, %c0_4] : memref<2x8x8xf32, #tpu.memory_space<vmem>>, vector<2x8x8xf32>
    %c0_5 = arith.constant 0 : index
    %c0_6 = arith.constant 0 : index
    %5 = vector.load %arg3[%c0_5, %c0_6] : memref<16x1xf32, #tpu.memory_space<vmem>>, vector<16x1xf32>
    %c0_7 = arith.constant 0 : index
    %c0_8 = arith.constant 0 : index
    %c0_9 = arith.constant 0 : index
    %6 = vector.load %arg4[%c0_7, %c0_8, %c0_9] : memref<2x8x8xf32, #tpu.memory_space<vmem>>, vector<2x8x8xf32>
    %c0_10 = arith.constant 0 : index
    %c0_11 = arith.constant 0 : index
    %7 = vector.load %arg5[%c0_10, %c0_11] : memref<16x16xf32, #tpu.memory_space<vmem>>, vector<16x16xf32>
    %8 = arith.index_cast %arg0 : i32 to index
    %c0_12 = arith.constant 0 : index
    %c0_13 = arith.constant 0 : index
    %9 = vector.load %arg11[%8, %c0_12, %c0_13] : memref<2x4x256xf32, #tpu.memory_space<vmem>>, vector<1x4x256xf32>
    %10 = vector.shape_cast %9 : vector<1x4x256xf32> to vector<4x256xf32>
    %11 = arith.index_cast %arg0 : i32 to index
    %c0_14 = arith.constant 0 : index
    %c0_15 = arith.constant 0 : index
    %12 = vector.load %arg12[%11, %c0_14, %c0_15] : memref<2x3x128xf32, #tpu.memory_space<vmem>>, vector<1x3x128xf32>
    %13 = vector.shape_cast %12 : vector<1x3x128xf32> to vector<3x128xf32>
    %14 = arith.index_cast %arg0 : i32 to index
    %c0_16 = arith.constant 0 : index
    %c0_17 = arith.constant 0 : index
    %15 = vector.load %arg13[%14, %c0_16, %c0_17] : memref<2x1x32xf32, #tpu.memory_space<vmem>>, vector<1x1x32xf32>
    %16 = vector.shape_cast %15 : vector<1x1x32xf32> to vector<1x32xf32>
    %17 = vector.shape_cast %4 : vector<2x8x8xf32> to vector<16x8xf32>
    %18 = tpu.concatenate %17, %17 in 1 : vector<16x8xf32>, vector<16x8xf32> -> vector<16x16xf32>
    %19 = arith.mulf %18, %7 : vector<16x16xf32>
    %20 = arith.truncf %19 : vector<16x16xf32> to vector<16x16xbf16>
    %cst = arith.constant dense<0.000000e+00> : vector<16x32xf32>
    %21 = tpu.matmul %20, %3, %cst {dimension_numbers = #tpu.dot_dimension_numbers<[1], [0], [0], [1], [0, 0, 1, 1], [], []>} : vector<16x16xbf16>, vector<16x32xbf16>, vector<16x32xf32> -> vector<16x32xf32>
    %22 = arith.truncf %21 : vector<16x32xf32> to vector<16x32xbf16>
    %23 = tpu.concatenate %22, %3 in 1 : vector<16x32xbf16>, vector<16x32xbf16> -> vector<16x64xbf16>
    %24 = arith.index_cast %arg0 : i32 to index
    %c0_18 = arith.constant 0 : index
    %c0_19 = arith.constant 0 : index
    %25 = vector.load %arg6[%24, %c0_18, %c0_19] : memref<2x64x32xbf16, #tpu.memory_space<vmem>>, vector<1x64x32xbf16>
    %26 = vector.shape_cast %25 : vector<1x64x32xbf16> to vector<64x32xbf16>
    %cst_20 = arith.constant dense<0.000000e+00> : vector<16x32xf32>
    %27 = tpu.matmul %23, %26, %cst_20 {dimension_numbers = #tpu.dot_dimension_numbers<[1], [0], [0], [1], [0, 0, 1, 1], [], []>} : vector<16x64xbf16>, vector<64x32xbf16>, vector<16x32xf32> -> vector<16x32xf32>
    %28 = vector.broadcast %16 : vector<1x32xf32> to vector<16x32xf32>
    %29 = arith.addf %27, %28 : vector<16x32xf32>
    %cst_21 = arith.constant 0.000000e+00 : f32
    %30 = vector.broadcast %cst_21 : f32 to vector<16x32xf32>
    %31 = arith.cmpf ogt, %29, %30 : vector<16x32xf32>
    %cst_22 = arith.constant 0.00999999977 : f32
    %32 = vector.broadcast %cst_22 : f32 to vector<16x32xf32>
    %33 = arith.mulf %32, %29 : vector<16x32xf32>
    %34 = arith.select %31, %29, %33 : vector<16x32xi1>, vector<16x32xf32>
    %35 = vector.broadcast %5 : vector<16x1xf32> to vector<16x32xf32>
    %36 = arith.mulf %34, %35 : vector<16x32xf32>
    %37 = arith.truncf %36 : vector<16x32xf32> to vector<16x32xbf16>
    %38 = arith.index_cast %arg0 : i32 to index
    %c0_23 = arith.constant 0 : index
    %c0_24 = arith.constant 0 : index
    %39 = vector.load %arg7[%38, %c0_23, %c0_24] : memref<2x32x512xbf16, #tpu.memory_space<vmem>>, vector<1x32x512xbf16>
    %40 = vector.shape_cast %39 : vector<1x32x512xbf16> to vector<32x512xbf16>
    %cst_25 = arith.constant dense<0.000000e+00> : vector<16x512xf32>
    %41 = tpu.matmul %37, %40, %cst_25 {dimension_numbers = #tpu.dot_dimension_numbers<[1], [0], [0], [1], [0, 0, 1, 1], [], []>} : vector<16x32xbf16>, vector<32x512xbf16>, vector<16x512xf32> -> vector<16x512xf32>
    %42 = vector.extract_strided_slice %41 {offsets = [0, 0], sizes = [16, 256], strides = [1, 1]} : vector<16x512xf32> to vector<16x256xf32>
    %43 = vector.shape_cast %42 : vector<16x256xf32> to vector<2x8x256xf32>
    %44 = vector.extract_strided_slice %41 {offsets = [0, 256], sizes = [16, 256], strides = [1, 1]} : vector<16x512xf32> to vector<16x256xf32>
    %45 = vector.shape_cast %44 : vector<16x256xf32> to vector<2x8x256xf32>
    %46 = vector.extract_strided_slice %10 {offsets = [0, 0], sizes = [1, 256], strides = [1, 1]} : vector<4x256xf32> to vector<1x256xf32>
    %47 = vector.shape_cast %46 : vector<1x256xf32> to vector<256xf32>
    %48 = vector.extract_strided_slice %10 {offsets = [1, 0], sizes = [1, 256], strides = [1, 1]} : vector<4x256xf32> to vector<1x256xf32>
    %49 = vector.shape_cast %48 : vector<1x256xf32> to vector<256xf32>
    %50 = vector.shape_cast %43 : vector<2x8x256xf32> to vector<2x8x1x256xf32>
    %51 = vector.shape_cast %45 : vector<2x8x256xf32> to vector<2x1x8x256xf32>
    %52 = vector.broadcast %50 : vector<2x8x1x256xf32> to vector<2x8x8x256xf32>
    %53 = vector.broadcast %51 : vector<2x1x8x256xf32> to vector<2x8x8x256xf32>
    %54 = arith.addf %52, %53 : vector<2x8x8x256xf32>
    %55 = vector.shape_cast %4 : vector<2x8x8xf32> to vector<2x8x8x1xf32>
    %56 = vector.shape_cast %47 : vector<256xf32> to vector<1x1x1x256xf32>
    %57 = vector.broadcast %55 : vector<2x8x8x1xf32> to vector<2x8x8x256xf32>
    %58 = vector.broadcast %56 : vector<1x1x1x256xf32> to vector<2x8x8x256xf32>
    %59 = arith.mulf %57, %58 : vector<2x8x8x256xf32>
    %60 = arith.addf %54, %59 : vector<2x8x8x256xf32>
    %61 = vector.shape_cast %49 : vector<256xf32> to vector<1x1x1x256xf32>
    %62 = vector.broadcast %61 : vector<1x1x1x256xf32> to vector<2x8x8x256xf32>
    %63 = arith.addf %60, %62 : vector<2x8x8x256xf32>
    %cst_26 = arith.constant 0.000000e+00 : f32
    %64 = vector.broadcast %cst_26 : f32 to vector<2x8x8x256xf32>
    %65 = arith.cmpf ogt, %63, %64 : vector<2x8x8x256xf32>
    %cst_27 = arith.constant 0.00999999977 : f32
    %66 = vector.broadcast %cst_27 : f32 to vector<2x8x8x256xf32>
    %67 = arith.mulf %66, %63 : vector<2x8x8x256xf32>
    %68 = arith.select %65, %63, %67 : vector<2x8x8x256xi1>, vector<2x8x8x256xf32>
    %69 = vector.shape_cast %68 : vector<2x8x8x256xf32> to vector<128x256xf32>
    %70 = arith.truncf %69 : vector<128x256xf32> to vector<128x256xbf16>
    %71 = arith.index_cast %arg0 : i32 to index
    %c0_28 = arith.constant 0 : index
    %c0_29 = arith.constant 0 : index
    %72 = vector.load %arg8[%71, %c0_28, %c0_29] : memref<2x256x256xbf16, #tpu.memory_space<vmem>>, vector<1x256x256xbf16>
    %73 = vector.shape_cast %72 : vector<1x256x256xbf16> to vector<256x256xbf16>
    %cst_30 = arith.constant dense<0.000000e+00> : vector<128x256xf32>
    %74 = tpu.matmul %70, %73, %cst_30 {dimension_numbers = #tpu.dot_dimension_numbers<[1], [0], [0], [1], [0, 0, 1, 1], [], []>} : vector<128x256xbf16>, vector<256x256xbf16>, vector<128x256xf32> -> vector<128x256xf32>
    %75 = vector.extract_strided_slice %10 {offsets = [2, 0], sizes = [1, 256], strides = [1, 1]} : vector<4x256xf32> to vector<1x256xf32>
    %76 = vector.shape_cast %75 : vector<1x256xf32> to vector<256xf32>
    %77 = vector.shape_cast %76 : vector<256xf32> to vector<1x256xf32>
    %78 = vector.broadcast %77 : vector<1x256xf32> to vector<128x256xf32>
    %79 = arith.addf %74, %78 : vector<128x256xf32>
    %cst_31 = arith.constant 0.000000e+00 : f32
    %80 = vector.broadcast %cst_31 : f32 to vector<128x256xf32>
    %81 = arith.cmpf ogt, %79, %80 : vector<128x256xf32>
    %cst_32 = arith.constant 0.00999999977 : f32
    %82 = vector.broadcast %cst_32 : f32 to vector<128x256xf32>
    %83 = arith.mulf %82, %79 : vector<128x256xf32>
    %84 = arith.select %81, %79, %83 : vector<128x256xi1>, vector<128x256xf32>
    %85 = arith.truncf %84 : vector<128x256xf32> to vector<128x256xbf16>
    %86 = arith.index_cast %arg0 : i32 to index
    %c0_33 = arith.constant 0 : index
    %c0_34 = arith.constant 0 : index
    %87 = vector.load %arg9[%86, %c0_33, %c0_34] : memref<2x256x256xbf16, #tpu.memory_space<vmem>>, vector<1x256x256xbf16>
    %88 = vector.shape_cast %87 : vector<1x256x256xbf16> to vector<256x256xbf16>
    %cst_35 = arith.constant dense<0.000000e+00> : vector<128x256xf32>
    %89 = tpu.matmul %85, %88, %cst_35 {dimension_numbers = #tpu.dot_dimension_numbers<[1], [0], [0], [1], [0, 0, 1, 1], [], []>} : vector<128x256xbf16>, vector<256x256xbf16>, vector<128x256xf32> -> vector<128x256xf32>
    %90 = vector.extract_strided_slice %10 {offsets = [3, 0], sizes = [1, 256], strides = [1, 1]} : vector<4x256xf32> to vector<1x256xf32>
    %91 = vector.shape_cast %90 : vector<1x256xf32> to vector<256xf32>
    %92 = vector.shape_cast %91 : vector<256xf32> to vector<1x256xf32>
    %93 = vector.broadcast %92 : vector<1x256xf32> to vector<128x256xf32>
    %94 = arith.addf %89, %93 : vector<128x256xf32>
    %cst_36 = arith.constant 0.000000e+00 : f32
    %95 = vector.broadcast %cst_36 : f32 to vector<128x256xf32>
    %96 = arith.cmpf ogt, %94, %95 : vector<128x256xf32>
    %cst_37 = arith.constant 0.00999999977 : f32
    %97 = vector.broadcast %cst_37 : f32 to vector<128x256xf32>
    %98 = arith.mulf %97, %94 : vector<128x256xf32>
    %99 = arith.select %96, %94, %98 : vector<128x256xi1>, vector<128x256xf32>
    %100 = arith.truncf %99 : vector<128x256xf32> to vector<128x256xbf16>
    %101 = arith.index_cast %arg0 : i32 to index
    %c0_38 = arith.constant 0 : index
    %c0_39 = arith.constant 0 : index
    %102 = vector.load %arg10[%101, %c0_38, %c0_39] : memref<2x256x128xbf16, #tpu.memory_space<vmem>>, vector<1x256x128xbf16>
    %103 = vector.shape_cast %102 : vector<1x256x128xbf16> to vector<256x128xbf16>
    %cst_40 = arith.constant dense<0.000000e+00> : vector<128x128xf32>
    %104 = tpu.matmul %100, %103, %cst_40 {dimension_numbers = #tpu.dot_dimension_numbers<[1], [0], [0], [1], [0, 0, 1, 1], [], []>} : vector<128x256xbf16>, vector<256x128xbf16>, vector<128x128xf32> -> vector<128x128xf32>
    %105 = vector.extract_strided_slice %13 {offsets = [0, 0], sizes = [1, 128], strides = [1, 1]} : vector<3x128xf32> to vector<1x128xf32>
    %106 = vector.shape_cast %105 : vector<1x128xf32> to vector<128xf32>
    %107 = vector.shape_cast %106 : vector<128xf32> to vector<1x128xf32>
    %108 = vector.broadcast %107 : vector<1x128xf32> to vector<128x128xf32>
    %109 = arith.addf %104, %108 : vector<128x128xf32>
    %cst_41 = arith.constant 0.000000e+00 : f32
    %110 = vector.broadcast %cst_41 : f32 to vector<128x128xf32>
    %111 = arith.cmpf ogt, %109, %110 : vector<128x128xf32>
    %cst_42 = arith.constant 0.00999999977 : f32
    %112 = vector.broadcast %cst_42 : f32 to vector<128x128xf32>
    %113 = arith.mulf %112, %109 : vector<128x128xf32>
    %114 = arith.select %111, %109, %113 : vector<128x128xi1>, vector<128x128xf32>
    %115 = vector.shape_cast %114 : vector<128x128xf32> to vector<2x8x8x128xf32>
    %116 = vector.extract_strided_slice %13 {offsets = [1, 0], sizes = [1, 128], strides = [1, 1]} : vector<3x128xf32> to vector<1x128xf32>
    %117 = vector.shape_cast %116 : vector<1x128xf32> to vector<128xf32>
    %118 = vector.shape_cast %117 : vector<128xf32> to vector<1x1x1x128xf32>
    %119 = vector.broadcast %118 : vector<1x1x1x128xf32> to vector<2x8x8x128xf32>
    %120 = arith.mulf %115, %119 : vector<2x8x8x128xf32>
    %cst_43 = arith.constant dense<0.000000e+00> : vector<2x8x8xf32>
    %121 = vector.multi_reduction <add>, %120, %cst_43 [3] : vector<2x8x8x128xf32> to vector<2x8x8xf32>
    %122 = arith.index_cast %arg0 : i32 to index
    %c21 = arith.constant 21 : index
    %123 = memref.load %arg14[%122, %c21] : memref<2x32xf32, #tpu.memory_space<smem>>
    %124 = vector.broadcast %123 : f32 to vector<2x8x8xf32>
    %125 = arith.addf %121, %124 : vector<2x8x8xf32>
    %126 = vector.extract_strided_slice %13 {offsets = [2, 0], sizes = [1, 128], strides = [1, 1]} : vector<3x128xf32> to vector<1x128xf32>
    %127 = vector.shape_cast %126 : vector<1x128xf32> to vector<128xf32>
    %128 = vector.shape_cast %127 : vector<128xf32> to vector<1x1x1x128xf32>
    %129 = vector.broadcast %128 : vector<1x1x1x128xf32> to vector<2x8x8x128xf32>
    %130 = arith.mulf %115, %129 : vector<2x8x8x128xf32>
    %cst_44 = arith.constant dense<0.000000e+00> : vector<2x8x8xf32>
    %131 = vector.multi_reduction <add>, %130, %cst_44 [3] : vector<2x8x8x128xf32> to vector<2x8x8xf32>
    %132 = arith.index_cast %arg0 : i32 to index
    %c22 = arith.constant 22 : index
    %133 = memref.load %arg14[%132, %c22] : memref<2x32xf32, #tpu.memory_space<smem>>
    %134 = vector.broadcast %133 : f32 to vector<2x8x8xf32>
    %135 = arith.addf %131, %134 : vector<2x8x8xf32>
    %136 = arith.index_cast %arg0 : i32 to index
    %c0_45 = arith.constant 0 : index
    %137 = memref.load %arg14[%136, %c0_45] : memref<2x32xf32, #tpu.memory_space<smem>>
    %138 = vector.broadcast %137 : f32 to vector<2x8x8xf32>
    %139 = arith.mulf %4, %138 : vector<2x8x8xf32>
    %140 = arith.index_cast %arg0 : i32 to index
    %c4 = arith.constant 4 : index
    %141 = memref.load %arg14[%140, %c4] : memref<2x32xf32, #tpu.memory_space<smem>>
    %142 = vector.broadcast %141 : f32 to vector<2x8x8xf32>
    %143 = arith.addf %139, %142 : vector<2x8x8xf32>
    %144 = math.tanh %143 : vector<2x8x8xf32>
    %145 = arith.index_cast %arg0 : i32 to index
    %c1 = arith.constant 1 : index
    %146 = memref.load %arg14[%145, %c1] : memref<2x32xf32, #tpu.memory_space<smem>>
    %147 = vector.broadcast %146 : f32 to vector<2x8x8xf32>
    %148 = arith.mulf %4, %147 : vector<2x8x8xf32>
    %149 = arith.index_cast %arg0 : i32 to index
    %c5 = arith.constant 5 : index
    %150 = memref.load %arg14[%149, %c5] : memref<2x32xf32, #tpu.memory_space<smem>>
    %151 = vector.broadcast %150 : f32 to vector<2x8x8xf32>
    %152 = arith.addf %148, %151 : vector<2x8x8xf32>
    %153 = math.tanh %152 : vector<2x8x8xf32>
    %154 = arith.index_cast %arg0 : i32 to index
    %c2 = arith.constant 2 : index
    %155 = memref.load %arg14[%154, %c2] : memref<2x32xf32, #tpu.memory_space<smem>>
    %156 = vector.broadcast %155 : f32 to vector<2x8x8xf32>
    %157 = arith.mulf %4, %156 : vector<2x8x8xf32>
    %158 = arith.index_cast %arg0 : i32 to index
    %c6 = arith.constant 6 : index
    %159 = memref.load %arg14[%158, %c6] : memref<2x32xf32, #tpu.memory_space<smem>>
    %160 = vector.broadcast %159 : f32 to vector<2x8x8xf32>
    %161 = arith.addf %157, %160 : vector<2x8x8xf32>
    %162 = math.tanh %161 : vector<2x8x8xf32>
    %163 = arith.index_cast %arg0 : i32 to index
    %c3 = arith.constant 3 : index
    %164 = memref.load %arg14[%163, %c3] : memref<2x32xf32, #tpu.memory_space<smem>>
    %165 = vector.broadcast %164 : f32 to vector<2x8x8xf32>
    %166 = arith.mulf %4, %165 : vector<2x8x8xf32>
    %167 = arith.index_cast %arg0 : i32 to index
    %c7 = arith.constant 7 : index
    %168 = memref.load %arg14[%167, %c7] : memref<2x32xf32, #tpu.memory_space<smem>>
    %169 = vector.broadcast %168 : f32 to vector<2x8x8xf32>
    %170 = arith.addf %166, %169 : vector<2x8x8xf32>
    %171 = math.tanh %170 : vector<2x8x8xf32>
    %172 = arith.index_cast %arg0 : i32 to index
    %c8 = arith.constant 8 : index
    %173 = memref.load %arg14[%172, %c8] : memref<2x32xf32, #tpu.memory_space<smem>>
    %174 = vector.broadcast %173 : f32 to vector<2x8x8xf32>
    %175 = arith.mulf %144, %174 : vector<2x8x8xf32>
    %176 = arith.index_cast %arg0 : i32 to index
    %c10 = arith.constant 10 : index
    %177 = memref.load %arg14[%176, %c10] : memref<2x32xf32, #tpu.memory_space<smem>>
    %178 = vector.broadcast %177 : f32 to vector<2x8x8xf32>
    %179 = arith.mulf %153, %178 : vector<2x8x8xf32>
    %180 = arith.addf %175, %179 : vector<2x8x8xf32>
    %181 = arith.index_cast %arg0 : i32 to index
    %c12 = arith.constant 12 : index
    %182 = memref.load %arg14[%181, %c12] : memref<2x32xf32, #tpu.memory_space<smem>>
    %183 = vector.broadcast %182 : f32 to vector<2x8x8xf32>
    %184 = arith.mulf %162, %183 : vector<2x8x8xf32>
    %185 = arith.addf %180, %184 : vector<2x8x8xf32>
    %186 = arith.index_cast %arg0 : i32 to index
    %c14 = arith.constant 14 : index
    %187 = memref.load %arg14[%186, %c14] : memref<2x32xf32, #tpu.memory_space<smem>>
    %188 = vector.broadcast %187 : f32 to vector<2x8x8xf32>
    %189 = arith.mulf %171, %188 : vector<2x8x8xf32>
    %190 = arith.addf %185, %189 : vector<2x8x8xf32>
    %191 = arith.index_cast %arg0 : i32 to index
    %c16 = arith.constant 16 : index
    %192 = memref.load %arg14[%191, %c16] : memref<2x32xf32, #tpu.memory_space<smem>>
    %193 = vector.broadcast %192 : f32 to vector<2x8x8xf32>
    %194 = arith.addf %190, %193 : vector<2x8x8xf32>
    %195 = math.tanh %194 : vector<2x8x8xf32>
    %196 = arith.index_cast %arg0 : i32 to index
    %c9 = arith.constant 9 : index
    %197 = memref.load %arg14[%196, %c9] : memref<2x32xf32, #tpu.memory_space<smem>>
    %198 = vector.broadcast %197 : f32 to vector<2x8x8xf32>
    %199 = arith.mulf %144, %198 : vector<2x8x8xf32>
    %200 = arith.index_cast %arg0 : i32 to index
    %c11 = arith.constant 11 : index
    %201 = memref.load %arg14[%200, %c11] : memref<2x32xf32, #tpu.memory_space<smem>>
    %202 = vector.broadcast %201 : f32 to vector<2x8x8xf32>
    %203 = arith.mulf %153, %202 : vector<2x8x8xf32>
    %204 = arith.addf %199, %203 : vector<2x8x8xf32>
    %205 = arith.index_cast %arg0 : i32 to index
    %c13 = arith.constant 13 : index
    %206 = memref.load %arg14[%205, %c13] : memref<2x32xf32, #tpu.memory_space<smem>>
    %207 = vector.broadcast %206 : f32 to vector<2x8x8xf32>
    %208 = arith.mulf %162, %207 : vector<2x8x8xf32>
    %209 = arith.addf %204, %208 : vector<2x8x8xf32>
    %210 = arith.index_cast %arg0 : i32 to index
    %c15 = arith.constant 15 : index
    %211 = memref.load %arg14[%210, %c15] : memref<2x32xf32, #tpu.memory_space<smem>>
    %212 = vector.broadcast %211 : f32 to vector<2x8x8xf32>
    %213 = arith.mulf %171, %212 : vector<2x8x8xf32>
    %214 = arith.addf %209, %213 : vector<2x8x8xf32>
    %215 = arith.index_cast %arg0 : i32 to index
    %c17 = arith.constant 17 : index
    %216 = memref.load %arg14[%215, %c17] : memref<2x32xf32, #tpu.memory_space<smem>>
    %217 = vector.broadcast %216 : f32 to vector<2x8x8xf32>
    %218 = arith.addf %214, %217 : vector<2x8x8xf32>
    %219 = math.tanh %218 : vector<2x8x8xf32>
    %220 = arith.index_cast %arg0 : i32 to index
    %c18 = arith.constant 18 : index
    %221 = memref.load %arg14[%220, %c18] : memref<2x32xf32, #tpu.memory_space<smem>>
    %222 = vector.broadcast %221 : f32 to vector<2x8x8xf32>
    %223 = arith.mulf %195, %222 : vector<2x8x8xf32>
    %224 = arith.index_cast %arg0 : i32 to index
    %c19 = arith.constant 19 : index
    %225 = memref.load %arg14[%224, %c19] : memref<2x32xf32, #tpu.memory_space<smem>>
    %226 = vector.broadcast %225 : f32 to vector<2x8x8xf32>
    %227 = arith.mulf %219, %226 : vector<2x8x8xf32>
    %228 = arith.addf %223, %227 : vector<2x8x8xf32>
    %229 = arith.index_cast %arg0 : i32 to index
    %c20 = arith.constant 20 : index
    %230 = memref.load %arg14[%229, %c20] : memref<2x32xf32, #tpu.memory_space<smem>>
    %231 = vector.broadcast %230 : f32 to vector<2x8x8xf32>
    %232 = arith.addf %228, %231 : vector<2x8x8xf32>
    %233 = math.tanh %232 : vector<2x8x8xf32>
    %234 = arith.mulf %135, %233 : vector<2x8x8xf32>
    %235 = arith.addf %234, %125 : vector<2x8x8xf32>
    %236 = arith.mulf %235, %6 : vector<2x8x8xf32>
    %237 = tpu.transpose %236, [0, 2, 1] : vector<2x8x8xf32> -> vector<2x8x8xf32>
    %238 = arith.addf %236, %237 : vector<2x8x8xf32>
    %c0_46 = arith.constant 0 : index
    %c0_47 = arith.constant 0 : index
    %c0_48 = arith.constant 0 : index
    %239 = vector.load %arg15[%c0_46, %c0_47, %c0_48] : memref<2x8x8xf32, #tpu.memory_space<vmem>>, vector<2x8x8xf32>
    tpu.vector_store %arg15[%c0_46, %c0_47, %c0_48], %238 {strides = array<i32>} : memref<2x8x8xf32, #tpu.memory_space<vmem>>, vector<2x8x8xf32>,
    %cst_49 = arith.constant 1.000000e-01 : f32
    %240 = vector.broadcast %cst_49 : f32 to vector<2x8x8xf32>
    %241 = arith.mulf %240, %238 : vector<2x8x8xf32>
    %242 = arith.addf %4, %241 : vector<2x8x8xf32>
    %c0_50 = arith.constant 0 : index
    %c0_51 = arith.constant 0 : index
    %c0_52 = arith.constant 0 : index
    %243 = vector.load %arg16[%c0_50, %c0_51, %c0_52] : memref<2x8x8xf32, #tpu.memory_space<vmem>>, vector<2x8x8xf32>
    tpu.vector_store %arg16[%c0_50, %c0_51, %c0_52], %242 {strides = array<i32>} : memref<2x8x8xf32, #tpu.memory_space<vmem>>, vector<2x8x8xf32>,
    return
  }
  func.func @transform_0(%arg0: i32) -> (i32, i32) {
    %c0_i32 = arith.constant 0 : i32
    %c0_i32_0 = arith.constant 0 : i32
    %c0_i32_1 = arith.constant 0 : i32
    return %c0_i32, %c0_i32_0 : i32, i32
  }
  func.func @transform_1(%arg0: i32) -> (i32, i32, i32) {
    %c0_i32 = arith.constant 0 : i32
    %c0_i32_0 = arith.constant 0 : i32
    %c0_i32_1 = arith.constant 0 : i32
    %c0_i32_2 = arith.constant 0 : i32
    return %c0_i32, %c0_i32_0, %c0_i32_1 : i32, i32, i32
  }
  func.func @transform_2(%arg0: i32) -> (i32, i32) {
    %c0_i32 = arith.constant 0 : i32
    %c0_i32_0 = arith.constant 0 : i32
    %c0_i32_1 = arith.constant 0 : i32
    return %c0_i32, %c0_i32_0 : i32, i32
  }
  func.func @transform_3(%arg0: i32) -> (i32, i32, i32) {
    %c0_i32 = arith.constant 0 : i32
    %c0_i32_0 = arith.constant 0 : i32
    %c0_i32_1 = arith.constant 0 : i32
    %c0_i32_2 = arith.constant 0 : i32
    return %c0_i32, %c0_i32_0, %c0_i32_1 : i32, i32, i32
  }
  func.func @transform_4(%arg0: i32) -> (i32, i32) {
    %c0_i32 = arith.constant 0 : i32
    %c0_i32_0 = arith.constant 0 : i32
    %c0_i32_1 = arith.constant 0 : i32
    return %c0_i32, %c0_i32_0 : i32, i32
  }
  func.func @transform_5(%arg0: i32) -> (i32, i32, i32) {
    %c0_i32 = arith.constant 0 : i32
    %c0_i32_0 = arith.constant 0 : i32
    %c0_i32_1 = arith.constant 0 : i32
    %c0_i32_2 = arith.constant 0 : i32
    return %c0_i32, %c0_i32_0, %c0_i32_1 : i32, i32, i32
  }
  func.func @transform_6(%arg0: i32) -> (i32, i32, i32) {
    %c0_i32 = arith.constant 0 : i32
    %c0_i32_0 = arith.constant 0 : i32
    %c0_i32_1 = arith.constant 0 : i32
    %c0_i32_2 = arith.constant 0 : i32
    return %c0_i32, %c0_i32_0, %c0_i32_1 : i32, i32, i32
  }
  func.func @transform_7(%arg0: i32) -> (i32, i32, i32) {
    %c0_i32 = arith.constant 0 : i32
    %c0_i32_0 = arith.constant 0 : i32
    %c0_i32_1 = arith.constant 0 : i32
    %c0_i32_2 = arith.constant 0 : i32
    return %c0_i32, %c0_i32_0, %c0_i32_1 : i32, i32, i32
  }
  func.func @transform_8(%arg0: i32) -> (i32, i32, i32) {
    %c0_i32 = arith.constant 0 : i32
    %c0_i32_0 = arith.constant 0 : i32
    %c0_i32_1 = arith.constant 0 : i32
    %c0_i32_2 = arith.constant 0 : i32
    return %c0_i32, %c0_i32_0, %c0_i32_1 : i32, i32, i32
  }
  func.func @transform_9(%arg0: i32) -> (i32, i32, i32) {
    %c0_i32 = arith.constant 0 : i32
    %c0_i32_0 = arith.constant 0 : i32
    %c0_i32_1 = arith.constant 0 : i32
    %c0_i32_2 = arith.constant 0 : i32
    return %c0_i32, %c0_i32_0, %c0_i32_1 : i32, i32, i32
  }
  func.func @transform_10(%arg0: i32) -> (i32, i32, i32) {
    %c0_i32 = arith.constant 0 : i32
    %c0_i32_0 = arith.constant 0 : i32
    %c0_i32_1 = arith.constant 0 : i32
    %c0_i32_2 = arith.constant 0 : i32
    return %c0_i32, %c0_i32_0, %c0_i32_1 : i32, i32, i32
  }
  func.func @transform_11(%arg0: i32) -> (i32, i32, i32) {
    %c0_i32 = arith.constant 0 : i32
    %c0_i32_0 = arith.constant 0 : i32
    %c0_i32_1 = arith.constant 0 : i32
    %c0_i32_2 = arith.constant 0 : i32
    return %c0_i32, %c0_i32_0, %c0_i32_1 : i32, i32, i32
  }
  func.func @transform_12(%arg0: i32) -> (i32, i32, i32) {
    %c0_i32 = arith.constant 0 : i32
    %c0_i32_0 = arith.constant 0 : i32
    %c0_i32_1 = arith.constant 0 : i32
    %c0_i32_2 = arith.constant 0 : i32
    return %c0_i32, %c0_i32_0, %c0_i32_1 : i32, i32, i32
  }
  func.func @transform_13(%arg0: i32) -> (i32, i32) {
    %c0_i32 = arith.constant 0 : i32
    %c0_i32_0 = arith.constant 0 : i32
    %c0_i32_1 = arith.constant 0 : i32
    return %c0_i32, %c0_i32_0 : i32, i32
  }
  func.func @transform_14(%arg0: i32) -> (i32, i32, i32) {
    %c0_i32 = arith.constant 0 : i32
    %c0_i32_0 = arith.constant 0 : i32
    %c0_i32_1 = arith.constant 0 : i32
    %c0_i32_2 = arith.constant 0 : i32
    return %c0_i32, %c0_i32_0, %c0_i32_1 : i32, i32, i32
  }
}

</mosaic_0001>

<llo_original>
// kernel: score_network_forward.1
$region0: #{score_network_forward.1}
  #allocation0 [shape = 'u32[]', space=smem, size = 0x4, offset = 0x4, fixed_abs, tag = 'smem constant byte address 0x4 - core index']
  #allocation1 [shape = 'u32[144,128]{1,0:T(1,128)}', space=vmem, size = 0x12000, scoped, tag = 'internal scratch']
  #allocation2 [shape = 'f32[2,8,8]{2,1,0:T(8,128)}', space=vmem, size = 0x2000, scoped, tag = 'scratch operand']
  %s0 = inlined_call_operand.vmem [shape: bf16[16,32], index: 0, kind: input, shape index: {}]
  %s1 = inlined_call_operand.vmem [shape: f32[2,8,8], index: 1, kind: input, shape index: {}]
  %s2 = inlined_call_operand.vmem [shape: f32[16,1], index: 2, kind: input, shape index: {}]
  %s3 = inlined_call_operand.vmem [shape: f32[2,8,8], index: 3, kind: input, shape index: {}]
  %s4 = inlined_call_operand.vmem [shape: f32[16,16], index: 4, kind: input, shape index: {}]
  %s5 = inlined_call_operand.vmem [shape: bf16[2,64,32], index: 5, kind: input, shape index: {}]
  %s6 = inlined_call_operand.hbm [shape: bf16[2,32,512], index: 6, kind: input, shape index: {}]
  %s7 = inlined_call_operand.hbm [shape: bf16[2,256,256], index: 7, kind: input, shape index: {}]
  %s8 = inlined_call_operand.hbm [shape: bf16[2,256,256], index: 8, kind: input, shape index: {}]
  %s9 = inlined_call_operand.vmem [shape: bf16[2,256,128], index: 9, kind: input, shape index: {}]
  %s10 = inlined_call_operand.hbm [shape: f32[2,4,256], index: 10, kind: input, shape index: {}]
  %s11 = inlined_call_operand.vmem [shape: f32[2,3,128], index: 11, kind: input, shape index: {}]
  %s12 = inlined_call_operand.hbm [shape: f32[2,1,32], index: 12, kind: input, shape index: {}]
  %s13 = inlined_call_operand.hbm [shape: f32[2,32], index: 13, kind: input, shape index: {}]
  %s14 = inlined_call_operand.hbm [shape: f32[2,8,8], index: 14, kind: output, shape index: {}]
  %s15 = sld [smem:[#allocation0]]
  $region117: #{score_network_forward.1} parent=0
    _
  %s17 = ssub.s32 1, %s15
  %s18 = scalar_select 0, %s17, %s15
  $region1: #{score_network_forward.1} parent=0
    #allocation3 [shape = 'u8[65536]{0}', space=vmem, size = 0x10000, scoped, tag = 'input window, operand 6, single buffered']
    #allocation4 [shape = 's32[2]{0}', space=sflag, size = 0x8, scoped, tag = 'scoped memory for score_network_forward.1']
    #allocation5 [shape = 's32[2]{0}', space=sflag, size = 0x8, scoped, tag = 'scoped memory for score_network_forward.1']
    #allocation6 [shape = 's32[2]{0}', space=sflag, size = 0x8, scoped, tag = 'scoped memory for score_network_forward.1']
    #allocation7 [shape = 'u8[262144]{0}', space=vmem, size = 0x40000, scoped, tag = 'input window, operand 7, single buffered']
    #allocation8 [shape = 's32[1]{0}', space=sflag, size = 0x4, scoped, tag = 'scoped memory for score_network_forward.1']
    #allocation9 [shape = 'u8[262144]{0}', space=vmem, size = 0x40000, scoped, tag = 'input window, operand 8, single buffered']
    #allocation10 [shape = 'u8[8192]{0}', space=vmem, size = 0x2000, scoped, tag = 'input window, operand 10, single buffered']
    #allocation11 [shape = 's32[1]{0}', space=sflag, size = 0x4, scoped, tag = 'scoped memory for score_network_forward.1']
    #allocation12 [shape = 'u8[1024]{0}', space=vmem, size = 0x400, scoped, tag = 'input window, operand 12, single buffered']
    #allocation13 [shape = 'u8[1024]{0}', space=smem, size = 0x400, scoped, tag = 'input window, operand 13, single buffered']
    #allocation14 [shape = 'u8[8192]{0}', space=vmem, size = 0x2000, scoped, tag = 'output window, operand 0, single buffered']
    %19 = vsyncpa [#allocation4], 0
    %20 = vsyncpa [#allocation8], 0
    %21 = vsyncpa [#allocation11], 0
    %22 = vsyncpa [#allocation6], 0
    %23 = vsyncpa [#allocation5], 0
    loop: start=0, step=1, limit=4
    $region2: #{score_network_forward.1} parent=1 // loop_pre_header
      _
    $region3: #{score_network_forward.1} parent=1 // loop_header
      %s25 = sphi 0, %s29
      %p26 = scmp.ge.s32.totalorder %s25, 4
      %s33 = sphi 0, %s33
      %s35 = sphi 0, %s33
      %s36 = sphi 0, %s35
      %s50 = sphi 0, %s36
      %s54 = sphi 0, %s54
      %s56 = sphi 0, %s54
      %s57 = sphi 0, %s56
      %s71 = sphi 0, %s57
      %s75 = sphi 0, %s75
      %s77 = sphi 0, %s75
      %s78 = sphi 0, %s77
      %s92 = sphi 0, %s78
      %s96 = sphi 0, %s96
      %s98 = sphi 0, %s96
      %s99 = sphi 0, %s98
      %s113 = sphi 0, %s99
      %s117 = sphi 0, %s117
      %s119 = sphi 0, %s117
      %s120 = sphi 0, %s119
      %s134 = sphi 0, %s120
      %s138 = sphi 0, %s138
      %s140 = sphi 0, %s138
      %s141 = sphi 0, %s140
      %s155 = sphi 0, %s141
      %s159 = sphi 0, %s159
      %s161 = sphi 0, %s159
      %s162 = sphi 0, %s161
      %s176 = sphi 0, %s162
      %s180 = sphi 0, %s180
      %s182 = sphi 0, %s180
      %s183 = sphi 0, %s182
      %s197 = sphi 0, %s183
      %s201 = sphi 0, %s201
      %s203 = sphi 0, %s201
      %s204 = sphi 0, %s203
      %s218 = sphi 0, %s204
      %s222 = sphi 0, %s222
      %s224 = sphi 0, %s222
      %s225 = sphi 0, %s224
      %s239 = sphi 0, %s225
      %s243 = sphi 0, %s243
      %s245 = sphi 0, %s243
      %s246 = sphi 0, %s245
      %s260 = sphi 0, %s246
      %s264 = sphi 0, %s264
      %s266 = sphi 0, %s264
      %s267 = sphi 0, %s266
      %s281 = sphi 0, %s267
      %s285 = sphi 0, %s285
      %s287 = sphi 0, %s285
      %s288 = sphi 0, %s287
      %s302 = sphi 0, %s288
      %s306 = sphi 0, %s306
      %s308 = sphi 0, %s306
      %s309 = sphi 0, %s308
      %s323 = sphi 0, %s309
      %s327 = sphi 0, %s327
      %s329 = sphi 0, %s327
      %s330 = sphi 0, %s329
      %s344 = sphi 0, %s330
    $region4: #{score_network_forward.1} parent=1 // loop_header_branch
      %28 = sbr.rel (%p26) target = $region8
    $region5: #{score_network_forward.1} parent=1 // loop_body
      %s30 = ssub.s32 %s25, 1
      %s31 = ssub.s32 %s25, 2
      %s32 = sadd.s32 %s25, 1
      %s34 = sadd.s32 %s33, 1
      %p37 = scmp.eq.s32.totalorder %s25, 1
      %p38 = scmp.ne.s32.totalorder %s33, %s35
      %p39 = scmp.eq.s32.totalorder %s25, 0
      %p40 = por %p38, %p39
      %p41 = scmp.ne.s32.totalorder %s33, %s35
      %p42 = scmp.eq.s32.totalorder %s30, 1
      %p43 = por %p41, %p42
      %p44 = scmp.ne.s32.totalorder %s35, %s36
      %p45 = scmp.eq.s32.totalorder %s30, 0
      %p46 = por %p44, %p45
      %p47 = scmp.ne.s32.totalorder %s35, %s36
      %p48 = scmp.eq.s32.totalorder %s31, 1
      %p49 = por %p47, %p48
      %p51 = scmp.ne.s32.totalorder %s36, %s50
      %p52 = scmp.eq.s32.totalorder %s31, 0
      %p53 = por %p51, %p52
      %s55 = sadd.s32 %s54, 1
      %p58 = scmp.eq.s32.totalorder %s25, 1
      %p59 = scmp.ne.s32.totalorder %s54, %s56
      %p60 = scmp.eq.s32.totalorder %s25, 0
      %p61 = por %p59, %p60
      %p62 = scmp.ne.s32.totalorder %s54, %s56
      %p63 = scmp.eq.s32.totalorder %s30, 1
      %p64 = por %p62, %p63
      %p65 = scmp.ne.s32.totalorder %s56, %s57
      %p66 = scmp.eq.s32.totalorder %s30, 0
      %p67 = por %p65, %p66
      %p68 = scmp.ne.s32.totalorder %s56, %s57
      %p69 = scmp.eq.s32.totalorder %s31, 1
      %p70 = por %p68, %p69
      %p72 = scmp.ne.s32.totalorder %s57, %s71
      %p73 = scmp.eq.s32.totalorder %s31, 0
      %p74 = por %p72, %p73
      %s76 = sadd.s32 %s75, 1
      %p79 = scmp.eq.s32.totalorder %s25, 1
      %p80 = scmp.ne.s32.totalorder %s75, %s77
      %p81 = scmp.eq.s32.totalorder %s25, 0
      %p82 = por %p80, %p81
      %p83 = scmp.ne.s32.totalorder %s75, %s77
      %p84 = scmp.eq.s32.totalorder %s30, 1
      %p85 = por %p83, %p84
      %p86 = scmp.ne.s32.totalorder %s77, %s78
      %p87 = scmp.eq.s32.totalorder %s30, 0
      %p88 = por %p86, %p87
      %p89 = scmp.ne.s32.totalorder %s77, %s78
      %p90 = scmp.eq.s32.totalorder %s31, 1
      %p91 = por %p89, %p90
      %p93 = scmp.ne.s32.totalorder %s78, %s92
      %p94 = scmp.eq.s32.totalorder %s31, 0
      %p95 = por %p93, %p94
      %s97 = sadd.s32 %s96, 1
      %p100 = scmp.eq.s32.totalorder %s25, 1
      %p101 = scmp.ne.s32.totalorder %s96, %s98
      %p102 = scmp.eq.s32.totalorder %s25, 0
      %p103 = por %p101, %p102
      %p104 = scmp.ne.s32.totalorder %s96, %s98
      %p105 = scmp.eq.s32.totalorder %s30, 1
      %p106 = por %p104, %p105
      %p107 = scmp.ne.s32.totalorder %s98, %s99
      %p108 = scmp.eq.s32.totalorder %s30, 0
      %p109 = por %p107, %p108
      %p110 = scmp.ne.s32.totalorder %s98, %s99
      %p111 = scmp.eq.s32.totalorder %s31, 1
      %p112 = por %p110, %p111
      %p114 = scmp.ne.s32.totalorder %s99, %s113
      %p115 = scmp.eq.s32.totalorder %s31, 0
      %p116 = por %p114, %p115
      %s118 = sadd.s32 %s117, 1
      %p121 = scmp.eq.s32.totalorder %s25, 1
      %p122 = scmp.ne.s32.totalorder %s117, %s119
      %p123 = scmp.eq.s32.totalorder %s25, 0
      %p124 = por %p122, %p123
      %p125 = scmp.ne.s32.totalorder %s117, %s119
      %p126 = scmp.eq.s32.totalorder %s30, 1
      %p127 = por %p125, %p126
      %p128 = scmp.ne.s32.totalorder %s119, %s120
      %p129 = scmp.eq.s32.totalorder %s30, 0
      %p130 = por %p128, %p129
      %p131 = scmp.ne.s32.totalorder %s119, %s120
      %p132 = scmp.eq.s32.totalorder %s31, 1
      %p133 = por %p131, %p132
      %p135 = scmp.ne.s32.totalorder %s120, %s134
      %p136 = scmp.eq.s32.totalorder %s31, 0
      %p137 = por %p135, %p136
      %s139 = sadd.s32 %s138, 1
      %p142 = scmp.eq.s32.totalorder %s25, 1
      %p143 = scmp.ne.s32.totalorder %s138, %s140
      %p144 = scmp.eq.s32.totalorder %s25, 0
      %p145 = por %p143, %p144
      %p146 = scmp.ne.s32.totalorder %s138, %s140
      %p147 = scmp.eq.s32.totalorder %s30, 1
      %p148 = por %p146, %p147
      %p149 = scmp.ne.s32.totalorder %s140, %s141
      %p150 = scmp.eq.s32.totalorder %s30, 0
      %p151 = por %p149, %p150
      %p152 = scmp.ne.s32.totalorder %s140, %s141
      %p153 = scmp.eq.s32.totalorder %s31, 1
      %p154 = por %p152, %p153
      %p156 = scmp.ne.s32.totalorder %s141, %s155
      %p157 = scmp.eq.s32.totalorder %s31, 0
      %p158 = por %p156, %p157
      %s160 = sadd.s32 %s159, 1
      %p163 = scmp.eq.s32.totalorder %s25, 1
      %p164 = scmp.ne.s32.totalorder %s159, %s161
      %p165 = scmp.eq.s32.totalorder %s25, 0
      %p166 = por %p164, %p165
      %p167 = scmp.ne.s32.totalorder %s159, %s161
      %p168 = scmp.eq.s32.totalorder %s30, 1
      %p169 = por %p167, %p168
      %p170 = scmp.ne.s32.totalorder %s161, %s162
      %p171 = scmp.eq.s32.totalorder %s30, 0
      %p172 = por %p170, %p171
      %p173 = scmp.ne.s32.totalorder %s161, %s162
      %p174 = scmp.eq.s32.totalorder %s31, 1
      %p175 = por %p173, %p174
      %p177 = scmp.ne.s32.totalorder %s162, %s176
      %p178 = scmp.eq.s32.totalorder %s31, 0
      %p179 = por %p177, %p178
      %s181 = sadd.s32 %s180, 1
      %p184 = scmp.eq.s32.totalorder %s25, 1
      %p185 = scmp.ne.s32.totalorder %s180, %s182
      %p186 = scmp.eq.s32.totalorder %s25, 0
      %p187 = por %p185, %p186
      %p188 = scmp.ne.s32.totalorder %s180, %s182
      %p189 = scmp.eq.s32.totalorder %s30, 1
      %p190 = por %p188, %p189
      %p191 = scmp.ne.s32.totalorder %s182, %s183
      %p192 = scmp.eq.s32.totalorder %s30, 0
      %p193 = por %p191, %p192
      %p194 = scmp.ne.s32.totalorder %s182, %s183
      %p195 = scmp.eq.s32.totalorder %s31, 1
      %p196 = por %p194, %p195
      %p198 = scmp.ne.s32.totalorder %s183, %s197
      %p199 = scmp.eq.s32.totalorder %s31, 0
      %p200 = por %p198, %p199
      %s202 = sadd.s32 %s201, 1
      %p205 = scmp.eq.s32.totalorder %s25, 1
      %p206 = scmp.ne.s32.totalorder %s201, %s203
      %p207 = scmp.eq.s32.totalorder %s25, 0
      %p208 = por %p206, %p207
      %p209 = scmp.ne.s32.totalorder %s201, %s203
      %p210 = scmp.eq.s32.totalorder %s30, 1
      %p211 = por %p209, %p210
      %p212 = scmp.ne.s32.totalorder %s203, %s204
      %p213 = scmp.eq.s32.totalorder %s30, 0
      %p214 = por %p212, %p213
      %p215 = scmp.ne.s32.totalorder %s203, %s204
      %p216 = scmp.eq.s32.totalorder %s31, 1
      %p217 = por %p215, %p216
      %p219 = scmp.ne.s32.totalorder %s204, %s218
      %p220 = scmp.eq.s32.totalorder %s31, 0
      %p221 = por %p219, %p220
      %s223 = sadd.s32 %s222, 1
      %p226 = scmp.eq.s32.totalorder %s25, 1
      %p227 = scmp.ne.s32.totalorder %s222, %s224
      %p228 = scmp.eq.s32.totalorder %s25, 0
      %p229 = por %p227, %p228
      %p230 = scmp.ne.s32.totalorder %s222, %s224
      %p231 = scmp.eq.s32.totalorder %s30, 1
      %p232 = por %p230, %p231
      %p233 = scmp.ne.s32.totalorder %s224, %s225
      %p234 = scmp.eq.s32.totalorder %s30, 0
      %p235 = por %p233, %p234
      %p236 = scmp.ne.s32.totalorder %s224, %s225
      %p237 = scmp.eq.s32.totalorder %s31, 1
      %p238 = por %p236, %p237
      %p240 = scmp.ne.s32.totalorder %s225, %s239
      %p241 = scmp.eq.s32.totalorder %s31, 0
      %p242 = por %p240, %p241
      %s244 = sadd.s32 %s243, 1
      %p247 = scmp.eq.s32.totalorder %s25, 1
      %p248 = scmp.ne.s32.totalorder %s243, %s245
      %p249 = scmp.eq.s32.totalorder %s25, 0
      %p250 = por %p248, %p249
      %p251 = scmp.ne.s32.totalorder %s243, %s245
      %p252 = scmp.eq.s32.totalorder %s30, 1
      %p253 = por %p251, %p252
      %p254 = scmp.ne.s32.totalorder %s245, %s246
      %p255 = scmp.eq.s32.totalorder %s30, 0
      %p256 = por %p254, %p255
      %p257 = scmp.ne.s32.totalorder %s245, %s246
      %p258 = scmp.eq.s32.totalorder %s31, 1
      %p259 = por %p257, %p258
      %p261 = scmp.ne.s32.totalorder %s246, %s260
      %p262 = scmp.eq.s32.totalorder %s31, 0
      %p263 = por %p261, %p262
      %s265 = sadd.s32 %s264, 1
      %p268 = scmp.eq.s32.totalorder %s25, 1
      %p269 = scmp.ne.s32.totalorder %s264, %s266
      %p270 = scmp.eq.s32.totalorder %s25, 0
      %p271 = por %p269, %p270
      %p272 = scmp.ne.s32.totalorder %s264, %s266
      %p273 = scmp.eq.s32.totalorder %s30, 1
      %p274 = por %p272, %p273
      %p275 = scmp.ne.s32.totalorder %s266, %s267
      %p276 = scmp.eq.s32.totalorder %s30, 0
      %p277 = por %p275, %p276
      %p278 = scmp.ne.s32.totalorder %s266, %s267
      %p279 = scmp.eq.s32.totalorder %s31, 1
      %p280 = por %p278, %p279
      %p282 = scmp.ne.s32.totalorder %s267, %s281
      %p283 = scmp.eq.s32.totalorder %s31, 0
      %p284 = por %p282, %p283
      %s286 = sadd.s32 %s285, 1
      %p289 = scmp.eq.s32.totalorder %s25, 1
      %p290 = scmp.ne.s32.totalorder %s285, %s287
      %p291 = scmp.eq.s32.totalorder %s25, 0
      %p292 = por %p290, %p291
      %p293 = scmp.ne.s32.totalorder %s285, %s287
      %p294 = scmp.eq.s32.totalorder %s30, 1
      %p295 = por %p293, %p294
      %p296 = scmp.ne.s32.totalorder %s287, %s288
      %p297 = scmp.eq.s32.totalorder %s30, 0
      %p298 = por %p296, %p297
      %p299 = scmp.ne.s32.totalorder %s287, %s288
      %p300 = scmp.eq.s32.totalorder %s31, 1
      %p301 = por %p299, %p300
      %p303 = scmp.ne.s32.totalorder %s288, %s302
      %p304 = scmp.eq.s32.totalorder %s31, 0
      %p305 = por %p303, %p304
      %s307 = sadd.s32 %s306, 1
      %p310 = scmp.eq.s32.totalorder %s25, 1
      %p311 = scmp.ne.s32.totalorder %s306, %s308
      %p312 = scmp.eq.s32.totalorder %s25, 0
      %p313 = por %p311, %p312
      %p314 = scmp.ne.s32.totalorder %s306, %s308
      %p315 = scmp.eq.s32.totalorder %s30, 1
      %p316 = por %p314, %p315
      %p317 = scmp.ne.s32.totalorder %s308, %s309
      %p318 = scmp.eq.s32.totalorder %s30, 0
      %p319 = por %p317, %p318
      %p320 = scmp.ne.s32.totalorder %s308, %s309
      %p321 = scmp.eq.s32.totalorder %s31, 1
      %p322 = por %p320, %p321
      %p324 = scmp.ne.s32.totalorder %s309, %s323
      %p325 = scmp.eq.s32.totalorder %s31, 0
      %p326 = por %p324, %p325
      %s328 = sadd.s32 %s327, 1
      %p331 = scmp.eq.s32.totalorder %s25, 1
      %p332 = scmp.ne.s32.totalorder %s327, %s329
      %p333 = scmp.eq.s32.totalorder %s25, 0
      %p334 = por %p332, %p333
      %p335 = scmp.ne.s32.totalorder %s327, %s329
      %p336 = scmp.eq.s32.totalorder %s30, 1
      %p337 = por %p335, %p336
      %p338 = scmp.ne.s32.totalorder %s329, %s330
      %p339 = scmp.eq.s32.totalorder %s30, 0
      %p340 = por %p338, %p339
      %p341 = scmp.ne.s32.totalorder %s329, %s330
      %p342 = scmp.eq.s32.totalorder %s31, 1
      %p343 = por %p341, %p342
      %p345 = scmp.ne.s32.totalorder %s330, %s344
      %p346 = scmp.eq.s32.totalorder %s31, 0
      %p347 = por %p345, %p346
      %p348 = scmp.le.s32.totalorder 1, %s25
      %p349 = scmp.lt.s32.totalorder %s25, 3
      %p350 = pnand %p348, %p349
      %p351 = pneg %p350
      // Predicated region
      $region9: #{score_network_forward.1} parent=5 // pred_check
        _
      $region10: #{score_network_forward.1} parent=5 // pred_check_branch
        %353 = sbr.rel (%p350) target = $region12
      $region11: #{score_network_forward.1} parent=5 // pred_region
        %s354 = ssub.s32 %s25, 1
        // Predicated region
        $region13: #{score_network_forward.1} parent=11 // pred_check
          %p355 = pneg %p46
        $region14: #{score_network_forward.1} parent=11 // pred_check_branch
          %357 = sbr.rel (%p355) target = $region16
        $region15: #{score_network_forward.1} parent=11 // pred_region
          _
        $region16: #{score_network_forward.1} parent=11 // pred_fallthru
          _
        // Predicated region
        $region17: #{score_network_forward.1} parent=11 // pred_check
          %p358 = pneg %p67
        $region18: #{score_network_forward.1} parent=11 // pred_check_branch
          %360 = sbr.rel (%p358) target = $region20
        $region19: #{score_network_forward.1} parent=11 // pred_region
          _
        $region20: #{score_network_forward.1} parent=11 // pred_fallthru
          _
        // Predicated region
        $region21: #{score_network_forward.1} parent=11 // pred_check
          %p361 = pneg %p88
        $region22: #{score_network_forward.1} parent=11 // pred_check_branch
          %363 = sbr.rel (%p361) target = $region24
        $region23: #{score_network_forward.1} parent=11 // pred_region
          _
        $region24: #{score_network_forward.1} parent=11 // pred_fallthru
          _
        // Predicated region
        $region25: #{score_network_forward.1} parent=11 // pred_check
          %p364 = pneg %p109
        $region26: #{score_network_forward.1} parent=11 // pred_check_branch
          %366 = sbr.rel (%p364) target = $region28
        $region27: #{score_network_forward.1} parent=11 // pred_region
          _
        $region28: #{score_network_forward.1} parent=11 // pred_fallthru
          _
        // Predicated region
        $region29: #{score_network_forward.1} parent=11 // pred_check
          %p367 = pneg %p130
        $region30: #{score_network_forward.1} parent=11 // pred_check_branch
          %369 = sbr.rel (%p367) target = $region32
        $region31: #{score_network_forward.1} parent=11 // pred_region
          _
        $region32: #{score_network_forward.1} parent=11 // pred_fallthru
          _
        // Predicated region
        $region33: #{score_network_forward.1} parent=11 // pred_check
          %p370 = pneg %p151
        $region34: #{score_network_forward.1} parent=11 // pred_check_branch
          %372 = sbr.rel (%p370) target = $region36
        $region35: #{score_network_forward.1} parent=11 // pred_region
          _
        $region36: #{score_network_forward.1} parent=11 // pred_fallthru
          _
        // Predicated region
        $region37: #{score_network_forward.1} parent=11 // pred_check
          %p373 = pneg %p172
        $region38: #{score_network_forward.1} parent=11 // pred_check_branch
          %375 = sbr.rel (%p373) target = $region40
        $region39: #{score_network_forward.1} parent=11 // pred_region
          %s377 = ssub.s32 2048, 2048
          %378 = vsyncadd [#allocation4], %s377
          %s379 = sshll.u32 [#allocation3], 4
          %s380 = int_to_ptr.vmem [resolvable:$true] %s379
          %385 = dma.hbm_to_vmem [thread:$0]  %s6, 2048, %s380, [#allocation4], 256, 256, 16
        $region40: #{score_network_forward.1} parent=11 // pred_fallthru
          _
        // Predicated region
        $region41: #{score_network_forward.1} parent=11 // pred_check
          %p386 = pneg %p193
        $region42: #{score_network_forward.1} parent=11 // pred_check_branch
          %388 = sbr.rel (%p386) target = $region44
        $region43: #{score_network_forward.1} parent=11 // pred_region
          %s390 = ssub.s32 8192, 8192
          %391 = vsyncadd [#allocation8], %s390
          %s392 = sshll.u32 [#allocation7], 4
          %s393 = int_to_ptr.vmem [resolvable:$true] %s392
          %398 = dma.hbm_to_vmem [thread:$0]  %s7, 8192, %s393, [#allocation8], 128, 128, 8
        $region44: #{score_network_forward.1} parent=11 // pred_fallthru
          _
        // Predicated region
        $region45: #{score_network_forward.1} parent=11 // pred_check
          %p399 = pneg %p214
        $region46: #{score_network_forward.1} parent=11 // pred_check_branch
          %401 = sbr.rel (%p399) target = $region48
        $region47: #{score_network_forward.1} parent=11 // pred_region
          %s403 = ssub.s32 8192, 8192
          %404 = vsyncadd [#allocation8], %s403
          %s405 = sshll.u32 [#allocation9], 4
          %s406 = int_to_ptr.vmem [resolvable:$true] %s405
          %411 = dma.hbm_to_vmem [thread:$0]  %s8, 8192, %s406, [#allocation8], 128, 128, 8
        $region48: #{score_network_forward.1} parent=11 // pred_fallthru
          _
        // Predicated region
        $region49: #{score_network_forward.1} parent=11 // pred_check
          %p412 = pneg %p235
        $region50: #{score_network_forward.1} parent=11 // pred_check_branch
          %414 = sbr.rel (%p412) target = $region52
        $region51: #{score_network_forward.1} parent=11 // pred_region
          _
        $region52: #{score_network_forward.1} parent=11 // pred_fallthru
          _
        // Predicated region
        $region53: #{score_network_forward.1} parent=11 // pred_check
          %p415 = pneg %p256
        $region54: #{score_network_forward.1} parent=11 // pred_check_branch
          %417 = sbr.rel (%p415) target = $region56
        $region55: #{score_network_forward.1} parent=11 // pred_region
          %s419 = ssub.s32 256, 256
          %420 = vsyncadd [#allocation11], %s419
          %s421 = sshll.u32 [#allocation10], 4
          %s422 = int_to_ptr.vmem [resolvable:$true] %s421
          %427 = dma.hbm_to_vmem [thread:$0]  %s10, 256, %s422, [#allocation11], 128, 128, 8
        $region56: #{score_network_forward.1} parent=11 // pred_fallthru
          _
        // Predicated region
        $region57: #{score_network_forward.1} parent=11 // pred_check
          %p428 = pneg %p277
        $region58: #{score_network_forward.1} parent=11 // pred_check_branch
          %430 = sbr.rel (%p428) target = $region60
        $region59: #{score_network_forward.1} parent=11 // pred_region
          _
        $region60: #{score_network_forward.1} parent=11 // pred_fallthru
          _
        // Predicated region
        $region61: #{score_network_forward.1} parent=11 // pred_check
          %p431 = pneg %p298
        $region62: #{score_network_forward.1} parent=11 // pred_check_branch
          %433 = sbr.rel (%p431) target = $region64
        $region63: #{score_network_forward.1} parent=11 // pred_region
          %s435 = ssub.s32 32, 32
          %436 = vsyncadd [#allocation11], %s435
          %s437 = sshll.u32 [#allocation12], 4
          %s438 = int_to_ptr.vmem [resolvable:$true] %s437
          %443 = dma.hbm_to_vmem [thread:$0]  %s12, 32, %s438, [#allocation11], 16, 16, 1
        $region64: #{score_network_forward.1} parent=11 // pred_fallthru
          _
        // Predicated region
        $region65: #{score_network_forward.1} parent=11 // pred_check
          %p444 = pneg %p319
        $region66: #{score_network_forward.1} parent=11 // pred_check_branch
          %446 = sbr.rel (%p444) target = $region68
        $region67: #{score_network_forward.1} parent=11 // pred_region
          %s448 = ssub.s32 32, 32
          %449 = vsyncadd [#allocation6], %s448
          %452 = dma.hbm_to_smem %s13, 32, [#allocation13], [#allocation6]
        $region68: #{score_network_forward.1} parent=11 // pred_fallthru
          _
      $region12: #{score_network_forward.1} parent=5 // pred_fallthru
        _
      %p453 = scmp.lt.s32.totalorder %s25, 2
      // Predicated region
      $region69: #{score_network_forward.1} parent=5 // pred_check
        %p454 = pneg %p453
      $region70: #{score_network_forward.1} parent=5 // pred_check_branch
        %456 = sbr.rel (%p454) target = $region72
      $region71: #{score_network_forward.1} parent=5 // pred_region
        _
      $region72: #{score_network_forward.1} parent=5 // pred_fallthru
        _
      %p457 = scmp.le.s32.totalorder 1, %s25
      %p458 = scmp.lt.s32.totalorder %s25, 3
      %p459 = pnand %p457, %p458
      %p460 = pneg %p459
      // Predicated region
      $region73: #{score_network_forward.1} parent=5 // pred_check
        _
      $region74: #{score_network_forward.1} parent=5 // pred_check_branch
        %462 = sbr.rel (%p459) target = $region76
      $region75: #{score_network_forward.1} parent=5 // pred_region
        %s463 = ssub.s32 %s25, 1
        // Predicated region
        $region77: #{score_network_forward.1} parent=75 // pred_check
          %p464 = pneg %p172
        $region78: #{score_network_forward.1} parent=75 // pred_check_branch
          %466 = sbr.rel (%p464) target = $region80
        $region79: #{score_network_forward.1} parent=75 // pred_region
          %467 = dma.done [#allocation4], 2048
        $region80: #{score_network_forward.1} parent=75 // pred_fallthru
          _
        // Predicated region
        $region81: #{score_network_forward.1} parent=75 // pred_check
          %p468 = pneg %p193
        $region82: #{score_network_forward.1} parent=75 // pred_check_branch
          %470 = sbr.rel (%p468) target = $region84
        $region83: #{score_network_forward.1} parent=75 // pred_region
          %471 = dma.done [#allocation8], 8192
        $region84: #{score_network_forward.1} parent=75 // pred_fallthru
          _
        // Predicated region
        $region85: #{score_network_forward.1} parent=75 // pred_check
          %p472 = pneg %p214
        $region86: #{score_network_forward.1} parent=75 // pred_check_branch
          %474 = sbr.rel (%p472) target = $region88
        $region87: #{score_network_forward.1} parent=75 // pred_region
          %475 = dma.done [#allocation8], 8192
        $region88: #{score_network_forward.1} parent=75 // pred_fallthru
          _
        // Predicated region
        $region89: #{score_network_forward.1} parent=75 // pred_check
          %p476 = pneg %p256
        $region90: #{score_network_forward.1} parent=75 // pred_check_branch
          %478 = sbr.rel (%p476) target = $region92
        $region91: #{score_network_forward.1} parent=75 // pred_region
          %479 = dma.done [#allocation11], 256
        $region92: #{score_network_forward.1} parent=75 // pred_fallthru
          _
        // Predicated region
        $region93: #{score_network_forward.1} parent=75 // pred_check
          %p480 = pneg %p298
        $region94: #{score_network_forward.1} parent=75 // pred_check_branch
          %482 = sbr.rel (%p480) target = $region96
        $region95: #{score_network_forward.1} parent=75 // pred_region
          %483 = dma.done [#allocation11], 32
        $region96: #{score_network_forward.1} parent=75 // pred_fallthru
          _
        // Predicated region
        $region97: #{score_network_forward.1} parent=75 // pred_check
          %p484 = pneg %p319
        $region98: #{score_network_forward.1} parent=75 // pred_check_branch
          %486 = sbr.rel (%p484) target = $region100
        $region99: #{score_network_forward.1} parent=75 // pred_region
          %487 = dma.done [#allocation6], 32
        $region100: #{score_network_forward.1} parent=75 // pred_fallthru
          _
        %488 = sfence
        %p489 = pneg %p46
        %p490 = pneg %p43
        %p491 = pneg %p67
        %p492 = pneg %p64
        %p493 = pneg %p88
        %p494 = pneg %p85
        %p495 = pneg %p109
        %p496 = pneg %p106
        %p497 = pneg %p130
        %p498 = pneg %p127
        %p499 = pneg %p151
        %p500 = pneg %p148
        %p501 = pneg %p172
        %p502 = pneg %p169
        %p503 = pneg %p193
        %p504 = pneg %p190
        %p505 = pneg %p214
        %p506 = pneg %p211
        %p507 = pneg %p235
        %p508 = pneg %p232
        %p509 = pneg %p256
        %p510 = pneg %p253
        %p511 = pneg %p277
        %p512 = pneg %p274
        %p513 = pneg %p298
        %p514 = pneg %p295
        %p515 = pneg %p319
        %p516 = pneg %p316
        %p517 = pneg %p340
        %p518 = pneg %p337
        %p520 = scmp.eq.s32.totalorder %s30, 0
        // Predicated region
        $region101: #{score_network_forward.1} parent=75 // pred_check
          %p521 = pneg %p520
        $region102: #{score_network_forward.1} parent=75 // pred_check_branch
          %523 = sbr.rel (%p521) target = $region104
        $region103: #{score_network_forward.1} parent=75 // pred_region
          %v524 = vld [vmem:[%s1] sm:$0xff]
          %v525 = vld [vmem:[%s1 + $0x8] sm:$0xff]
          %vm526 = vcmask 64512
          %527 = vst.msk [vmem:[#allocation2] sm:$0xff] %vm526, %v524
          %528 = vst.msk [vmem:[#allocation2 + $0x8] sm:$0xff] %vm526, %v525
        $region104: #{score_network_forward.1} parent=75 // pred_fallthru
          _
        %v529 = vld [vmem:[%s0] sm:$0xf]
        %v530 = vld [vmem:[%s0 + $0x4] sm:$0xf]
        %v531 = vld [vmem:[#allocation2] sm:$0xff]
        %v532 = vld [vmem:[#allocation2 + $0x8] sm:$0xff]
        %v533 = vld [vmem:[%s2] sm:$0xff]
        %v534 = vld [vmem:[%s2 + $0x8] sm:$0xff]
        %v535 = vld [vmem:[%s3] sm:$0xff]
        %v536 = vld [vmem:[%s3 + $0x8] sm:$0xff]
        %v537 = vld [vmem:[%s4] sm:$0xff]
        %v538 = vld [vmem:[%s4 + $0x8] sm:$0xff]
        %s539 = smul.u32 %s30, 2
        %s540 = smul.addr %s539, 4
        %s541 = scalar_lea.vmem [#allocation10], %s540
        %v542 = vld [vmem:[%s541] sm:$0xff]
        %s543 = smul.u32 %s30, 4
        %s544 = scalar_lea.vmem %s11, %s543
        %v545 = vld [vmem:[%s544] sm:$0x7]
        %s546 = scalar_lea.vmem [#allocation12], %s30
        %v547 = vld [vmem:[%s546] sm:$0x1]
        %550 = vrot.lane.b32.xlu0 %v531, 8
        %v551 = vpop.permute.xlu0 %550
        %552 = vrot.lane.b32.xlu0 %v532, 8
        %v553 = vpop.permute.xlu0 %552
        %vm556 = vcmask 64512
        %v557 = vsel %vm556, %v531, %v551
        %v558 = vsel %vm556, %v532, %v553
        %v559 = vmul.f32 %v557, %v537
        %v560 = vmul.f32 %v558, %v538
        %v561 = vpack.c.bf16 %v560, %v559
        %v564 = vunpack.c.l.b16 %v529
        %v565 = vunpack.c.l.b16 %v530
        %v566 = vpack.c.b16 %v565, %v564
        %vm568 = vcmask 130048
        %v570 = vsel %vm568, %v561, 0
        %572 = vmatprep.subr.bf16.mxu0 0
        %573 = vmatpush1.bf16.msra.mxu0 %v566
        %574 = vmatprep.subr.bf16.mxu0 0
        %575 = vmatpush1.bf16.msra.mxu0 0
        %576 = vmatprep.subr.bf16.mxu0 0
        %577 = vmatpush1.bf16.msra.mxu0 0
        %578 = vmatprep.subr.bf16.mxu0 0
        %579 = vmatpush1.bf16.msra.mxu0 0
        %580 = vmatprep.subr.bf16.mxu0 0
        %581 = vmatpush1.bf16.msra.mxu0 0
        %582 = vmatprep.subr.bf16.mxu0 0
        %583 = vmatpush1.bf16.msra.mxu0 0
        %584 = vmatprep.subr.bf16.mxu0 0
        %585 = vmatpush1.bf16.msra.mxu0 0
        %586 = vmatprep.subr.bf16.mxu0 0
        %587 = vmatpush1.bf16.msra.mxu0 0
        %588 = vmatprep.subr.bf16.mxu0 0
        %589 = vmatpush1.bf16.msra.mxu0 0
        %590 = vmatprep.subr.bf16.mxu0 0
        %591 = vmatpush1.bf16.msra.mxu0 0
        %592 = vmatprep.subr.bf16.mxu0 0
        %593 = vmatpush1.bf16.msra.mxu0 0
        %594 = vmatprep.subr.bf16.mxu0 0
        %595 = vmatpush1.bf16.msra.mxu0 0
        %596 = vmatprep.subr.bf16.mxu0 0
        %597 = vmatpush1.bf16.msra.mxu0 0
        %598 = vmatprep.subr.bf16.mxu0 0
        %599 = vmatpush1.bf16.msra.mxu0 0
        %600 = vmatprep.subr.bf16.mxu0 0
        %601 = vmatpush1.bf16.msra.mxu0 0
        %602 = vmatprep.subr.bf16.mxu0 0
        %603 = vmatpush1.bf16.msra.mxu0 0
        %604 = vmatprep.mubr.bf16.mxu0 0
        %605 = vmatmul.mubr.bf16.gmra.mrb[0].mxu0 %v570
        %v606 = vpop.f32.mrb[0].mxu0
        %v607 = vadd.f32 0.0, %v606
        %v608 = vpop.f32.mrb[0].mxu0
        %v609 = vpop.f32.mrb[0].mxu0
        %v610 = vadd.f32 0.0, %v609
        %v611 = vpop.f32.mrb[0].mxu0
        %612 = vdwg.mxu0
        %v613 = vpack.c.bf16 %v610, %v607
        %614 = vrot.lane.b32.xlu0 %v566, 32
        %v615 = vpop.permute.xlu0 %614
        %vm616 = vcmask 261120
        %v619 = vsel %vm616, %v613, %v615
        %s620 = smul.u32 %s30, 8
        %s621 = smul.addr %s620, 4
        %s622 = scalar_lea.vmem %s5, %s621
        %v623 = vld [vmem:[%s622] sm:$0xf]
        %v624 = vld [vmem:[%s622 + $0x4] sm:$0xf]
        %v625 = vld [vmem:[%s622 + $0x8] sm:$0xf]
        %v626 = vld [vmem:[%s622 + $0xc] sm:$0xf]
        %v627 = vld [vmem:[%s622 + $0x10] sm:$0xf]
        %v628 = vld [vmem:[%s622 + $0x14] sm:$0xf]
        %v629 = vld [vmem:[%s622 + $0x18] sm:$0xf]
        %v630 = vld [vmem:[%s622 + $0x1c] sm:$0xf]
        %v632 = vlaneseq
        %v633 = vshrl.u32 %v632, 7
        %v634 = vsub.s32 0, %v633
        %v635 = vrot.slane %v547, %v634
        %v645 = vunpack.c.l.b16 %v623
        %v646 = vunpack.c.l.b16 %v624
        %v647 = vunpack.c.l.b16 %v625
        %v648 = vunpack.c.l.b16 %v626
        %v649 = vunpack.c.l.b16 %v627
        %v650 = vunpack.c.l.b16 %v628
        %v651 = vunpack.c.l.b16 %v629
        %v652 = vunpack.c.l.b16 %v630
        %v653 = vpack.c.b16 %v646, %v645
        %v654 = vpack.c.b16 %v648, %v647
        %v655 = vpack.c.b16 %v650, %v649
        %v656 = vpack.c.b16 %v652, %v651
        %vm661 = vcmask 523264
        %v662 = vsel %vm661, %v619, 0
        %664 = vmatprep.subr.bf16.mxu0 0
        %665 = vmatpush1.bf16.msra.mxu0 %v653
        %666 = vmatprep.subr.bf16.mxu0 0
        %667 = vmatpush1.bf16.msra.mxu0 %v654
        %668 = vmatprep.subr.bf16.mxu0 0
        %669 = vmatpush1.bf16.msra.mxu0 %v655
        %670 = vmatprep.subr.bf16.mxu0 0
        %671 = vmatpush1.bf16.msra.mxu0 %v656
        %672 = vmatprep.subr.bf16.mxu0 0
        %673 = vmatpush1.bf16.msra.mxu0 0
        %674 = vmatprep.subr.bf16.mxu0 0
        %675 = vmatpush1.bf16.msra.mxu0 0
        %676 = vmatprep.subr.bf16.mxu0 0
        %677 = vmatpush1.bf16.msra.mxu0 0
        %678 = vmatprep.subr.bf16.mxu0 0
        %679 = vmatpush1.bf16.msra.mxu0 0
        %680 = vmatprep.subr.bf16.mxu0 0
        %681 = vmatpush1.bf16.msra.mxu0 0
        %682 = vmatprep.subr.bf16.mxu0 0
        %683 = vmatpush1.bf16.msra.mxu0 0
        %684 = vmatprep.subr.bf16.mxu0 0
        %685 = vmatpush1.bf16.msra.mxu0 0
        %686 = vmatprep.subr.bf16.mxu0 0
        %687 = vmatpush1.bf16.msra.mxu0 0
        %688 = vmatprep.subr.bf16.mxu0 0
        %689 = vmatpush1.bf16.msra.mxu0 0
        %690 = vmatprep.subr.bf16.mxu0 0
        %691 = vmatpush1.bf16.msra.mxu0 0
        %692 = vmatprep.subr.bf16.mxu0 0
        %693 = vmatpush1.bf16.msra.mxu0 0
        %694 = vmatprep.subr.bf16.mxu0 0
        %695 = vmatpush1.bf16.msra.mxu0 0
        %696 = vmatprep.mubr.bf16.mxu0 0
        %697 = vmatmul.mubr.bf16.gmra.mrb[0].mxu0 %v662
        %v698 = vpop.f32.mrb[0].mxu0
        %v699 = vadd.f32 %v635, %v698
        %v700 = vpop.f32.mrb[0].mxu0
        %v701 = vpop.f32.mrb[0].mxu0
        %v702 = vadd.f32 %v635, %v701
        %v703 = vpop.f32.mrb[0].mxu0
        %704 = vdwg.mxu0
        %vm705 = vcmp.gt.f32.partialorder %v699, 0.0
        %vm706 = vcmp.gt.f32.partialorder %v702, 0.0
        %v707 = vmul.f32 %v699, 0.01
        %v708 = vmul.f32 %v702, 0.01
        %v709 = vsel %vm705, %v699, %v707
        %v710 = vsel %vm706, %v702, %v708
        %712 = vset.pattern.permute.xlu0 0
        %713 = vperm.xlu0 %712, %v533
        %v714 = vpop.permute.xlu0 %713
        %717 = vset.pattern.permute.xlu0 0
        %718 = vperm.xlu0 %717, %v534
        %v719 = vpop.permute.xlu0 %718
        %v721 = vmul.f32 %v709, %v714
        %v722 = vmul.f32 %v710, %v719
        %v723 = vpack.c.bf16 %v722, %v721
        %s724 = smul.u32 %s30, 16
        %s725 = smul.addr %s724, 4
        %s726 = scalar_lea.vmem [#allocation3], %s725
        %v727 = vld [vmem:[%s726] sm:$0xff]
        %v728 = vld [vmem:[%s726 + $0x8] sm:$0xff]
        %v729 = vld [vmem:[%s726 + $0x10] sm:$0xff]
        %v730 = vld [vmem:[%s726 + $0x18] sm:$0xff]
        %v731 = vld [vmem:[%s726 + $0x20] sm:$0xff]
        %v732 = vld [vmem:[%s726 + $0x28] sm:$0xff]
        %v733 = vld [vmem:[%s726 + $0x30] sm:$0xff]
        %v734 = vld [vmem:[%s726 + $0x38] sm:$0xff]
        %v743 = vunpack.c.l.b16 %v727
        %v744 = vunpack.c.h.b16 %v727
        %v745 = vunpack.c.l.b16 %v728
        %v746 = vunpack.c.h.b16 %v728
        %v747 = vunpack.c.l.b16 %v729
        %v748 = vunpack.c.h.b16 %v729
        %v749 = vunpack.c.l.b16 %v730
        %v750 = vunpack.c.h.b16 %v730
        %v751 = vunpack.c.l.b16 %v731
        %v752 = vunpack.c.h.b16 %v731
        %v753 = vunpack.c.l.b16 %v732
        %v754 = vunpack.c.h.b16 %v732
        %v755 = vunpack.c.l.b16 %v733
        %v756 = vunpack.c.h.b16 %v733
        %v757 = vunpack.c.l.b16 %v734
        %v758 = vunpack.c.h.b16 %v734
        %v759 = vpack.c.b16 %v747, %v743
        %v760 = vpack.c.b16 %v748, %v744
        %v761 = vpack.c.b16 %v749, %v745
        %v762 = vpack.c.b16 %v750, %v746
        %v763 = vpack.c.b16 %v755, %v751
        %v764 = vpack.c.b16 %v756, %v752
        %v765 = vpack.c.b16 %v757, %v753
        %v766 = vpack.c.b16 %v758, %v754
        %v776 = vsel %vm616, %v723, 0
        %778 = vmatprep.subr.bf16.mxu0 %v760
        %779 = vmatpush1.bf16.msra.mxu0 %v759
        %780 = vmatprep.subr.bf16.mxu0 %v764
        %781 = vmatpush1.bf16.msra.mxu0 %v763
        %782 = vmatprep.subr.bf16.mxu0 0
        %783 = vmatpush1.bf16.msra.mxu0 0
        %784 = vmatprep.subr.bf16.mxu0 0
        %785 = vmatpush1.bf16.msra.mxu0 0
        %786 = vmatprep.subr.bf16.mxu0 0
        %787 = vmatpush1.bf16.msra.mxu0 0
        %788 = vmatprep.subr.bf16.mxu0 0
        %789 = vmatpush1.bf16.msra.mxu0 0
        %790 = vmatprep.subr.bf16.mxu0 0
        %791 = vmatpush1.bf16.msra.mxu0 0
        %792 = vmatprep.subr.bf16.mxu0 0
        %793 = vmatpush1.bf16.msra.mxu0 0
        %794 = vmatprep.subr.bf16.mxu0 0
        %795 = vmatpush1.bf16.msra.mxu0 0
        %796 = vmatprep.subr.bf16.mxu0 0
        %797 = vmatpush1.bf16.msra.mxu0 0
        %798 = vmatprep.subr.bf16.mxu0 0
        %799 = vmatpush1.bf16.msra.mxu0 0
        %800 = vmatprep.subr.bf16.mxu0 0
        %801 = vmatpush1.bf16.msra.mxu0 0
        %802 = vmatprep.subr.bf16.mxu0 0
        %803 = vmatpush1.bf16.msra.mxu0 0
        %804 = vmatprep.subr.bf16.mxu0 0
        %805 = vmatpush1.bf16.msra.mxu0 0
        %806 = vmatprep.subr.bf16.mxu0 0
        %807 = vmatpush1.bf16.msra.mxu0 0
        %808 = vmatprep.subr.bf16.mxu0 0
        %809 = vmatpush1.bf16.msra.mxu0 0
        %810 = vmatprep.mubr.bf16.mxu0 0
        %811 = vmatmul.mubr.bf16.gmra.mrb[0].mxu0 %v776
        %v812 = vpop.f32.mrb[0].mxu0
        %v813 = vadd.f32 0.0, %v812
        %v814 = vpop.f32.mrb[0].mxu0
        %v815 = vadd.f32 0.0, %v814
        %v816 = vpop.f32.mrb[0].mxu0
        %v817 = vadd.f32 0.0, %v816
        %v818 = vpop.f32.mrb[0].mxu0
        %v819 = vadd.f32 0.0, %v818
        %820 = vdwg.mxu0
        %821 = vmatprep.subr.bf16.mxu0 %v762
        %822 = vmatpush1.bf16.msra.mxu0 %v761
        %823 = vmatprep.subr.bf16.mxu0 %v766
        %824 = vmatpush1.bf16.msra.mxu0 %v765
        %825 = vmatprep.subr.bf16.mxu0 0
        %826 = vmatpush1.bf16.msra.mxu0 0
        %827 = vmatprep.subr.bf16.mxu0 0
        %828 = vmatpush1.bf16.msra.mxu0 0
        %829 = vmatprep.subr.bf16.mxu0 0
        %830 = vmatpush1.bf16.msra.mxu0 0
        %831 = vmatprep.subr.bf16.mxu0 0
        %832 = vmatpush1.bf16.msra.mxu0 0
        %833 = vmatprep.subr.bf16.mxu0 0
        %834 = vmatpush1.bf16.msra.mxu0 0
        %835 = vmatprep.subr.bf16.mxu0 0
        %836 = vmatpush1.bf16.msra.mxu0 0
        %837 = vmatprep.subr.bf16.mxu0 0
        %838 = vmatpush1.bf16.msra.mxu0 0
        %839 = vmatprep.subr.bf16.mxu0 0
        %840 = vmatpush1.bf16.msra.mxu0 0
        %841 = vmatprep.subr.bf16.mxu0 0
        %842 = vmatpush1.bf16.msra.mxu0 0
        %843 = vmatprep.subr.bf16.mxu0 0
        %844 = vmatpush1.bf16.msra.mxu0 0
        %845 = vmatprep.subr.bf16.mxu0 0
        %846 = vmatpush1.bf16.msra.mxu0 0
        %847 = vmatprep.subr.bf16.mxu0 0
        %848 = vmatpush1.bf16.msra.mxu0 0
        %849 = vmatprep.subr.bf16.mxu0 0
        %850 = vmatpush1.bf16.msra.mxu0 0
        %851 = vmatprep.subr.bf16.mxu0 0
        %852 = vmatpush1.bf16.msra.mxu0 0
        %853 = vmatprep.mubr.bf16.mxu0 0
        %854 = vmatmul.mubr.bf16.gmra.mrb[0].mxu0 %v776
        %v855 = vpop.f32.mrb[0].mxu0
        %v856 = vadd.f32 0.0, %v855
        %v857 = vpop.f32.mrb[0].mxu0
        %v858 = vadd.f32 0.0, %v857
        %v859 = vpop.f32.mrb[0].mxu0
        %v860 = vadd.f32 0.0, %v859
        %v861 = vpop.f32.mrb[0].mxu0
        %v862 = vadd.f32 0.0, %v861
        %863 = vdwg.mxu0
        %v868 = vcombine.low %v813, %v815
        %v869 = vcombine.high %v813, %v815
        %v871 = vunpack.c.l.s4 1966171168
        %v872 = vunpack.c.0.s8 %v871
        %v873 = vlaneseq
        %v874 = vshrl.u32 %v873, 7
        %v875 = vsub.s32 %v872, %v874
        %v876 = vrot.slane %v868, %v875
        %v878 = vunpack.c.l.s4 1966171168
        %v879 = vunpack.c.0.s8 %v878
        %v880 = vlaneseq
        %v881 = vshrl.u32 %v880, 7
        %v882 = vsub.s32 %v879, %v881
        %v883 = vrot.slane %v869, %v882
        %v884 = vcombine.high %v876, %v876
        %v885 = vcombine.high %v883, %v883
        %v887 = vunpack.c.l.s4 1966171168
        %v888 = vunpack.c.0.s8 %v887
        %v889 = vlaneseq
        %v890 = vshrl.u32 %v889, 7
        %v891 = vsub.s32 %v888, %v890
        %v892 = vrot.slane %v876, %v891
        %v894 = vunpack.c.l.s4 1966171168
        %v895 = vunpack.c.0.s8 %v894
        %v896 = vlaneseq
        %v897 = vshrl.u32 %v896, 7
        %v898 = vsub.s32 %v895, %v897
        %v899 = vrot.slane %v883, %v898
        %v901 = vunpack.c.l.s4 1966171168
        %v902 = vunpack.c.0.s8 %v901
        %v903 = vlaneseq
        %v904 = vshrl.u32 %v903, 7
        %v905 = vsub.s32 %v902, %v904
        %v906 = vrot.slane %v884, %v905
        %v908 = vunpack.c.l.s4 1966171168
        %v909 = vunpack.c.0.s8 %v908
        %v910 = vlaneseq
        %v911 = vshrl.u32 %v910, 7
        %v912 = vsub.s32 %v909, %v911
        %v913 = vrot.slane %v885, %v912
        %v914 = vcombine.high %v892, %v892
        %v915 = vcombine.high %v899, %v899
        %v916 = vcombine.high %v906, %v906
        %v917 = vcombine.high %v913, %v913
        %v918 = vcombine.low %v817, %v819
        %v919 = vcombine.high %v817, %v819
        %v921 = vunpack.c.l.s4 1966171168
        %v922 = vunpack.c.0.s8 %v921
        %v923 = vlaneseq
        %v924 = vshrl.u32 %v923, 7
        %v925 = vsub.s32 %v922, %v924
        %v926 = vrot.slane %v918, %v925
        %v928 = vunpack.c.l.s4 1966171168
        %v929 = vunpack.c.0.s8 %v928
        %v930 = vlaneseq
        %v931 = vshrl.u32 %v930, 7
        %v932 = vsub.s32 %v929, %v931
        %v933 = vrot.slane %v919, %v932
        %v934 = vcombine.high %v926, %v926
        %v935 = vcombine.high %v933, %v933
        %v937 = vunpack.c.l.s4 1966171168
        %v938 = vunpack.c.0.s8 %v937
        %v939 = vlaneseq
        %v940 = vshrl.u32 %v939, 7
        %v941 = vsub.s32 %v938, %v940
        %v942 = vrot.slane %v926, %v941
        %v944 = vunpack.c.l.s4 1966171168
        %v945 = vunpack.c.0.s8 %v944
        %v946 = vlaneseq
        %v947 = vshrl.u32 %v946, 7
        %v948 = vsub.s32 %v945, %v947
        %v949 = vrot.slane %v933, %v948
        %v951 = vunpack.c.l.s4 1966171168
        %v952 = vunpack.c.0.s8 %v951
        %v953 = vlaneseq
        %v954 = vshrl.u32 %v953, 7
        %v955 = vsub.s32 %v952, %v954
        %v956 = vrot.slane %v934, %v955
        %v958 = vunpack.c.l.s4 1966171168
        %v959 = vunpack.c.0.s8 %v958
        %v960 = vlaneseq
        %v961 = vshrl.u32 %v960, 7
        %v962 = vsub.s32 %v959, %v961
        %v963 = vrot.slane %v935, %v962
        %v964 = vcombine.high %v942, %v942
        %v965 = vcombine.high %v949, %v949
        %v966 = vcombine.high %v956, %v956
        %v967 = vcombine.high %v963, %v963
        %v968 = vlaneseq
        %v969 = vshrl.u32 %v968, 7
        %v970 = vsub.s32 0, %v969
        %v971 = vrot.slane %v892, %v970
        %v972 = vlaneseq
        %v973 = vshrl.u32 %v972, 7
        %v974 = vsub.s32 1, %v973
        %v975 = vrot.slane %v892, %v974
        %v976 = vlaneseq
        %v977 = vshrl.u32 %v976, 7
        %v978 = vsub.s32 0, %v977
        %v979 = vrot.slane %v906, %v978
        %v980 = vlaneseq
        %v981 = vshrl.u32 %v980, 7
        %v982 = vsub.s32 1, %v981
        %v983 = vrot.slane %v906, %v982
        %v984 = vlaneseq
        %v985 = vshrl.u32 %v984, 7
        %v986 = vsub.s32 0, %v985
        %v987 = vrot.slane %v914, %v986
        %v988 = vlaneseq
        %v989 = vshrl.u32 %v988, 7
        %v990 = vsub.s32 1, %v989
        %v991 = vrot.slane %v914, %v990
        %v992 = vlaneseq
        %v993 = vshrl.u32 %v992, 7
        %v994 = vsub.s32 0, %v993
        %v995 = vrot.slane %v916, %v994
        %v996 = vlaneseq
        %v997 = vshrl.u32 %v996, 7
        %v998 = vsub.s32 1, %v997
        %v999 = vrot.slane %v916, %v998
        %v1000 = vlaneseq
        %v1001 = vshrl.u32 %v1000, 7
        %v1002 = vsub.s32 0, %v1001
        %v1003 = vrot.slane %v899, %v1002
        %v1004 = vlaneseq
        %v1005 = vshrl.u32 %v1004, 7
        %v1006 = vsub.s32 1, %v1005
        %v1007 = vrot.slane %v899, %v1006
        %v1008 = vlaneseq
        %v1009 = vshrl.u32 %v1008, 7
        %v1010 = vsub.s32 0, %v1009
        %v1011 = vrot.slane %v913, %v1010
        %v1012 = vlaneseq
        %v1013 = vshrl.u32 %v1012, 7
        %v1014 = vsub.s32 1, %v1013
        %v1015 = vrot.slane %v913, %v1014
        %v1016 = vlaneseq
        %v1017 = vshrl.u32 %v1016, 7
        %v1018 = vsub.s32 0, %v1017
        %v1019 = vrot.slane %v915, %v1018
        %v1020 = vlaneseq
        %v1021 = vshrl.u32 %v1020, 7
        %v1022 = vsub.s32 1, %v1021
        %v1023 = vrot.slane %v915, %v1022
        %v1024 = vlaneseq
        %v1025 = vshrl.u32 %v1024, 7
        %v1026 = vsub.s32 0, %v1025
        %v1027 = vrot.slane %v917, %v1026
        %v1028 = vlaneseq
        %v1029 = vshrl.u32 %v1028, 7
        %v1030 = vsub.s32 1, %v1029
        %v1031 = vrot.slane %v917, %v1030
        %v1032 = vlaneseq
        %v1033 = vshrl.u32 %v1032, 7
        %v1034 = vsub.s32 0, %v1033
        %v1035 = vrot.slane %v942, %v1034
        %v1036 = vlaneseq
        %v1037 = vshrl.u32 %v1036, 7
        %v1038 = vsub.s32 1, %v1037
        %v1039 = vrot.slane %v942, %v1038
        %v1040 = vlaneseq
        %v1041 = vshrl.u32 %v1040, 7
        %v1042 = vsub.s32 0, %v1041
        %v1043 = vrot.slane %v956, %v1042
        %v1044 = vlaneseq
        %v1045 = vshrl.u32 %v1044, 7
        %v1046 = vsub.s32 1, %v1045
        %v1047 = vrot.slane %v956, %v1046
        %v1048 = vlaneseq
        %v1049 = vshrl.u32 %v1048, 7
        %v1050 = vsub.s32 0, %v1049
        %v1051 = vrot.slane %v964, %v1050
        %v1052 = vlaneseq
        %v1053 = vshrl.u32 %v1052, 7
        %v1054 = vsub.s32 1, %v1053
        %v1055 = vrot.slane %v964, %v1054
        %v1056 = vlaneseq
        %v1057 = vshrl.u32 %v1056, 7
        %v1058 = vsub.s32 0, %v1057
        %v1059 = vrot.slane %v966, %v1058
        %v1060 = vlaneseq
        %v1061 = vshrl.u32 %v1060, 7
        %v1062 = vsub.s32 1, %v1061
        %v1063 = vrot.slane %v966, %v1062
        %v1064 = vlaneseq
        %v1065 = vshrl.u32 %v1064, 7
        %v1066 = vsub.s32 0, %v1065
        %v1067 = vrot.slane %v949, %v1066
        %v1068 = vlaneseq
        %v1069 = vshrl.u32 %v1068, 7
        %v1070 = vsub.s32 1, %v1069
        %v1071 = vrot.slane %v949, %v1070
        %v1072 = vlaneseq
        %v1073 = vshrl.u32 %v1072, 7
        %v1074 = vsub.s32 0, %v1073
        %v1075 = vrot.slane %v963, %v1074
        %v1076 = vlaneseq
        %v1077 = vshrl.u32 %v1076, 7
        %v1078 = vsub.s32 1, %v1077
        %v1079 = vrot.slane %v963, %v1078
        %v1080 = vlaneseq
        %v1081 = vshrl.u32 %v1080, 7
        %v1082 = vsub.s32 0, %v1081
        %v1083 = vrot.slane %v965, %v1082
        %v1084 = vlaneseq
        %v1085 = vshrl.u32 %v1084, 7
        %v1086 = vsub.s32 1, %v1085
        %v1087 = vrot.slane %v965, %v1086
        %v1088 = vlaneseq
        %v1089 = vshrl.u32 %v1088, 7
        %v1090 = vsub.s32 0, %v1089
        %v1091 = vrot.slane %v967, %v1090
        %v1092 = vlaneseq
        %v1093 = vshrl.u32 %v1092, 7
        %v1094 = vsub.s32 1, %v1093
        %v1095 = vrot.slane %v967, %v1094
        %v1128 = vadd.f32 %v971, %v856
        %v1129 = vadd.f32 %v975, %v858
        %v1130 = vadd.f32 %v979, %v856
        %v1131 = vadd.f32 %v983, %v858
        %v1132 = vadd.f32 %v987, %v856
        %v1133 = vadd.f32 %v991, %v858
        %v1134 = vadd.f32 %v995, %v856
        %v1135 = vadd.f32 %v999, %v858
        %v1136 = vadd.f32 %v1003, %v856
        %v1137 = vadd.f32 %v1007, %v858
        %v1138 = vadd.f32 %v1011, %v856
        %v1139 = vadd.f32 %v1015, %v858
        %v1140 = vadd.f32 %v1019, %v856
        %v1141 = vadd.f32 %v1023, %v858
        %v1142 = vadd.f32 %v1027, %v856
        %v1143 = vadd.f32 %v1031, %v858
        %v1144 = vadd.f32 %v1035, %v860
        %v1145 = vadd.f32 %v1039, %v862
        %v1146 = vadd.f32 %v1043, %v860
        %v1147 = vadd.f32 %v1047, %v862
        %v1148 = vadd.f32 %v1051, %v860
        %v1149 = vadd.f32 %v1055, %v862
        %v1150 = vadd.f32 %v1059, %v860
        %v1151 = vadd.f32 %v1063, %v862
        %v1152 = vadd.f32 %v1067, %v860
        %v1153 = vadd.f32 %v1071, %v862
        %v1154 = vadd.f32 %v1075, %v860
        %v1155 = vadd.f32 %v1079, %v862
        %v1156 = vadd.f32 %v1083, %v860
        %v1157 = vadd.f32 %v1087, %v862
        %v1158 = vadd.f32 %v1091, %v860
        %v1159 = vadd.f32 %v1095, %v862
        %v1160 = vlaneseq
        %v1161 = vshrl.u32 %v1160, 7
        %v1162 = vsub.s32 0, %v1161
        %v1163 = vrot.slane %v531, %v1162
        %1165 = vbcast.lane.b32.xlu0 %v1163, 256
        %v1166 = vpop.permute.xlu0 %1165
        %v1167 = vlaneseq
        %v1168 = vshrl.u32 %v1167, 7
        %v1169 = vsub.s32 1, %v1168
        %v1170 = vrot.slane %v531, %v1169
        %1172 = vbcast.lane.b32.xlu0 %v1170, 256
        %v1173 = vpop.permute.xlu0 %1172
        %v1174 = vlaneseq
        %v1175 = vshrl.u32 %v1174, 7
        %v1176 = vsub.s32 2, %v1175
        %v1177 = vrot.slane %v531, %v1176
        %1179 = vbcast.lane.b32.xlu0 %v1177, 256
        %v1180 = vpop.permute.xlu0 %1179
        %v1181 = vlaneseq
        %v1182 = vshrl.u32 %v1181, 7
        %v1183 = vsub.s32 3, %v1182
        %v1184 = vrot.slane %v531, %v1183
        %1186 = vbcast.lane.b32.xlu0 %v1184, 256
        %v1187 = vpop.permute.xlu0 %1186
        %v1188 = vlaneseq
        %v1189 = vshrl.u32 %v1188, 7
        %v1190 = vsub.s32 4, %v1189
        %v1191 = vrot.slane %v531, %v1190
        %1193 = vbcast.lane.b32.xlu0 %v1191, 256
        %v1194 = vpop.permute.xlu0 %1193
        %v1195 = vlaneseq
        %v1196 = vshrl.u32 %v1195, 7
        %v1197 = vsub.s32 5, %v1196
        %v1198 = vrot.slane %v531, %v1197
        %1200 = vbcast.lane.b32.xlu0 %v1198, 256
        %v1201 = vpop.permute.xlu0 %1200
        %v1202 = vlaneseq
        %v1203 = vshrl.u32 %v1202, 7
        %v1204 = vsub.s32 6, %v1203
        %v1205 = vrot.slane %v531, %v1204
        %1207 = vbcast.lane.b32.xlu0 %v1205, 256
        %v1208 = vpop.permute.xlu0 %1207
        %v1209 = vlaneseq
        %v1210 = vshrl.u32 %v1209, 7
        %v1211 = vsub.s32 7, %v1210
        %v1212 = vrot.slane %v531, %v1211
        %1214 = vbcast.lane.b32.xlu0 %v1212, 256
        %v1215 = vpop.permute.xlu0 %1214
        %v1216 = vlaneseq
        %v1217 = vshrl.u32 %v1216, 7
        %v1218 = vsub.s32 0, %v1217
        %v1219 = vrot.slane %v532, %v1218
        %1221 = vbcast.lane.b32.xlu0 %v1219, 256
        %v1222 = vpop.permute.xlu0 %1221
        %v1223 = vlaneseq
        %v1224 = vshrl.u32 %v1223, 7
        %v1225 = vsub.s32 1, %v1224
        %v1226 = vrot.slane %v532, %v1225
        %1228 = vbcast.lane.b32.xlu0 %v1226, 256
        %v1229 = vpop.permute.xlu0 %1228
        %v1230 = vlaneseq
        %v1231 = vshrl.u32 %v1230, 7
        %v1232 = vsub.s32 2, %v1231
        %v1233 = vrot.slane %v532, %v1232
        %1235 = vbcast.lane.b32.xlu0 %v1233, 256
        %v1236 = vpop.permute.xlu0 %1235
        %v1237 = vlaneseq
        %v1238 = vshrl.u32 %v1237, 7
        %v1239 = vsub.s32 3, %v1238
        %v1240 = vrot.slane %v532, %v1239
        %1242 = vbcast.lane.b32.xlu0 %v1240, 256
        %v1243 = vpop.permute.xlu0 %1242
        %v1244 = vlaneseq
        %v1245 = vshrl.u32 %v1244, 7
        %v1246 = vsub.s32 4, %v1245
        %v1247 = vrot.slane %v532, %v1246
        %1249 = vbcast.lane.b32.xlu0 %v1247, 256
        %v1250 = vpop.permute.xlu0 %1249
        %v1251 = vlaneseq
        %v1252 = vshrl.u32 %v1251, 7
        %v1253 = vsub.s32 5, %v1252
        %v1254 = vrot.slane %v532, %v1253
        %1256 = vbcast.lane.b32.xlu0 %v1254, 256
        %v1257 = vpop.permute.xlu0 %1256
        %v1258 = vlaneseq
        %v1259 = vshrl.u32 %v1258, 7
        %v1260 = vsub.s32 6, %v1259
        %v1261 = vrot.slane %v532, %v1260
        %1263 = vbcast.lane.b32.xlu0 %v1261, 256
        %v1264 = vpop.permute.xlu0 %1263
        %v1265 = vlaneseq
        %v1266 = vshrl.u32 %v1265, 7
        %v1267 = vsub.s32 7, %v1266
        %v1268 = vrot.slane %v532, %v1267
        %1270 = vbcast.lane.b32.xlu0 %v1268, 256
        %v1271 = vpop.permute.xlu0 %1270
        %v1273 = vlaneseq
        %v1274 = vshrl.u32 %v1273, 7
        %v1275 = vsub.s32 0, %v1274
        %v1276 = vrot.slane %v542, %v1275
        %v1277 = vlaneseq
        %v1278 = vshrl.u32 %v1277, 7
        %v1279 = vsub.s32 4, %v1278
        %v1280 = vrot.slane %v542, %v1279
        %v1283 = vlaneseq
        %v1284 = vshrl.u32 %v1283, 7
        %v1285 = vsub.s32 0, %v1284
        %v1286 = vrot.slane %v1276, %v1285
        %v1287 = vlaneseq
        %v1288 = vshrl.u32 %v1287, 7
        %v1289 = vsub.s32 0, %v1288
        %v1290 = vrot.slane %v1280, %v1289
        %v1291 = vmul.f32 %v1166, %v1286
        %v1292 = vmul.f32 %v1166, %v1290
        %v1293 = vmul.f32 %v1173, %v1286
        %v1294 = vmul.f32 %v1173, %v1290
        %v1295 = vmul.f32 %v1180, %v1286
        %v1296 = vmul.f32 %v1180, %v1290
        %v1297 = vmul.f32 %v1187, %v1286
        %v1298 = vmul.f32 %v1187, %v1290
        %v1299 = vmul.f32 %v1194, %v1286
        %v1300 = vmul.f32 %v1194, %v1290
        %v1301 = vmul.f32 %v1201, %v1286
        %v1302 = vmul.f32 %v1201, %v1290
        %v1303 = vmul.f32 %v1208, %v1286
        %v1304 = vmul.f32 %v1208, %v1290
        %v1305 = vmul.f32 %v1215, %v1286
        %v1306 = vmul.f32 %v1215, %v1290
        %v1307 = vmul.f32 %v1222, %v1286
        %v1308 = vmul.f32 %v1222, %v1290
        %v1309 = vmul.f32 %v1229, %v1286
        %v1310 = vmul.f32 %v1229, %v1290
        %v1311 = vmul.f32 %v1236, %v1286
        %v1312 = vmul.f32 %v1236, %v1290
        %v1313 = vmul.f32 %v1243, %v1286
        %v1314 = vmul.f32 %v1243, %v1290
        %v1315 = vmul.f32 %v1250, %v1286
        %v1316 = vmul.f32 %v1250, %v1290
        %v1317 = vmul.f32 %v1257, %v1286
        %v1318 = vmul.f32 %v1257, %v1290
        %v1319 = vmul.f32 %v1264, %v1286
        %v1320 = vmul.f32 %v1264, %v1290
        %v1321 = vmul.f32 %v1271, %v1286
        %v1322 = vmul.f32 %v1271, %v1290
        %v1323 = vadd.f32 %v1128, %v1291
        %v1324 = vadd.f32 %v1129, %v1292
        %v1325 = vadd.f32 %v1130, %v1293
        %v1326 = vadd.f32 %v1131, %v1294
        %v1327 = vadd.f32 %v1132, %v1295
        %v1328 = vadd.f32 %v1133, %v1296
        %v1329 = vadd.f32 %v1134, %v1297
        %v1330 = vadd.f32 %v1135, %v1298
        %v1331 = vadd.f32 %v1136, %v1299
        %v1332 = vadd.f32 %v1137, %v1300
        %v1333 = vadd.f32 %v1138, %v1301
        %v1334 = vadd.f32 %v1139, %v1302
        %v1335 = vadd.f32 %v1140, %v1303
        %v1336 = vadd.f32 %v1141, %v1304
        %v1337 = vadd.f32 %v1142, %v1305
        %v1338 = vadd.f32 %v1143, %v1306
        %v1339 = vadd.f32 %v1144, %v1307
        %v1340 = vadd.f32 %v1145, %v1308
        %v1341 = vadd.f32 %v1146, %v1309
        %v1342 = vadd.f32 %v1147, %v1310
        %v1343 = vadd.f32 %v1148, %v1311
        %v1344 = vadd.f32 %v1149, %v1312
        %v1345 = vadd.f32 %v1150, %v1313
        %v1346 = vadd.f32 %v1151, %v1314
        %v1347 = vadd.f32 %v1152, %v1315
        %v1348 = vadd.f32 %v1153, %v1316
        %v1349 = vadd.f32 %v1154, %v1317
        %v1350 = vadd.f32 %v1155, %v1318
        %v1351 = vadd.f32 %v1156, %v1319
        %v1352 = vadd.f32 %v1157, %v1320
        %v1353 = vadd.f32 %v1158, %v1321
        %v1354 = vadd.f32 %v1159, %v1322
        %v1355 = vlaneseq
        %v1356 = vshrl.u32 %v1355, 7
        %v1357 = vsub.s32 1, %v1356
        %v1358 = vrot.slane %v542, %v1357
        %v1359 = vlaneseq
        %v1360 = vshrl.u32 %v1359, 7
        %v1361 = vsub.s32 5, %v1360
        %v1362 = vrot.slane %v542, %v1361
        %v1365 = vlaneseq
        %v1366 = vshrl.u32 %v1365, 7
        %v1367 = vsub.s32 1, %v1366
        %v1368 = vrot.slane %v1358, %v1367
        %v1369 = vlaneseq
        %v1370 = vshrl.u32 %v1369, 7
        %v1371 = vsub.s32 1, %v1370
        %v1372 = vrot.slane %v1362, %v1371
        %v1373 = vadd.f32 %v1323, %v1368
        %v1374 = vadd.f32 %v1324, %v1372
        %v1375 = vadd.f32 %v1325, %v1368
        %v1376 = vadd.f32 %v1326, %v1372
        %v1377 = vadd.f32 %v1327, %v1368
        %v1378 = vadd.f32 %v1328, %v1372
        %v1379 = vadd.f32 %v1329, %v1368
        %v1380 = vadd.f32 %v1330, %v1372
        %v1381 = vadd.f32 %v1331, %v1368
        %v1382 = vadd.f32 %v1332, %v1372
        %v1383 = vadd.f32 %v1333, %v1368
        %v1384 = vadd.f32 %v1334, %v1372
        %v1385 = vadd.f32 %v1335, %v1368
        %v1386 = vadd.f32 %v1336, %v1372
        %v1387 = vadd.f32 %v1337, %v1368
        %v1388 = vadd.f32 %v1338, %v1372
        %v1389 = vadd.f32 %v1339, %v1368
        %v1390 = vadd.f32 %v1340, %v1372
        %v1391 = vadd.f32 %v1341, %v1368
        %v1392 = vadd.f32 %v1342, %v1372
        %v1393 = vadd.f32 %v1343, %v1368
        %v1394 = vadd.f32 %v1344, %v1372
        %v1395 = vadd.f32 %v1345, %v1368
        %v1396 = vadd.f32 %v1346, %v1372
        %v1397 = vadd.f32 %v1347, %v1368
        %v1398 = vadd.f32 %v1348, %v1372
        %v1399 = vadd.f32 %v1349, %v1368
        %v1400 = vadd.f32 %v1350, %v1372
        %v1401 = vadd.f32 %v1351, %v1368
        %v1402 = vadd.f32 %v1352, %v1372
        %v1403 = vadd.f32 %v1353, %v1368
        %v1404 = vadd.f32 %v1354, %v1372
        %vm1405 = vcmp.gt.f32.partialorder %v1373, 0.0
        %vm1406 = vcmp.gt.f32.partialorder %v1374, 0.0
        %vm1407 = vcmp.gt.f32.partialorder %v1375, 0.0
        %vm1408 = vcmp.gt.f32.partialorder %v1376, 0.0
        %vm1409 = vcmp.gt.f32.partialorder %v1377, 0.0
        %vm1410 = vcmp.gt.f32.partialorder %v1378, 0.0
        %vm1411 = vcmp.gt.f32.partialorder %v1379, 0.0
        %vm1412 = vcmp.gt.f32.partialorder %v1380, 0.0
        %vm1413 = vcmp.gt.f32.partialorder %v1381, 0.0
        %vm1414 = vcmp.gt.f32.partialorder %v1382, 0.0
        %vm1415 = vcmp.gt.f32.partialorder %v1383, 0.0
        %vm1416 = vcmp.gt.f32.partialorder %v1384, 0.0
        %vm1417 = vcmp.gt.f32.partialorder %v1385, 0.0
        %vm1418 = vcmp.gt.f32.partialorder %v1386, 0.0
        %vm1419 = vcmp.gt.f32.partialorder %v1387, 0.0
        %vm1420 = vcmp.gt.f32.partialorder %v1388, 0.0
        %vm1421 = vcmp.gt.f32.partialorder %v1389, 0.0
        %vm1422 = vcmp.gt.f32.partialorder %v1390, 0.0
        %vm1423 = vcmp.gt.f32.partialorder %v1391, 0.0
        %vm1424 = vcmp.gt.f32.partialorder %v1392, 0.0
        %vm1425 = vcmp.gt.f32.partialorder %v1393, 0.0
        %vm1426 = vcmp.gt.f32.partialorder %v1394, 0.0
        %vm1427 = vcmp.gt.f32.partialorder %v1395, 0.0
        %vm1428 = vcmp.gt.f32.partialorder %v1396, 0.0
        %vm1429 = vcmp.gt.f32.partialorder %v1397, 0.0
        %vm1430 = vcmp.gt.f32.partialorder %v1398, 0.0
        %vm1431 = vcmp.gt.f32.partialorder %v1399, 0.0
        %vm1432 = vcmp.gt.f32.partialorder %v1400, 0.0
        %vm1433 = vcmp.gt.f32.partialorder %v1401, 0.0
        %vm1434 = vcmp.gt.f32.partialorder %v1402, 0.0
        %vm1435 = vcmp.gt.f32.partialorder %v1403, 0.0
        %vm1436 = vcmp.gt.f32.partialorder %v1404, 0.0
        %v1437 = vmul.f32 %v1373, 0.01
        %v1438 = vmul.f32 %v1374, 0.01
        %v1439 = vmul.f32 %v1375, 0.01
        %v1440 = vmul.f32 %v1376, 0.01
        %v1441 = vmul.f32 %v1377, 0.01
        %v1442 = vmul.f32 %v1378, 0.01
        %v1443 = vmul.f32 %v1379, 0.01
        %v1444 = vmul.f32 %v1380, 0.01
        %v1445 = vmul.f32 %v1381, 0.01
        %v1446 = vmul.f32 %v1382, 0.01
        %v1447 = vmul.f32 %v1383, 0.01
        %v1448 = vmul.f32 %v1384, 0.01
        %v1449 = vmul.f32 %v1385, 0.01
        %v1450 = vmul.f32 %v1386, 0.01
        %v1451 = vmul.f32 %v1387, 0.01
        %v1452 = vmul.f32 %v1388, 0.01
        %v1453 = vmul.f32 %v1389, 0.01
        %v1454 = vmul.f32 %v1390, 0.01
        %v1455 = vmul.f32 %v1391, 0.01
        %v1456 = vmul.f32 %v1392, 0.01
        %v1457 = vmul.f32 %v1393, 0.01
        %v1458 = vmul.f32 %v1394, 0.01
        %v1459 = vmul.f32 %v1395, 0.01
        %v1460 = vmul.f32 %v1396, 0.01
        %v1461 = vmul.f32 %v1397, 0.01
        %v1462 = vmul.f32 %v1398, 0.01
        %v1463 = vmul.f32 %v1399, 0.01
        %v1464 = vmul.f32 %v1400, 0.01
        %v1465 = vmul.f32 %v1401, 0.01
        %v1466 = vmul.f32 %v1402, 0.01
        %v1467 = vmul.f32 %v1403, 0.01
        %v1468 = vmul.f32 %v1404, 0.01
        %v1469 = vsel %vm1405, %v1373, %v1437
        %v1470 = vsel %vm1406, %v1374, %v1438
        %v1471 = vsel %vm1407, %v1375, %v1439
        %v1472 = vsel %vm1408, %v1376, %v1440
        %v1473 = vsel %vm1409, %v1377, %v1441
        %v1474 = vsel %vm1410, %v1378, %v1442
        %v1475 = vsel %vm1411, %v1379, %v1443
        %v1476 = vsel %vm1412, %v1380, %v1444
        %v1477 = vsel %vm1413, %v1381, %v1445
        %v1478 = vsel %vm1414, %v1382, %v1446
        %v1479 = vsel %vm1415, %v1383, %v1447
        %v1480 = vsel %vm1416, %v1384, %v1448
        %v1481 = vsel %vm1417, %v1385, %v1449
        %v1482 = vsel %vm1418, %v1386, %v1450
        %v1483 = vsel %vm1419, %v1387, %v1451
        %v1484 = vsel %vm1420, %v1388, %v1452
        %v1485 = vsel %vm1421, %v1389, %v1453
        %v1486 = vsel %vm1422, %v1390, %v1454
        %v1487 = vsel %vm1423, %v1391, %v1455
        %v1488 = vsel %vm1424, %v1392, %v1456
        %v1489 = vsel %vm1425, %v1393, %v1457
        %v1490 = vsel %vm1426, %v1394, %v1458
        %v1491 = vsel %vm1427, %v1395, %v1459
        %v1492 = vsel %vm1428, %v1396, %v1460
        %v1493 = vsel %vm1429, %v1397, %v1461
        %v1494 = vsel %vm1430, %v1398, %v1462
        %v1495 = vsel %vm1431, %v1399, %v1463
        %v1496 = vsel %vm1432, %v1400, %v1464
        %v1497 = vsel %vm1433, %v1401, %v1465
        %v1498 = vsel %vm1434, %v1402, %v1466
        %v1499 = vsel %vm1435, %v1403, %v1467
        %v1500 = vsel %vm1436, %v1404, %v1468
        %v1501 = vpack.c.bf16 %v1471, %v1469
        %v1502 = vpack.c.bf16 %v1472, %v1470
        %v1503 = vpack.c.bf16 %v1475, %v1473
        %v1504 = vpack.c.bf16 %v1476, %v1474
        %v1505 = vpack.c.bf16 %v1479, %v1477
        %v1506 = vpack.c.bf16 %v1480, %v1478
        %v1507 = vpack.c.bf16 %v1483, %v1481
        %v1508 = vpack.c.bf16 %v1484, %v1482
        %v1509 = vpack.c.bf16 %v1487, %v1485
        %v1510 = vpack.c.bf16 %v1488, %v1486
        %v1511 = vpack.c.bf16 %v1491, %v1489
        %v1512 = vpack.c.bf16 %v1492, %v1490
        %v1513 = vpack.c.bf16 %v1495, %v1493
        %v1514 = vpack.c.bf16 %v1496, %v1494
        %v1515 = vpack.c.bf16 %v1499, %v1497
        %v1516 = vpack.c.bf16 %v1500, %v1498
        %s1517 = smul.u32 %s30, 64
        %s1518 = smul.addr %s1517, 4
        %s1519 = scalar_lea.vmem [#allocation7], %s1518
        %v1520 = vld [vmem:[%s1519] sm:$0xff]
        %v1521 = vld [vmem:[%s1519 + $0x8] sm:$0xff]
        %v1522 = vld [vmem:[%s1519 + $0x10] sm:$0xff]
        %v1523 = vld [vmem:[%s1519 + $0x18] sm:$0xff]
        %v1524 = vld [vmem:[%s1519 + $0x20] sm:$0xff]
        %v1525 = vld [vmem:[%s1519 + $0x28] sm:$0xff]
        %v1526 = vld [vmem:[%s1519 + $0x30] sm:$0xff]
        %v1527 = vld [vmem:[%s1519 + $0x38] sm:$0xff]
        %v1528 = vld [vmem:[%s1519 + $0x40] sm:$0xff]
        %v1529 = vld [vmem:[%s1519 + $0x48] sm:$0xff]
        %v1530 = vld [vmem:[%s1519 + $0x50] sm:$0xff]
        %v1531 = vld [vmem:[%s1519 + $0x58] sm:$0xff]
        %v1532 = vld [vmem:[%s1519 + $0x60] sm:$0xff]
        %v1533 = vld [vmem:[%s1519 + $0x68] sm:$0xff]
        %v1534 = vld [vmem:[%s1519 + $0x70] sm:$0xff]
        %v1535 = vld [vmem:[%s1519 + $0x78] sm:$0xff]
        %v1536 = vld [vmem:[%s1519 + $0x80] sm:$0xff]
        %v1537 = vld [vmem:[%s1519 + $0x88] sm:$0xff]
        %v1538 = vld [vmem:[%s1519 + $0x90] sm:$0xff]
        %v1539 = vld [vmem:[%s1519 + $0x98] sm:$0xff]
        %v1540 = vld [vmem:[%s1519 + $0xa0] sm:$0xff]
        %v1541 = vld [vmem:[%s1519 + $0xa8] sm:$0xff]
        %v1542 = vld [vmem:[%s1519 + $0xb0] sm:$0xff]
        %v1543 = vld [vmem:[%s1519 + $0xb8] sm:$0xff]
        %v1544 = vld [vmem:[%s1519 + $0xc0] sm:$0xff]
        %v1545 = vld [vmem:[%s1519 + $0xc8] sm:$0xff]
        %v1546 = vld [vmem:[%s1519 + $0xd0] sm:$0xff]
        %v1547 = vld [vmem:[%s1519 + $0xd8] sm:$0xff]
        %v1548 = vld [vmem:[%s1519 + $0xe0] sm:$0xff]
        %v1549 = vld [vmem:[%s1519 + $0xe8] sm:$0xff]
        %v1550 = vld [vmem:[%s1519 + $0xf0] sm:$0xff]
        %v1551 = vld [vmem:[%s1519 + $0xf8] sm:$0xff]
        %v1552 = vlaneseq
        %v1553 = vshrl.u32 %v1552, 7
        %v1554 = vsub.s32 2, %v1553
        %v1555 = vrot.slane %v542, %v1554
        %v1556 = vlaneseq
        %v1557 = vshrl.u32 %v1556, 7
        %v1558 = vsub.s32 6, %v1557
        %v1559 = vrot.slane %v542, %v1558
        %v1562 = vlaneseq
        %v1563 = vshrl.u32 %v1562, 7
        %v1564 = vsub.s32 2, %v1563
        %v1565 = vrot.slane %v1555, %v1564
        %v1566 = vlaneseq
        %v1567 = vshrl.u32 %v1566, 7
        %v1568 = vsub.s32 2, %v1567
        %v1569 = vrot.slane %v1559, %v1568
        %v1602 = vunpack.c.l.b16 %v1520
        %v1603 = vunpack.c.h.b16 %v1520
        %v1604 = vunpack.c.l.b16 %v1521
        %v1605 = vunpack.c.h.b16 %v1521
        %v1606 = vunpack.c.l.b16 %v1522
        %v1607 = vunpack.c.h.b16 %v1522
        %v1608 = vunpack.c.l.b16 %v1523
        %v1609 = vunpack.c.h.b16 %v1523
        %v1610 = vunpack.c.l.b16 %v1524
        %v1611 = vunpack.c.h.b16 %v1524
        %v1612 = vunpack.c.l.b16 %v1525
        %v1613 = vunpack.c.h.b16 %v1525
        %v1614 = vunpack.c.l.b16 %v1526
        %v1615 = vunpack.c.h.b16 %v1526
        %v1616 = vunpack.c.l.b16 %v1527
        %v1617 = vunpack.c.h.b16 %v1527
        %v1618 = vunpack.c.l.b16 %v1528
        %v1619 = vunpack.c.h.b16 %v1528
        %v1620 = vunpack.c.l.b16 %v1529
        %v1621 = vunpack.c.h.b16 %v1529
        %v1622 = vunpack.c.l.b16 %v1530
        %v1623 = vunpack.c.h.b16 %v1530
        %v1624 = vunpack.c.l.b16 %v1531
        %v1625 = vunpack.c.h.b16 %v1531
        %v1626 = vunpack.c.l.b16 %v1532
        %v1627 = vunpack.c.h.b16 %v1532
        %v1628 = vunpack.c.l.b16 %v1533
        %v1629 = vunpack.c.h.b16 %v1533
        %v1630 = vunpack.c.l.b16 %v1534
        %v1631 = vunpack.c.h.b16 %v1534
        %v1632 = vunpack.c.l.b16 %v1535
        %v1633 = vunpack.c.h.b16 %v1535
        %v1634 = vunpack.c.l.b16 %v1536
        %v1635 = vunpack.c.h.b16 %v1536
        %v1636 = vunpack.c.l.b16 %v1537
        %v1637 = vunpack.c.h.b16 %v1537
        %v1638 = vunpack.c.l.b16 %v1538
        %v1639 = vunpack.c.h.b16 %v1538
        %v1640 = vunpack.c.l.b16 %v1539
        %v1641 = vunpack.c.h.b16 %v1539
        %v1642 = vunpack.c.l.b16 %v1540
        %v1643 = vunpack.c.h.b16 %v1540
        %v1644 = vunpack.c.l.b16 %v1541
        %v1645 = vunpack.c.h.b16 %v1541
        %v1646 = vunpack.c.l.b16 %v1542
        %v1647 = vunpack.c.h.b16 %v1542
        %v1648 = vunpack.c.l.b16 %v1543
        %v1649 = vunpack.c.h.b16 %v1543
        %v1650 = vunpack.c.l.b16 %v1544
        %v1651 = vunpack.c.h.b16 %v1544
        %v1652 = vunpack.c.l.b16 %v1545
        %v1653 = vunpack.c.h.b16 %v1545
        %v1654 = vunpack.c.l.b16 %v1546
        %v1655 = vunpack.c.h.b16 %v1546
        %v1656 = vunpack.c.l.b16 %v1547
        %v1657 = vunpack.c.h.b16 %v1547
        %v1658 = vunpack.c.l.b16 %v1548
        %v1659 = vunpack.c.h.b16 %v1548
        %v1660 = vunpack.c.l.b16 %v1549
        %v1661 = vunpack.c.h.b16 %v1549
        %v1662 = vunpack.c.l.b16 %v1550
        %v1663 = vunpack.c.h.b16 %v1550
        %v1664 = vunpack.c.l.b16 %v1551
        %v1665 = vunpack.c.h.b16 %v1551
        %v1666 = vpack.c.b16 %v1604, %v1602
        %v1667 = vpack.c.b16 %v1605, %v1603
        %v1668 = vpack.c.b16 %v1608, %v1606
        %v1669 = vpack.c.b16 %v1609, %v1607
        %v1670 = vpack.c.b16 %v1612, %v1610
        %v1671 = vpack.c.b16 %v1613, %v1611
        %v1672 = vpack.c.b16 %v1616, %v1614
        %v1673 = vpack.c.b16 %v1617, %v1615
        %v1674 = vpack.c.b16 %v1620, %v1618
        %v1675 = vpack.c.b16 %v1621, %v1619
        %v1676 = vpack.c.b16 %v1624, %v1622
        %v1677 = vpack.c.b16 %v1625, %v1623
        %v1678 = vpack.c.b16 %v1628, %v1626
        %v1679 = vpack.c.b16 %v1629, %v1627
        %v1680 = vpack.c.b16 %v1632, %v1630
        %v1681 = vpack.c.b16 %v1633, %v1631
        %v1682 = vpack.c.b16 %v1636, %v1634
        %v1683 = vpack.c.b16 %v1637, %v1635
        %v1684 = vpack.c.b16 %v1640, %v1638
        %v1685 = vpack.c.b16 %v1641, %v1639
        %v1686 = vpack.c.b16 %v1644, %v1642
        %v1687 = vpack.c.b16 %v1645, %v1643
        %v1688 = vpack.c.b16 %v1648, %v1646
        %v1689 = vpack.c.b16 %v1649, %v1647
        %v1690 = vpack.c.b16 %v1652, %v1650
        %v1691 = vpack.c.b16 %v1653, %v1651
        %v1692 = vpack.c.b16 %v1656, %v1654
        %v1693 = vpack.c.b16 %v1657, %v1655
        %v1694 = vpack.c.b16 %v1660, %v1658
        %v1695 = vpack.c.b16 %v1661, %v1659
        %v1696 = vpack.c.b16 %v1664, %v1662
        %v1697 = vpack.c.b16 %v1665, %v1663
        %1730 = vmatprep.subr.bf16.mxu0 %v1667
        %1731 = vmatpush1.bf16.msra.mxu0 %v1666
        %1732 = vmatprep.subr.bf16.mxu0 %v1669
        %1733 = vmatpush1.bf16.msra.mxu0 %v1668
        %1734 = vmatprep.subr.bf16.mxu0 %v1671
        %1735 = vmatpush1.bf16.msra.mxu0 %v1670
        %1736 = vmatprep.subr.bf16.mxu0 %v1673
        %1737 = vmatpush1.bf16.msra.mxu0 %v1672
        %1738 = vmatprep.subr.bf16.mxu0 %v1675
        %1739 = vmatpush1.bf16.msra.mxu0 %v1674
        %1740 = vmatprep.subr.bf16.mxu0 %v1677
        %1741 = vmatpush1.bf16.msra.mxu0 %v1676
        %1742 = vmatprep.subr.bf16.mxu0 %v1679
        %1743 = vmatpush1.bf16.msra.mxu0 %v1678
        %1744 = vmatprep.subr.bf16.mxu0 %v1681
        %1745 = vmatpush1.bf16.msra.mxu0 %v1680
        %1746 = vmatprep.subr.bf16.mxu0 %v1683
        %1747 = vmatpush1.bf16.msra.mxu0 %v1682
        %1748 = vmatprep.subr.bf16.mxu0 %v1685
        %1749 = vmatpush1.bf16.msra.mxu0 %v1684
        %1750 = vmatprep.subr.bf16.mxu0 %v1687
        %1751 = vmatpush1.bf16.msra.mxu0 %v1686
        %1752 = vmatprep.subr.bf16.mxu0 %v1689
        %1753 = vmatpush1.bf16.msra.mxu0 %v1688
        %1754 = vmatprep.subr.bf16.mxu0 %v1691
        %1755 = vmatpush1.bf16.msra.mxu0 %v1690
        %1756 = vmatprep.subr.bf16.mxu0 %v1693
        %1757 = vmatpush1.bf16.msra.mxu0 %v1692
        %1758 = vmatprep.subr.bf16.mxu0 %v1695
        %1759 = vmatpush1.bf16.msra.mxu0 %v1694
        %1760 = vmatprep.subr.bf16.mxu0 %v1697
        %1761 = vmatpush1.bf16.msra.mxu0 %v1696
        %1762 = vmatprep.mubr.bf16.mxu0 %v1502
        %1763 = vmatmul.mubr.bf16.gmra.mrb[0].mxu0 %v1501
        %v1764 = vpop.f32.mrb[0].mxu0
        %v1765 = vadd.f32 %v1565, %v1764
        %v1766 = vpop.f32.mrb[0].mxu0
        %v1767 = vadd.f32 %v1569, %v1766
        %v1768 = vpop.f32.mrb[0].mxu0
        %v1769 = vadd.f32 %v1565, %v1768
        %v1770 = vpop.f32.mrb[0].mxu0
        %v1771 = vadd.f32 %v1569, %v1770
        %1772 = vmatprep.mubr.bf16.mxu0 %v1504
        %1773 = vmatmul.mubr.bf16.gmra.mrb[0].mxu0 %v1503
        %v1774 = vpop.f32.mrb[0].mxu0
        %v1775 = vadd.f32 %v1565, %v1774
        %v1776 = vpop.f32.mrb[0].mxu0
        %v1777 = vadd.f32 %v1569, %v1776
        %v1778 = vpop.f32.mrb[0].mxu0
        %v1779 = vadd.f32 %v1565, %v1778
        %v1780 = vpop.f32.mrb[0].mxu0
        %v1781 = vadd.f32 %v1569, %v1780
        %1782 = vmatprep.mubr.bf16.mxu0 %v1506
        %1783 = vmatmul.mubr.bf16.gmra.mrb[0].mxu0 %v1505
        %v1784 = vpop.f32.mrb[0].mxu0
        %v1785 = vadd.f32 %v1565, %v1784
        %v1786 = vpop.f32.mrb[0].mxu0
        %v1787 = vadd.f32 %v1569, %v1786
        %v1788 = vpop.f32.mrb[0].mxu0
        %v1789 = vadd.f32 %v1565, %v1788
        %v1790 = vpop.f32.mrb[0].mxu0
        %v1791 = vadd.f32 %v1569, %v1790
        %1792 = vmatprep.mubr.bf16.mxu0 %v1508
        %1793 = vmatmul.mubr.bf16.gmra.mrb[0].mxu0 %v1507
        %v1794 = vpop.f32.mrb[0].mxu0
        %v1795 = vadd.f32 %v1565, %v1794
        %v1796 = vpop.f32.mrb[0].mxu0
        %v1797 = vadd.f32 %v1569, %v1796
        %v1798 = vpop.f32.mrb[0].mxu0
        %v1799 = vadd.f32 %v1565, %v1798
        %v1800 = vpop.f32.mrb[0].mxu0
        %v1801 = vadd.f32 %v1569, %v1800
        %1802 = vmatprep.mubr.bf16.mxu0 %v1510
        %1803 = vmatmul.mubr.bf16.gmra.mrb[0].mxu0 %v1509
        %v1804 = vpop.f32.mrb[0].mxu0
        %v1805 = vadd.f32 %v1565, %v1804
        %v1806 = vpop.f32.mrb[0].mxu0
        %v1807 = vadd.f32 %v1569, %v1806
        %v1808 = vpop.f32.mrb[0].mxu0
        %v1809 = vadd.f32 %v1565, %v1808
        %v1810 = vpop.f32.mrb[0].mxu0
        %v1811 = vadd.f32 %v1569, %v1810
        %1812 = vmatprep.mubr.bf16.mxu0 %v1512
        %1813 = vmatmul.mubr.bf16.gmra.mrb[0].mxu0 %v1511
        %v1814 = vpop.f32.mrb[0].mxu0
        %v1815 = vadd.f32 %v1565, %v1814
        %v1816 = vpop.f32.mrb[0].mxu0
        %v1817 = vadd.f32 %v1569, %v1816
        %v1818 = vpop.f32.mrb[0].mxu0
        %v1819 = vadd.f32 %v1565, %v1818
        %v1820 = vpop.f32.mrb[0].mxu0
        %v1821 = vadd.f32 %v1569, %v1820
        %1822 = vmatprep.mubr.bf16.mxu0 %v1514
        %1823 = vmatmul.mubr.bf16.gmra.mrb[0].mxu0 %v1513
        %v1824 = vpop.f32.mrb[0].mxu0
        %v1825 = vadd.f32 %v1565, %v1824
        %v1826 = vpop.f32.mrb[0].mxu0
        %v1827 = vadd.f32 %v1569, %v1826
        %v1828 = vpop.f32.mrb[0].mxu0
        %v1829 = vadd.f32 %v1565, %v1828
        %v1830 = vpop.f32.mrb[0].mxu0
        %v1831 = vadd.f32 %v1569, %v1830
        %1832 = vmatprep.mubr.bf16.mxu0 %v1516
        %1833 = vmatmul.mubr.bf16.gmra.mrb[0].mxu0 %v1515
        %v1834 = vpop.f32.mrb[0].mxu0
        %v1835 = vadd.f32 %v1565, %v1834
        %v1836 = vpop.f32.mrb[0].mxu0
        %v1837 = vadd.f32 %v1569, %v1836
        %v1838 = vpop.f32.mrb[0].mxu0
        %v1839 = vadd.f32 %v1565, %v1838
        %v1840 = vpop.f32.mrb[0].mxu0
        %v1841 = vadd.f32 %v1569, %v1840
        %1842 = vdwg.mxu0
        %vm1843 = vcmp.gt.f32.partialorder %v1765, 0.0
        %vm1844 = vcmp.gt.f32.partialorder %v1767, 0.0
        %vm1845 = vcmp.gt.f32.partialorder %v1769, 0.0
        %vm1846 = vcmp.gt.f32.partialorder %v1771, 0.0
        %vm1847 = vcmp.gt.f32.partialorder %v1775, 0.0
        %vm1848 = vcmp.gt.f32.partialorder %v1777, 0.0
        %vm1849 = vcmp.gt.f32.partialorder %v1779, 0.0
        %vm1850 = vcmp.gt.f32.partialorder %v1781, 0.0
        %vm1851 = vcmp.gt.f32.partialorder %v1785, 0.0
        %vm1852 = vcmp.gt.f32.partialorder %v1787, 0.0
        %vm1853 = vcmp.gt.f32.partialorder %v1789, 0.0
        %vm1854 = vcmp.gt.f32.partialorder %v1791, 0.0
        %vm1855 = vcmp.gt.f32.partialorder %v1795, 0.0
        %vm1856 = vcmp.gt.f32.partialorder %v1797, 0.0
        %vm1857 = vcmp.gt.f32.partialorder %v1799, 0.0
        %vm1858 = vcmp.gt.f32.partialorder %v1801, 0.0
        %vm1859 = vcmp.gt.f32.partialorder %v1805, 0.0
        %vm1860 = vcmp.gt.f32.partialorder %v1807, 0.0
        %vm1861 = vcmp.gt.f32.partialorder %v1809, 0.0
        %vm1862 = vcmp.gt.f32.partialorder %v1811, 0.0
        %vm1863 = vcmp.gt.f32.partialorder %v1815, 0.0
        %vm1864 = vcmp.gt.f32.partialorder %v1817, 0.0
        %vm1865 = vcmp.gt.f32.partialorder %v1819, 0.0
        %vm1866 = vcmp.gt.f32.partialorder %v1821, 0.0
        %vm1867 = vcmp.gt.f32.partialorder %v1825, 0.0
        %vm1868 = vcmp.gt.f32.partialorder %v1827, 0.0
        %vm1869 = vcmp.gt.f32.partialorder %v1829, 0.0
        %vm1870 = vcmp.gt.f32.partialorder %v1831, 0.0
        %vm1871 = vcmp.gt.f32.partialorder %v1835, 0.0
        %vm1872 = vcmp.gt.f32.partialorder %v1837, 0.0
        %vm1873 = vcmp.gt.f32.partialorder %v1839, 0.0
        %vm1874 = vcmp.gt.f32.partialorder %v1841, 0.0
        %v1875 = vmul.f32 %v1765, 0.01
        %v1876 = vmul.f32 %v1767, 0.01
        %v1877 = vmul.f32 %v1769, 0.01
        %v1878 = vmul.f32 %v1771, 0.01
        %v1879 = vmul.f32 %v1775, 0.01
        %v1880 = vmul.f32 %v1777, 0.01
        %v1881 = vmul.f32 %v1779, 0.01
        %v1882 = vmul.f32 %v1781, 0.01
        %v1883 = vmul.f32 %v1785, 0.01
        %v1884 = vmul.f32 %v1787, 0.01
        %v1885 = vmul.f32 %v1789, 0.01
        %v1886 = vmul.f32 %v1791, 0.01
        %v1887 = vmul.f32 %v1795, 0.01
        %v1888 = vmul.f32 %v1797, 0.01
        %v1889 = vmul.f32 %v1799, 0.01
        %v1890 = vmul.f32 %v1801, 0.01
        %v1891 = vmul.f32 %v1805, 0.01
        %v1892 = vmul.f32 %v1807, 0.01
        %v1893 = vmul.f32 %v1809, 0.01
        %v1894 = vmul.f32 %v1811, 0.01
        %v1895 = vmul.f32 %v1815, 0.01
        %v1896 = vmul.f32 %v1817, 0.01
        %v1897 = vmul.f32 %v1819, 0.01
        %v1898 = vmul.f32 %v1821, 0.01
        %v1899 = vmul.f32 %v1825, 0.01
        %v1900 = vmul.f32 %v1827, 0.01
        %v1901 = vmul.f32 %v1829, 0.01
        %v1902 = vmul.f32 %v1831, 0.01
        %v1903 = vmul.f32 %v1835, 0.01
        %v1904 = vmul.f32 %v1837, 0.01
        %v1905 = vmul.f32 %v1839, 0.01
        %v1906 = vmul.f32 %v1841, 0.01
        %v1907 = vsel %vm1843, %v1765, %v1875
        %v1908 = vsel %vm1844, %v1767, %v1876
        %v1909 = vsel %vm1845, %v1769, %v1877
        %v1910 = vsel %vm1846, %v1771, %v1878
        %v1911 = vsel %vm1847, %v1775, %v1879
        %v1912 = vsel %vm1848, %v1777, %v1880
        %v1913 = vsel %vm1849, %v1779, %v1881
        %v1914 = vsel %vm1850, %v1781, %v1882
        %v1915 = vsel %vm1851, %v1785, %v1883
        %v1916 = vsel %vm1852, %v1787, %v1884
        %v1917 = vsel %vm1853, %v1789, %v1885
        %v1918 = vsel %vm1854, %v1791, %v1886
        %v1919 = vsel %vm1855, %v1795, %v1887
        %v1920 = vsel %vm1856, %v1797, %v1888
        %v1921 = vsel %vm1857, %v1799, %v1889
        %v1922 = vsel %vm1858, %v1801, %v1890
        %v1923 = vsel %vm1859, %v1805, %v1891
        %v1924 = vsel %vm1860, %v1807, %v1892
        %v1925 = vsel %vm1861, %v1809, %v1893
        %v1926 = vsel %vm1862, %v1811, %v1894
        %v1927 = vsel %vm1863, %v1815, %v1895
        %v1928 = vsel %vm1864, %v1817, %v1896
        %v1929 = vsel %vm1865, %v1819, %v1897
        %v1930 = vsel %vm1866, %v1821, %v1898
        %v1931 = vsel %vm1867, %v1825, %v1899
        %v1932 = vsel %vm1868, %v1827, %v1900
        %v1933 = vsel %vm1869, %v1829, %v1901
        %v1934 = vsel %vm1870, %v1831, %v1902
        %v1935 = vsel %vm1871, %v1835, %v1903
        %v1936 = vsel %vm1872, %v1837, %v1904
        %v1937 = vsel %vm1873, %v1839, %v1905
        %v1938 = vsel %vm1874, %v1841, %v1906
        %v1939 = vpack.c.bf16 %v1909, %v1907
        %v1940 = vpack.c.bf16 %v1910, %v1908
        %v1941 = vpack.c.bf16 %v1913, %v1911
        %v1942 = vpack.c.bf16 %v1914, %v1912
        %v1943 = vpack.c.bf16 %v1917, %v1915
        %v1944 = vpack.c.bf16 %v1918, %v1916
        %v1945 = vpack.c.bf16 %v1921, %v1919
        %v1946 = vpack.c.bf16 %v1922, %v1920
        %v1947 = vpack.c.bf16 %v1925, %v1923
        %v1948 = vpack.c.bf16 %v1926, %v1924
        %v1949 = vpack.c.bf16 %v1929, %v1927
        %v1950 = vpack.c.bf16 %v1930, %v1928
        %v1951 = vpack.c.bf16 %v1933, %v1931
        %v1952 = vpack.c.bf16 %v1934, %v1932
        %v1953 = vpack.c.bf16 %v1937, %v1935
        %v1954 = vpack.c.bf16 %v1938, %v1936
        %s1955 = smul.addr %s1517, 4
        %s1956 = scalar_lea.vmem [#allocation9], %s1955
        %v1957 = vld [vmem:[%s1956] sm:$0xff]
        %v1958 = vld [vmem:[%s1956 + $0x8] sm:$0xff]
        %v1959 = vld [vmem:[%s1956 + $0x10] sm:$0xff]
        %v1960 = vld [vmem:[%s1956 + $0x18] sm:$0xff]
        %v1961 = vld [vmem:[%s1956 + $0x20] sm:$0xff]
        %v1962 = vld [vmem:[%s1956 + $0x28] sm:$0xff]
        %v1963 = vld [vmem:[%s1956 + $0x30] sm:$0xff]
        %v1964 = vld [vmem:[%s1956 + $0x38] sm:$0xff]
        %v1965 = vld [vmem:[%s1956 + $0x40] sm:$0xff]
        %v1966 = vld [vmem:[%s1956 + $0x48] sm:$0xff]
        %v1967 = vld [vmem:[%s1956 + $0x50] sm:$0xff]
        %v1968 = vld [vmem:[%s1956 + $0x58] sm:$0xff]
        %v1969 = vld [vmem:[%s1956 + $0x60] sm:$0xff]
        %v1970 = vld [vmem:[%s1956 + $0x68] sm:$0xff]
        %v1971 = vld [vmem:[%s1956 + $0x70] sm:$0xff]
        %v1972 = vld [vmem:[%s1956 + $0x78] sm:$0xff]
        %v1973 = vld [vmem:[%s1956 + $0x80] sm:$0xff]
        %v1974 = vld [vmem:[%s1956 + $0x88] sm:$0xff]
        %v1975 = vld [vmem:[%s1956 + $0x90] sm:$0xff]
        %v1976 = vld [vmem:[%s1956 + $0x98] sm:$0xff]
        %v1977 = vld [vmem:[%s1956 + $0xa0] sm:$0xff]
        %v1978 = vld [vmem:[%s1956 + $0xa8] sm:$0xff]
        %v1979 = vld [vmem:[%s1956 + $0xb0] sm:$0xff]
        %v1980 = vld [vmem:[%s1956 + $0xb8] sm:$0xff]
        %v1981 = vld [vmem:[%s1956 + $0xc0] sm:$0xff]
        %v1982 = vld [vmem:[%s1956 + $0xc8] sm:$0xff]
        %v1983 = vld [vmem:[%s1956 + $0xd0] sm:$0xff]
        %v1984 = vld [vmem:[%s1956 + $0xd8] sm:$0xff]
        %v1985 = vld [vmem:[%s1956 + $0xe0] sm:$0xff]
        %v1986 = vld [vmem:[%s1956 + $0xe8] sm:$0xff]
        %v1987 = vld [vmem:[%s1956 + $0xf0] sm:$0xff]
        %v1988 = vld [vmem:[%s1956 + $0xf8] sm:$0xff]
        %v1989 = vlaneseq
        %v1990 = vshrl.u32 %v1989, 7
        %v1991 = vsub.s32 3, %v1990
        %v1992 = vrot.slane %v542, %v1991
        %v1993 = vlaneseq
        %v1994 = vshrl.u32 %v1993, 7
        %v1995 = vsub.s32 7, %v1994
        %v1996 = vrot.slane %v542, %v1995
        %v1999 = vlaneseq
        %v2000 = vshrl.u32 %v1999, 7
        %v2001 = vsub.s32 3, %v2000
        %v2002 = vrot.slane %v1992, %v2001
        %v2003 = vlaneseq
        %v2004 = vshrl.u32 %v2003, 7
        %v2005 = vsub.s32 3, %v2004
        %v2006 = vrot.slane %v1996, %v2005
        %v2039 = vunpack.c.l.b16 %v1957
        %v2040 = vunpack.c.h.b16 %v1957
        %v2041 = vunpack.c.l.b16 %v1958
        %v2042 = vunpack.c.h.b16 %v1958
        %v2043 = vunpack.c.l.b16 %v1959
        %v2044 = vunpack.c.h.b16 %v1959
        %v2045 = vunpack.c.l.b16 %v1960
        %v2046 = vunpack.c.h.b16 %v1960
        %v2047 = vunpack.c.l.b16 %v1961
        %v2048 = vunpack.c.h.b16 %v1961
        %v2049 = vunpack.c.l.b16 %v1962
        %v2050 = vunpack.c.h.b16 %v1962
        %v2051 = vunpack.c.l.b16 %v1963
        %v2052 = vunpack.c.h.b16 %v1963
        %v2053 = vunpack.c.l.b16 %v1964
        %v2054 = vunpack.c.h.b16 %v1964
        %v2055 = vunpack.c.l.b16 %v1965
        %v2056 = vunpack.c.h.b16 %v1965
        %v2057 = vunpack.c.l.b16 %v1966
        %v2058 = vunpack.c.h.b16 %v1966
        %v2059 = vunpack.c.l.b16 %v1967
        %v2060 = vunpack.c.h.b16 %v1967
        %v2061 = vunpack.c.l.b16 %v1968
        %v2062 = vunpack.c.h.b16 %v1968
        %v2063 = vunpack.c.l.b16 %v1969
        %v2064 = vunpack.c.h.b16 %v1969
        %v2065 = vunpack.c.l.b16 %v1970
        %v2066 = vunpack.c.h.b16 %v1970
        %v2067 = vunpack.c.l.b16 %v1971
        %v2068 = vunpack.c.h.b16 %v1971
        %v2069 = vunpack.c.l.b16 %v1972
        %v2070 = vunpack.c.h.b16 %v1972
        %v2071 = vunpack.c.l.b16 %v1973
        %v2072 = vunpack.c.h.b16 %v1973
        %v2073 = vunpack.c.l.b16 %v1974
        %v2074 = vunpack.c.h.b16 %v1974
        %v2075 = vunpack.c.l.b16 %v1975
        %v2076 = vunpack.c.h.b16 %v1975
        %v2077 = vunpack.c.l.b16 %v1976
        %v2078 = vunpack.c.h.b16 %v1976
        %v2079 = vunpack.c.l.b16 %v1977
        %v2080 = vunpack.c.h.b16 %v1977
        %v2081 = vunpack.c.l.b16 %v1978
        %v2082 = vunpack.c.h.b16 %v1978
        %v2083 = vunpack.c.l.b16 %v1979
        %v2084 = vunpack.c.h.b16 %v1979
        %v2085 = vunpack.c.l.b16 %v1980
        %v2086 = vunpack.c.h.b16 %v1980
        %v2087 = vunpack.c.l.b16 %v1981
        %v2088 = vunpack.c.h.b16 %v1981
        %v2089 = vunpack.c.l.b16 %v1982
        %v2090 = vunpack.c.h.b16 %v1982
        %v2091 = vunpack.c.l.b16 %v1983
        %v2092 = vunpack.c.h.b16 %v1983
        %v2093 = vunpack.c.l.b16 %v1984
        %v2094 = vunpack.c.h.b16 %v1984
        %v2095 = vunpack.c.l.b16 %v1985
        %v2096 = vunpack.c.h.b16 %v1985
        %v2097 = vunpack.c.l.b16 %v1986
        %v2098 = vunpack.c.h.b16 %v1986
        %v2099 = vunpack.c.l.b16 %v1987
        %v2100 = vunpack.c.h.b16 %v1987
        %v2101 = vunpack.c.l.b16 %v1988
        %v2102 = vunpack.c.h.b16 %v1988
        %v2103 = vpack.c.b16 %v2041, %v2039
        %v2104 = vpack.c.b16 %v2042, %v2040
        %v2105 = vpack.c.b16 %v2045, %v2043
        %v2106 = vpack.c.b16 %v2046, %v2044
        %v2107 = vpack.c.b16 %v2049, %v2047
        %v2108 = vpack.c.b16 %v2050, %v2048
        %v2109 = vpack.c.b16 %v2053, %v2051
        %v2110 = vpack.c.b16 %v2054, %v2052
        %v2111 = vpack.c.b16 %v2057, %v2055
        %v2112 = vpack.c.b16 %v2058, %v2056
        %v2113 = vpack.c.b16 %v2061, %v2059
        %v2114 = vpack.c.b16 %v2062, %v2060
        %v2115 = vpack.c.b16 %v2065, %v2063
        %v2116 = vpack.c.b16 %v2066, %v2064
        %v2117 = vpack.c.b16 %v2069, %v2067
        %v2118 = vpack.c.b16 %v2070, %v2068
        %v2119 = vpack.c.b16 %v2073, %v2071
        %v2120 = vpack.c.b16 %v2074, %v2072
        %v2121 = vpack.c.b16 %v2077, %v2075
        %v2122 = vpack.c.b16 %v2078, %v2076
        %v2123 = vpack.c.b16 %v2081, %v2079
        %v2124 = vpack.c.b16 %v2082, %v2080
        %v2125 = vpack.c.b16 %v2085, %v2083
        %v2126 = vpack.c.b16 %v2086, %v2084
        %v2127 = vpack.c.b16 %v2089, %v2087
        %v2128 = vpack.c.b16 %v2090, %v2088
        %v2129 = vpack.c.b16 %v2093, %v2091
        %v2130 = vpack.c.b16 %v2094, %v2092
        %v2131 = vpack.c.b16 %v2097, %v2095
        %v2132 = vpack.c.b16 %v2098, %v2096
        %v2133 = vpack.c.b16 %v2101, %v2099
        %v2134 = vpack.c.b16 %v2102, %v2100
        %2167 = vmatprep.subr.bf16.mxu0 %v2104
        %2168 = vmatpush1.bf16.msra.mxu0 %v2103
        %2169 = vmatprep.subr.bf16.mxu0 %v2106
        %2170 = vmatpush1.bf16.msra.mxu0 %v2105
        %2171 = vmatprep.subr.bf16.mxu0 %v2108
        %2172 = vmatpush1.bf16.msra.mxu0 %v2107
        %2173 = vmatprep.subr.bf16.mxu0 %v2110
        %2174 = vmatpush1.bf16.msra.mxu0 %v2109
        %2175 = vmatprep.subr.bf16.mxu0 %v2112
        %2176 = vmatpush1.bf16.msra.mxu0 %v2111
        %2177 = vmatprep.subr.bf16.mxu0 %v2114
        %2178 = vmatpush1.bf16.msra.mxu0 %v2113
        %2179 = vmatprep.subr.bf16.mxu0 %v2116
        %2180 = vmatpush1.bf16.msra.mxu0 %v2115
        %2181 = vmatprep.subr.bf16.mxu0 %v2118
        %2182 = vmatpush1.bf16.msra.mxu0 %v2117
        %2183 = vmatprep.subr.bf16.mxu0 %v2120
        %2184 = vmatpush1.bf16.msra.mxu0 %v2119
        %2185 = vmatprep.subr.bf16.mxu0 %v2122
        %2186 = vmatpush1.bf16.msra.mxu0 %v2121
        %2187 = vmatprep.subr.bf16.mxu0 %v2124
        %2188 = vmatpush1.bf16.msra.mxu0 %v2123
        %2189 = vmatprep.subr.bf16.mxu0 %v2126
        %2190 = vmatpush1.bf16.msra.mxu0 %v2125
        %2191 = vmatprep.subr.bf16.mxu0 %v2128
        %2192 = vmatpush1.bf16.msra.mxu0 %v2127
        %2193 = vmatprep.subr.bf16.mxu0 %v2130
        %2194 = vmatpush1.bf16.msra.mxu0 %v2129
        %2195 = vmatprep.subr.bf16.mxu0 %v2132
        %2196 = vmatpush1.bf16.msra.mxu0 %v2131
        %2197 = vmatprep.subr.bf16.mxu0 %v2134
        %2198 = vmatpush1.bf16.msra.mxu0 %v2133
        %2199 = vmatprep.mubr.bf16.mxu0 %v1940
        %2200 = vmatmul.mubr.bf16.gmra.mrb[0].mxu0 %v1939
        %v2201 = vpop.f32.mrb[0].mxu0
        %v2202 = vadd.f32 %v2002, %v2201
        %v2203 = vpop.f32.mrb[0].mxu0
        %v2204 = vadd.f32 %v2006, %v2203
        %v2205 = vpop.f32.mrb[0].mxu0
        %v2206 = vadd.f32 %v2002, %v2205
        %v2207 = vpop.f32.mrb[0].mxu0
        %v2208 = vadd.f32 %v2006, %v2207
        %2209 = vmatprep.mubr.bf16.mxu0 %v1942
        %2210 = vmatmul.mubr.bf16.gmra.mrb[0].mxu0 %v1941
        %v2211 = vpop.f32.mrb[0].mxu0
        %v2212 = vadd.f32 %v2002, %v2211
        %v2213 = vpop.f32.mrb[0].mxu0
        %v2214 = vadd.f32 %v2006, %v2213
        %v2215 = vpop.f32.mrb[0].mxu0
        %v2216 = vadd.f32 %v2002, %v2215
        %v2217 = vpop.f32.mrb[0].mxu0
        %v2218 = vadd.f32 %v2006, %v2217
        %2219 = vmatprep.mubr.bf16.mxu0 %v1944
        %2220 = vmatmul.mubr.bf16.gmra.mrb[0].mxu0 %v1943
        %v2221 = vpop.f32.mrb[0].mxu0
        %v2222 = vadd.f32 %v2002, %v2221
        %v2223 = vpop.f32.mrb[0].mxu0
        %v2224 = vadd.f32 %v2006, %v2223
        %v2225 = vpop.f32.mrb[0].mxu0
        %v2226 = vadd.f32 %v2002, %v2225
        %v2227 = vpop.f32.mrb[0].mxu0
        %v2228 = vadd.f32 %v2006, %v2227
        %2229 = vmatprep.mubr.bf16.mxu0 %v1946
        %2230 = vmatmul.mubr.bf16.gmra.mrb[0].mxu0 %v1945
        %v2231 = vpop.f32.mrb[0].mxu0
        %v2232 = vadd.f32 %v2002, %v2231
        %v2233 = vpop.f32.mrb[0].mxu0
        %v2234 = vadd.f32 %v2006, %v2233
        %v2235 = vpop.f32.mrb[0].mxu0
        %v2236 = vadd.f32 %v2002, %v2235
        %v2237 = vpop.f32.mrb[0].mxu0
        %v2238 = vadd.f32 %v2006, %v2237
        %2239 = vmatprep.mubr.bf16.mxu0 %v1948
        %2240 = vmatmul.mubr.bf16.gmra.mrb[0].mxu0 %v1947
        %v2241 = vpop.f32.mrb[0].mxu0
        %v2242 = vadd.f32 %v2002, %v2241
        %v2243 = vpop.f32.mrb[0].mxu0
        %v2244 = vadd.f32 %v2006, %v2243
        %v2245 = vpop.f32.mrb[0].mxu0
        %v2246 = vadd.f32 %v2002, %v2245
        %v2247 = vpop.f32.mrb[0].mxu0
        %v2248 = vadd.f32 %v2006, %v2247
        %2249 = vmatprep.mubr.bf16.mxu0 %v1950
        %2250 = vmatmul.mubr.bf16.gmra.mrb[0].mxu0 %v1949
        %v2251 = vpop.f32.mrb[0].mxu0
        %v2252 = vadd.f32 %v2002, %v2251
        %v2253 = vpop.f32.mrb[0].mxu0
        %v2254 = vadd.f32 %v2006, %v2253
        %v2255 = vpop.f32.mrb[0].mxu0
        %v2256 = vadd.f32 %v2002, %v2255
        %v2257 = vpop.f32.mrb[0].mxu0
        %v2258 = vadd.f32 %v2006, %v2257
        %2259 = vmatprep.mubr.bf16.mxu0 %v1952
        %2260 = vmatmul.mubr.bf16.gmra.mrb[0].mxu0 %v1951
        %v2261 = vpop.f32.mrb[0].mxu0
        %v2262 = vadd.f32 %v2002, %v2261
        %v2263 = vpop.f32.mrb[0].mxu0
        %v2264 = vadd.f32 %v2006, %v2263
        %v2265 = vpop.f32.mrb[0].mxu0
        %v2266 = vadd.f32 %v2002, %v2265
        %v2267 = vpop.f32.mrb[0].mxu0
        %v2268 = vadd.f32 %v2006, %v2267
        %2269 = vmatprep.mubr.bf16.mxu0 %v1954
        %2270 = vmatmul.mubr.bf16.gmra.mrb[0].mxu0 %v1953
        %v2271 = vpop.f32.mrb[0].mxu0
        %v2272 = vadd.f32 %v2002, %v2271
        %v2273 = vpop.f32.mrb[0].mxu0
        %v2274 = vadd.f32 %v2006, %v2273
        %v2275 = vpop.f32.mrb[0].mxu0
        %v2276 = vadd.f32 %v2002, %v2275
        %v2277 = vpop.f32.mrb[0].mxu0
        %v2278 = vadd.f32 %v2006, %v2277
        %2279 = vdwg.mxu0
        %vm2280 = vcmp.gt.f32.partialorder %v2202, 0.0
        %vm2281 = vcmp.gt.f32.partialorder %v2204, 0.0
        %vm2282 = vcmp.gt.f32.partialorder %v2206, 0.0
        %vm2283 = vcmp.gt.f32.partialorder %v2208, 0.0
        %vm2284 = vcmp.gt.f32.partialorder %v2212, 0.0
        %vm2285 = vcmp.gt.f32.partialorder %v2214, 0.0
        %vm2286 = vcmp.gt.f32.partialorder %v2216, 0.0
        %vm2287 = vcmp.gt.f32.partialorder %v2218, 0.0
        %vm2288 = vcmp.gt.f32.partialorder %v2222, 0.0
        %vm2289 = vcmp.gt.f32.partialorder %v2224, 0.0
        %vm2290 = vcmp.gt.f32.partialorder %v2226, 0.0
        %vm2291 = vcmp.gt.f32.partialorder %v2228, 0.0
        %vm2292 = vcmp.gt.f32.partialorder %v2232, 0.0
        %vm2293 = vcmp.gt.f32.partialorder %v2234, 0.0
        %vm2294 = vcmp.gt.f32.partialorder %v2236, 0.0
        %vm2295 = vcmp.gt.f32.partialorder %v2238, 0.0
        %vm2296 = vcmp.gt.f32.partialorder %v2242, 0.0
        %vm2297 = vcmp.gt.f32.partialorder %v2244, 0.0
        %vm2298 = vcmp.gt.f32.partialorder %v2246, 0.0
        %vm2299 = vcmp.gt.f32.partialorder %v2248, 0.0
        %vm2300 = vcmp.gt.f32.partialorder %v2252, 0.0
        %vm2301 = vcmp.gt.f32.partialorder %v2254, 0.0
        %vm2302 = vcmp.gt.f32.partialorder %v2256, 0.0
        %vm2303 = vcmp.gt.f32.partialorder %v2258, 0.0
        %vm2304 = vcmp.gt.f32.partialorder %v2262, 0.0
        %vm2305 = vcmp.gt.f32.partialorder %v2264, 0.0
        %vm2306 = vcmp.gt.f32.partialorder %v2266, 0.0
        %vm2307 = vcmp.gt.f32.partialorder %v2268, 0.0
        %vm2308 = vcmp.gt.f32.partialorder %v2272, 0.0
        %vm2309 = vcmp.gt.f32.partialorder %v2274, 0.0
        %vm2310 = vcmp.gt.f32.partialorder %v2276, 0.0
        %vm2311 = vcmp.gt.f32.partialorder %v2278, 0.0
        %v2312 = vmul.f32 %v2202, 0.01
        %v2313 = vmul.f32 %v2204, 0.01
        %v2314 = vmul.f32 %v2206, 0.01
        %v2315 = vmul.f32 %v2208, 0.01
        %v2316 = vmul.f32 %v2212, 0.01
        %v2317 = vmul.f32 %v2214, 0.01
        %v2318 = vmul.f32 %v2216, 0.01
        %v2319 = vmul.f32 %v2218, 0.01
        %v2320 = vmul.f32 %v2222, 0.01
        %v2321 = vmul.f32 %v2224, 0.01
        %v2322 = vmul.f32 %v2226, 0.01
        %v2323 = vmul.f32 %v2228, 0.01
        %v2324 = vmul.f32 %v2232, 0.01
        %v2325 = vmul.f32 %v2234, 0.01
        %v2326 = vmul.f32 %v2236, 0.01
        %v2327 = vmul.f32 %v2238, 0.01
        %v2328 = vmul.f32 %v2242, 0.01
        %v2329 = vmul.f32 %v2244, 0.01
        %v2330 = vmul.f32 %v2246, 0.01
        %v2331 = vmul.f32 %v2248, 0.01
        %v2332 = vmul.f32 %v2252, 0.01
        %v2333 = vmul.f32 %v2254, 0.01
        %v2334 = vmul.f32 %v2256, 0.01
        %v2335 = vmul.f32 %v2258, 0.01
        %v2336 = vmul.f32 %v2262, 0.01
        %v2337 = vmul.f32 %v2264, 0.01
        %v2338 = vmul.f32 %v2266, 0.01
        %v2339 = vmul.f32 %v2268, 0.01
        %v2340 = vmul.f32 %v2272, 0.01
        %v2341 = vmul.f32 %v2274, 0.01
        %v2342 = vmul.f32 %v2276, 0.01
        %v2343 = vmul.f32 %v2278, 0.01
        %v2344 = vsel %vm2280, %v2202, %v2312
        %v2345 = vsel %vm2281, %v2204, %v2313
        %v2346 = vsel %vm2282, %v2206, %v2314
        %v2347 = vsel %vm2283, %v2208, %v2315
        %v2348 = vsel %vm2284, %v2212, %v2316
        %v2349 = vsel %vm2285, %v2214, %v2317
        %v2350 = vsel %vm2286, %v2216, %v2318
        %v2351 = vsel %vm2287, %v2218, %v2319
        %v2352 = vsel %vm2288, %v2222, %v2320
        %v2353 = vsel %vm2289, %v2224, %v2321
        %v2354 = vsel %vm2290, %v2226, %v2322
        %v2355 = vsel %vm2291, %v2228, %v2323
        %v2356 = vsel %vm2292, %v2232, %v2324
        %v2357 = vsel %vm2293, %v2234, %v2325
        %v2358 = vsel %vm2294, %v2236, %v2326
        %v2359 = vsel %vm2295, %v2238, %v2327
        %v2360 = vsel %vm2296, %v2242, %v2328
        %v2361 = vsel %vm2297, %v2244, %v2329
        %v2362 = vsel %vm2298, %v2246, %v2330
        %v2363 = vsel %vm2299, %v2248, %v2331
        %v2364 = vsel %vm2300, %v2252, %v2332
        %v2365 = vsel %vm2301, %v2254, %v2333
        %v2366 = vsel %vm2302, %v2256, %v2334
        %v2367 = vsel %vm2303, %v2258, %v2335
        %v2368 = vsel %vm2304, %v2262, %v2336
        %v2369 = vsel %vm2305, %v2264, %v2337
        %v2370 = vsel %vm2306, %v2266, %v2338
        %v2371 = vsel %vm2307, %v2268, %v2339
        %v2372 = vsel %vm2308, %v2272, %v2340
        %v2373 = vsel %vm2309, %v2274, %v2341
        %v2374 = vsel %vm2310, %v2276, %v2342
        %v2375 = vsel %vm2311, %v2278, %v2343
        %v2376 = vpack.c.bf16 %v2346, %v2344
        %v2377 = vpack.c.bf16 %v2347, %v2345
        %v2378 = vpack.c.bf16 %v2350, %v2348
        %v2379 = vpack.c.bf16 %v2351, %v2349
        %v2380 = vpack.c.bf16 %v2354, %v2352
        %v2381 = vpack.c.bf16 %v2355, %v2353
        %v2382 = vpack.c.bf16 %v2358, %v2356
        %v2383 = vpack.c.bf16 %v2359, %v2357
        %v2384 = vpack.c.bf16 %v2362, %v2360
        %v2385 = vpack.c.bf16 %v2363, %v2361
        %v2386 = vpack.c.bf16 %v2366, %v2364
        %v2387 = vpack.c.bf16 %v2367, %v2365
        %v2388 = vpack.c.bf16 %v2370, %v2368
        %v2389 = vpack.c.bf16 %v2371, %v2369
        %v2390 = vpack.c.bf16 %v2374, %v2372
        %v2391 = vpack.c.bf16 %v2375, %v2373
        %s2392 = smul.u32 %s30, 32
        %s2393 = smul.addr %s2392, 4
        %s2394 = scalar_lea.vmem %s9, %s2393
        %v2395 = vld [vmem:[%s2394] sm:$0xf]
        %v2396 = vld [vmem:[%s2394 + $0x4] sm:$0xf]
        %v2397 = vld [vmem:[%s2394 + $0x8] sm:$0xf]
        %v2398 = vld [vmem:[%s2394 + $0xc] sm:$0xf]
        %v2399 = vld [vmem:[%s2394 + $0x10] sm:$0xf]
        %v2400 = vld [vmem:[%s2394 + $0x14] sm:$0xf]
        %v2401 = vld [vmem:[%s2394 + $0x18] sm:$0xf]
        %v2402 = vld [vmem:[%s2394 + $0x1c] sm:$0xf]
        %v2403 = vld [vmem:[%s2394 + $0x20] sm:$0xf]
        %v2404 = vld [vmem:[%s2394 + $0x24] sm:$0xf]
        %v2405 = vld [vmem:[%s2394 + $0x28] sm:$0xf]
        %v2406 = vld [vmem:[%s2394 + $0x2c] sm:$0xf]
        %v2407 = vld [vmem:[%s2394 + $0x30] sm:$0xf]
        %v2408 = vld [vmem:[%s2394 + $0x34] sm:$0xf]
        %v2409 = vld [vmem:[%s2394 + $0x38] sm:$0xf]
        %v2410 = vld [vmem:[%s2394 + $0x3c] sm:$0xf]
        %v2411 = vld [vmem:[%s2394 + $0x40] sm:$0xf]
        %v2412 = vld [vmem:[%s2394 + $0x44] sm:$0xf]
        %v2413 = vld [vmem:[%s2394 + $0x48] sm:$0xf]
        %v2414 = vld [vmem:[%s2394 + $0x4c] sm:$0xf]
        %v2415 = vld [vmem:[%s2394 + $0x50] sm:$0xf]
        %v2416 = vld [vmem:[%s2394 + $0x54] sm:$0xf]
        %v2417 = vld [vmem:[%s2394 + $0x58] sm:$0xf]
        %v2418 = vld [vmem:[%s2394 + $0x5c] sm:$0xf]
        %v2419 = vld [vmem:[%s2394 + $0x60] sm:$0xf]
        %v2420 = vld [vmem:[%s2394 + $0x64] sm:$0xf]
        %v2421 = vld [vmem:[%s2394 + $0x68] sm:$0xf]
        %v2422 = vld [vmem:[%s2394 + $0x6c] sm:$0xf]
        %v2423 = vld [vmem:[%s2394 + $0x70] sm:$0xf]
        %v2424 = vld [vmem:[%s2394 + $0x74] sm:$0xf]
        %v2425 = vld [vmem:[%s2394 + $0x78] sm:$0xf]
        %v2426 = vld [vmem:[%s2394 + $0x7c] sm:$0xf]
        %v2427 = vlaneseq
        %v2428 = vshrl.u32 %v2427, 7
        %v2429 = vsub.s32 0, %v2428
        %v2430 = vrot.slane %v545, %v2429
        %v2463 = vunpack.c.l.b16 %v2395
        %v2464 = vunpack.c.l.b16 %v2396
        %v2465 = vunpack.c.l.b16 %v2397
        %v2466 = vunpack.c.l.b16 %v2398
        %v2467 = vunpack.c.l.b16 %v2399
        %v2468 = vunpack.c.l.b16 %v2400
        %v2469 = vunpack.c.l.b16 %v2401
        %v2470 = vunpack.c.l.b16 %v2402
        %v2471 = vunpack.c.l.b16 %v2403
        %v2472 = vunpack.c.l.b16 %v2404
        %v2473 = vunpack.c.l.b16 %v2405
        %v2474 = vunpack.c.l.b16 %v2406
        %v2475 = vunpack.c.l.b16 %v2407
        %v2476 = vunpack.c.l.b16 %v2408
        %v2477 = vunpack.c.l.b16 %v2409
        %v2478 = vunpack.c.l.b16 %v2410
        %v2479 = vunpack.c.l.b16 %v2411
        %v2480 = vunpack.c.l.b16 %v2412
        %v2481 = vunpack.c.l.b16 %v2413
        %v2482 = vunpack.c.l.b16 %v2414
        %v2483 = vunpack.c.l.b16 %v2415
        %v2484 = vunpack.c.l.b16 %v2416
        %v2485 = vunpack.c.l.b16 %v2417
        %v2486 = vunpack.c.l.b16 %v2418
        %v2487 = vunpack.c.l.b16 %v2419
        %v2488 = vunpack.c.l.b16 %v2420
        %v2489 = vunpack.c.l.b16 %v2421
        %v2490 = vunpack.c.l.b16 %v2422
        %v2491 = vunpack.c.l.b16 %v2423
        %v2492 = vunpack.c.l.b16 %v2424
        %v2493 = vunpack.c.l.b16 %v2425
        %v2494 = vunpack.c.l.b16 %v2426
        %v2495 = vpack.c.b16 %v2464, %v2463
        %v2496 = vpack.c.b16 %v2466, %v2465
        %v2497 = vpack.c.b16 %v2468, %v2467
        %v2498 = vpack.c.b16 %v2470, %v2469
        %v2499 = vpack.c.b16 %v2472, %v2471
        %v2500 = vpack.c.b16 %v2474, %v2473
        %v2501 = vpack.c.b16 %v2476, %v2475
        %v2502 = vpack.c.b16 %v2478, %v2477
        %v2503 = vpack.c.b16 %v2480, %v2479
        %v2504 = vpack.c.b16 %v2482, %v2481
        %v2505 = vpack.c.b16 %v2484, %v2483
        %v2506 = vpack.c.b16 %v2486, %v2485
        %v2507 = vpack.c.b16 %v2488, %v2487
        %v2508 = vpack.c.b16 %v2490, %v2489
        %v2509 = vpack.c.b16 %v2492, %v2491
        %v2510 = vpack.c.b16 %v2494, %v2493
        %2527 = vmatprep.subr.bf16.mxu0 0
        %2528 = vmatpush1.bf16.msra.mxu0 %v2495
        %2529 = vmatprep.subr.bf16.mxu0 0
        %2530 = vmatpush1.bf16.msra.mxu0 %v2496
        %2531 = vmatprep.subr.bf16.mxu0 0
        %2532 = vmatpush1.bf16.msra.mxu0 %v2497
        %2533 = vmatprep.subr.bf16.mxu0 0
        %2534 = vmatpush1.bf16.msra.mxu0 %v2498
        %2535 = vmatprep.subr.bf16.mxu0 0
        %2536 = vmatpush1.bf16.msra.mxu0 %v2499
        %2537 = vmatprep.subr.bf16.mxu0 0
        %2538 = vmatpush1.bf16.msra.mxu0 %v2500
        %2539 = vmatprep.subr.bf16.mxu0 0
        %2540 = vmatpush1.bf16.msra.mxu0 %v2501
        %2541 = vmatprep.subr.bf16.mxu0 0
        %2542 = vmatpush1.bf16.msra.mxu0 %v2502
        %2543 = vmatprep.subr.bf16.mxu0 0
        %2544 = vmatpush1.bf16.msra.mxu0 %v2503
        %2545 = vmatprep.subr.bf16.mxu0 0
        %2546 = vmatpush1.bf16.msra.mxu0 %v2504
        %2547 = vmatprep.subr.bf16.mxu0 0
        %2548 = vmatpush1.bf16.msra.mxu0 %v2505
        %2549 = vmatprep.subr.bf16.mxu0 0
        %2550 = vmatpush1.bf16.msra.mxu0 %v2506
        %2551 = vmatprep.subr.bf16.mxu0 0
        %2552 = vmatpush1.bf16.msra.mxu0 %v2507
        %2553 = vmatprep.subr.bf16.mxu0 0
        %2554 = vmatpush1.bf16.msra.mxu0 %v2508
        %2555 = vmatprep.subr.bf16.mxu0 0
        %2556 = vmatpush1.bf16.msra.mxu0 %v2509
        %2557 = vmatprep.subr.bf16.mxu0 0
        %2558 = vmatpush1.bf16.msra.mxu0 %v2510
        %2559 = vmatprep.mubr.bf16.mxu0 %v2377
        %2560 = vmatmul.mubr.bf16.gmra.mrb[0].mxu0 %v2376
        %v2561 = vpop.f32.mrb[0].mxu0
        %v2562 = vadd.f32 %v2430, %v2561
        %v2563 = vpop.f32.mrb[0].mxu0
        %v2564 = vpop.f32.mrb[0].mxu0
        %v2565 = vadd.f32 %v2430, %v2564
        %v2566 = vpop.f32.mrb[0].mxu0
        %2567 = vmatprep.mubr.bf16.mxu0 %v2379
        %2568 = vmatmul.mubr.bf16.gmra.mrb[0].mxu0 %v2378
        %v2569 = vpop.f32.mrb[0].mxu0
        %v2570 = vadd.f32 %v2430, %v2569
        %v2571 = vpop.f32.mrb[0].mxu0
        %v2572 = vpop.f32.mrb[0].mxu0
        %v2573 = vadd.f32 %v2430, %v2572
        %v2574 = vpop.f32.mrb[0].mxu0
        %2575 = vmatprep.mubr.bf16.mxu0 %v2381
        %2576 = vmatmul.mubr.bf16.gmra.mrb[0].mxu0 %v2380
        %v2577 = vpop.f32.mrb[0].mxu0
        %v2578 = vadd.f32 %v2430, %v2577
        %v2579 = vpop.f32.mrb[0].mxu0
        %v2580 = vpop.f32.mrb[0].mxu0
        %v2581 = vadd.f32 %v2430, %v2580
        %v2582 = vpop.f32.mrb[0].mxu0
        %2583 = vmatprep.mubr.bf16.mxu0 %v2383
        %2584 = vmatmul.mubr.bf16.gmra.mrb[0].mxu0 %v2382
        %v2585 = vpop.f32.mrb[0].mxu0
        %v2586 = vadd.f32 %v2430, %v2585
        %v2587 = vpop.f32.mrb[0].mxu0
        %v2588 = vpop.f32.mrb[0].mxu0
        %v2589 = vadd.f32 %v2430, %v2588
        %v2590 = vpop.f32.mrb[0].mxu0
        %2591 = vmatprep.mubr.bf16.mxu0 %v2385
        %2592 = vmatmul.mubr.bf16.gmra.mrb[0].mxu0 %v2384
        %v2593 = vpop.f32.mrb[0].mxu0
        %v2594 = vadd.f32 %v2430, %v2593
        %v2595 = vpop.f32.mrb[0].mxu0
        %v2596 = vpop.f32.mrb[0].mxu0
        %v2597 = vadd.f32 %v2430, %v2596
        %v2598 = vpop.f32.mrb[0].mxu0
        %2599 = vmatprep.mubr.bf16.mxu0 %v2387
        %2600 = vmatmul.mubr.bf16.gmra.mrb[0].mxu0 %v2386
        %v2601 = vpop.f32.mrb[0].mxu0
        %v2602 = vadd.f32 %v2430, %v2601
        %v2603 = vpop.f32.mrb[0].mxu0
        %v2604 = vpop.f32.mrb[0].mxu0
        %v2605 = vadd.f32 %v2430, %v2604
        %v2606 = vpop.f32.mrb[0].mxu0
        %2607 = vmatprep.mubr.bf16.mxu0 %v2389
        %2608 = vmatmul.mubr.bf16.gmra.mrb[0].mxu0 %v2388
        %v2609 = vpop.f32.mrb[0].mxu0
        %v2610 = vadd.f32 %v2430, %v2609
        %v2611 = vpop.f32.mrb[0].mxu0
        %v2612 = vpop.f32.mrb[0].mxu0
        %v2613 = vadd.f32 %v2430, %v2612
        %v2614 = vpop.f32.mrb[0].mxu0
        %2615 = vmatprep.mubr.bf16.mxu0 %v2391
        %2616 = vmatmul.mubr.bf16.gmra.mrb[0].mxu0 %v2390
        %v2617 = vpop.f32.mrb[0].mxu0
        %v2618 = vadd.f32 %v2430, %v2617
        %v2619 = vpop.f32.mrb[0].mxu0
        %v2620 = vpop.f32.mrb[0].mxu0
        %v2621 = vadd.f32 %v2430, %v2620
        %v2622 = vpop.f32.mrb[0].mxu0
        %2623 = vdwg.mxu0
        %vm2624 = vcmp.gt.f32.partialorder %v2562, 0.0
        %vm2625 = vcmp.gt.f32.partialorder %v2565, 0.0
        %vm2626 = vcmp.gt.f32.partialorder %v2570, 0.0
        %vm2627 = vcmp.gt.f32.partialorder %v2573, 0.0
        %vm2628 = vcmp.gt.f32.partialorder %v2578, 0.0
        %vm2629 = vcmp.gt.f32.partialorder %v2581, 0.0
        %vm2630 = vcmp.gt.f32.partialorder %v2586, 0.0
        %vm2631 = vcmp.gt.f32.partialorder %v2589, 0.0
        %vm2632 = vcmp.gt.f32.partialorder %v2594, 0.0
        %vm2633 = vcmp.gt.f32.partialorder %v2597, 0.0
        %vm2634 = vcmp.gt.f32.partialorder %v2602, 0.0
        %vm2635 = vcmp.gt.f32.partialorder %v2605, 0.0
        %vm2636 = vcmp.gt.f32.partialorder %v2610, 0.0
        %vm2637 = vcmp.gt.f32.partialorder %v2613, 0.0
        %vm2638 = vcmp.gt.f32.partialorder %v2618, 0.0
        %vm2639 = vcmp.gt.f32.partialorder %v2621, 0.0
        %v2640 = vmul.f32 %v2562, 0.01
        %v2641 = vmul.f32 %v2565, 0.01
        %v2642 = vmul.f32 %v2570, 0.01
        %v2643 = vmul.f32 %v2573, 0.01
        %v2644 = vmul.f32 %v2578, 0.01
        %v2645 = vmul.f32 %v2581, 0.01
        %v2646 = vmul.f32 %v2586, 0.01
        %v2647 = vmul.f32 %v2589, 0.01
        %v2648 = vmul.f32 %v2594, 0.01
        %v2649 = vmul.f32 %v2597, 0.01
        %v2650 = vmul.f32 %v2602, 0.01
        %v2651 = vmul.f32 %v2605, 0.01
        %v2652 = vmul.f32 %v2610, 0.01
        %v2653 = vmul.f32 %v2613, 0.01
        %v2654 = vmul.f32 %v2618, 0.01
        %v2655 = vmul.f32 %v2621, 0.01
        %v2656 = vsel %vm2624, %v2562, %v2640
        %v2657 = vsel %vm2625, %v2565, %v2641
        %v2658 = vsel %vm2626, %v2570, %v2642
        %v2659 = vsel %vm2627, %v2573, %v2643
        %v2660 = vsel %vm2628, %v2578, %v2644
        %v2661 = vsel %vm2629, %v2581, %v2645
        %v2662 = vsel %vm2630, %v2586, %v2646
        %v2663 = vsel %vm2631, %v2589, %v2647
        %v2664 = vsel %vm2632, %v2594, %v2648
        %v2665 = vsel %vm2633, %v2597, %v2649
        %v2666 = vsel %vm2634, %v2602, %v2650
        %v2667 = vsel %vm2635, %v2605, %v2651
        %v2668 = vsel %vm2636, %v2610, %v2652
        %v2669 = vsel %vm2637, %v2613, %v2653
        %v2670 = vsel %vm2638, %v2618, %v2654
        %v2671 = vsel %vm2639, %v2621, %v2655
        %v2672 = vlaneseq
        %v2673 = vshrl.u32 %v2672, 7
        %v2674 = vsub.s32 1, %v2673
        %v2675 = vrot.slane %v545, %v2674
        %v2676 = vmul.f32 %v2656, %v2675
        %v2677 = vmul.f32 %v2657, %v2675
        %v2678 = vmul.f32 %v2658, %v2675
        %v2679 = vmul.f32 %v2659, %v2675
        %v2680 = vmul.f32 %v2660, %v2675
        %v2681 = vmul.f32 %v2661, %v2675
        %v2682 = vmul.f32 %v2662, %v2675
        %v2683 = vmul.f32 %v2663, %v2675
        %v2684 = vmul.f32 %v2664, %v2675
        %v2685 = vmul.f32 %v2665, %v2675
        %v2686 = vmul.f32 %v2666, %v2675
        %v2687 = vmul.f32 %v2667, %v2675
        %v2688 = vmul.f32 %v2668, %v2675
        %v2689 = vmul.f32 %v2669, %v2675
        %v2690 = vmul.f32 %v2670, %v2675
        %v2691 = vmul.f32 %v2671, %v2675
        %2692 = vadd.xlane.f32.xlu0 %v2676
        %v2693 = vpop.xlane.xlu0 %2692
        %2694 = vadd.xlane.f32.xlu0 %v2677
        %v2695 = vpop.xlane.xlu0 %2694
        %2696 = vadd.xlane.f32.xlu0 %v2678
        %v2697 = vpop.xlane.xlu0 %2696
        %2698 = vadd.xlane.f32.xlu0 %v2679
        %v2699 = vpop.xlane.xlu0 %2698
        %2700 = vadd.xlane.f32.xlu0 %v2680
        %v2701 = vpop.xlane.xlu0 %2700
        %2702 = vadd.xlane.f32.xlu0 %v2681
        %v2703 = vpop.xlane.xlu0 %2702
        %2704 = vadd.xlane.f32.xlu0 %v2682
        %v2705 = vpop.xlane.xlu0 %2704
        %2706 = vadd.xlane.f32.xlu0 %v2683
        %v2707 = vpop.xlane.xlu0 %2706
        %2708 = vadd.xlane.f32.xlu0 %v2684
        %v2709 = vpop.xlane.xlu0 %2708
        %2710 = vadd.xlane.f32.xlu0 %v2685
        %v2711 = vpop.xlane.xlu0 %2710
        %2712 = vadd.xlane.f32.xlu0 %v2686
        %v2713 = vpop.xlane.xlu0 %2712
        %2714 = vadd.xlane.f32.xlu0 %v2687
        %v2715 = vpop.xlane.xlu0 %2714
        %2716 = vadd.xlane.f32.xlu0 %v2688
        %v2717 = vpop.xlane.xlu0 %2716
        %2718 = vadd.xlane.f32.xlu0 %v2689
        %v2719 = vpop.xlane.xlu0 %2718
        %2720 = vadd.xlane.f32.xlu0 %v2690
        %v2721 = vpop.xlane.xlu0 %2720
        %2722 = vadd.xlane.f32.xlu0 %v2691
        %v2723 = vpop.xlane.xlu0 %2722
        %s2724 = smul.u32 %s30, 128
        %s2725 = sadd.s32 %s2724, 21
        %s2726 = sld [smem:[#allocation13 + %s2725]]
        %v2727 = vstv %s2726
        %v2728 = vadd.f32 %v2693, %v2727
        %v2729 = vadd.f32 %v2695, %v2727
        %v2730 = vadd.f32 %v2697, %v2727
        %v2731 = vadd.f32 %v2699, %v2727
        %v2732 = vadd.f32 %v2701, %v2727
        %v2733 = vadd.f32 %v2703, %v2727
        %v2734 = vadd.f32 %v2705, %v2727
        %v2735 = vadd.f32 %v2707, %v2727
        %v2736 = vadd.f32 %v2709, %v2727
        %v2737 = vadd.f32 %v2711, %v2727
        %v2738 = vadd.f32 %v2713, %v2727
        %v2739 = vadd.f32 %v2715, %v2727
        %v2740 = vadd.f32 %v2717, %v2727
        %v2741 = vadd.f32 %v2719, %v2727
        %v2742 = vadd.f32 %v2721, %v2727
        %v2743 = vadd.f32 %v2723, %v2727
        %v2744 = vlaneseq
        %v2745 = vshrl.u32 %v2744, 7
        %v2746 = vsub.s32 2, %v2745
        %v2747 = vrot.slane %v545, %v2746
        %v2748 = vmul.f32 %v2656, %v2747
        %v2749 = vmul.f32 %v2657, %v2747
        %v2750 = vmul.f32 %v2658, %v2747
        %v2751 = vmul.f32 %v2659, %v2747
        %v2752 = vmul.f32 %v2660, %v2747
        %v2753 = vmul.f32 %v2661, %v2747
        %v2754 = vmul.f32 %v2662, %v2747
        %v2755 = vmul.f32 %v2663, %v2747
        %v2756 = vmul.f32 %v2664, %v2747
        %v2757 = vmul.f32 %v2665, %v2747
        %v2758 = vmul.f32 %v2666, %v2747
        %v2759 = vmul.f32 %v2667, %v2747
        %v2760 = vmul.f32 %v2668, %v2747
        %v2761 = vmul.f32 %v2669, %v2747
        %v2762 = vmul.f32 %v2670, %v2747
        %v2763 = vmul.f32 %v2671, %v2747
        %2764 = vadd.xlane.f32.xlu0 %v2748
        %v2765 = vpop.xlane.xlu0 %2764
        %2766 = vadd.xlane.f32.xlu0 %v2749
        %v2767 = vpop.xlane.xlu0 %2766
        %2768 = vadd.xlane.f32.xlu0 %v2750
        %v2769 = vpop.xlane.xlu0 %2768
        %2770 = vadd.xlane.f32.xlu0 %v2751
        %v2771 = vpop.xlane.xlu0 %2770
        %2772 = vadd.xlane.f32.xlu0 %v2752
        %v2773 = vpop.xlane.xlu0 %2772
        %2774 = vadd.xlane.f32.xlu0 %v2753
        %v2775 = vpop.xlane.xlu0 %2774
        %2776 = vadd.xlane.f32.xlu0 %v2754
        %v2777 = vpop.xlane.xlu0 %2776
        %2778 = vadd.xlane.f32.xlu0 %v2755
        %v2779 = vpop.xlane.xlu0 %2778
        %2780 = vadd.xlane.f32.xlu0 %v2756
        %v2781 = vpop.xlane.xlu0 %2780
        %2782 = vadd.xlane.f32.xlu0 %v2757
        %v2783 = vpop.xlane.xlu0 %2782
        %2784 = vadd.xlane.f32.xlu0 %v2758
        %v2785 = vpop.xlane.xlu0 %2784
        %2786 = vadd.xlane.f32.xlu0 %v2759
        %v2787 = vpop.xlane.xlu0 %2786
        %2788 = vadd.xlane.f32.xlu0 %v2760
        %v2789 = vpop.xlane.xlu0 %2788
        %2790 = vadd.xlane.f32.xlu0 %v2761
        %v2791 = vpop.xlane.xlu0 %2790
        %2792 = vadd.xlane.f32.xlu0 %v2762
        %v2793 = vpop.xlane.xlu0 %2792
        %2794 = vadd.xlane.f32.xlu0 %v2763
        %v2795 = vpop.xlane.xlu0 %2794
        %s2796 = sadd.s32 %s2724, 22
        %s2797 = sld [smem:[#allocation13 + %s2796]]
        %v2798 = vstv %s2797
        %v2799 = vadd.f32 %v2765, %v2798
        %v2800 = vadd.f32 %v2767, %v2798
        %v2801 = vadd.f32 %v2769, %v2798
        %v2802 = vadd.f32 %v2771, %v2798
        %v2803 = vadd.f32 %v2773, %v2798
        %v2804 = vadd.f32 %v2775, %v2798
        %v2805 = vadd.f32 %v2777, %v2798
        %v2806 = vadd.f32 %v2779, %v2798
        %v2807 = vadd.f32 %v2781, %v2798
        %v2808 = vadd.f32 %v2783, %v2798
        %v2809 = vadd.f32 %v2785, %v2798
        %v2810 = vadd.f32 %v2787, %v2798
        %v2811 = vadd.f32 %v2789, %v2798
        %v2812 = vadd.f32 %v2791, %v2798
        %v2813 = vadd.f32 %v2793, %v2798
        %v2814 = vadd.f32 %v2795, %v2798
        %s2815 = sld [smem:[#allocation13 + %s2724]]
        %v2816 = vstv %s2815
        %v2817 = vmul.f32 %v531, %v2816
        %v2818 = vmul.f32 %v532, %v2816
        %s2819 = sadd.s32 %s2724, 4
        %s2820 = sld [smem:[#allocation13 + %s2819]]
        %v2821 = vstv %s2820
        %v2822 = vadd.f32 %v2817, %v2821
        %v2823 = vadd.f32 %v2818, %v2821
        %v2824 = vtanh.pop %v2822
        %v2825 = vtanh.pop %v2823
        %s2826 = sadd.s32 %s2724, 1
        %s2827 = sld [smem:[#allocation13 + %s2826]]
        %v2828 = vstv %s2827
        %v2829 = vmul.f32 %v531, %v2828
        %v2830 = vmul.f32 %v532, %v2828
        %s2831 = sadd.s32 %s2724, 5
        %s2832 = sld [smem:[#allocation13 + %s2831]]
        %v2833 = vstv %s2832
        %v2834 = vadd.f32 %v2829, %v2833
        %v2835 = vadd.f32 %v2830, %v2833
        %v2836 = vtanh.pop %v2834
        %v2837 = vtanh.pop %v2835
        %s2838 = sadd.s32 %s2724, 2
        %s2839 = sld [smem:[#allocation13 + %s2838]]
        %v2840 = vstv %s2839
        %v2841 = vmul.f32 %v531, %v2840
        %v2842 = vmul.f32 %v532, %v2840
        %s2843 = sadd.s32 %s2724, 6
        %s2844 = sld [smem:[#allocation13 + %s2843]]
        %v2845 = vstv %s2844
        %v2846 = vadd.f32 %v2841, %v2845
        %v2847 = vadd.f32 %v2842, %v2845
        %v2848 = vtanh.pop %v2846
        %v2849 = vtanh.pop %v2847
        %s2850 = sadd.s32 %s2724, 3
        %s2851 = sld [smem:[#allocation13 + %s2850]]
        %v2852 = vstv %s2851
        %v2853 = vmul.f32 %v531, %v2852
        %v2854 = vmul.f32 %v532, %v2852
        %s2855 = sadd.s32 %s2724, 7
        %s2856 = sld [smem:[#allocation13 + %s2855]]
        %v2857 = vstv %s2856
        %v2858 = vadd.f32 %v2853, %v2857
        %v2859 = vadd.f32 %v2854, %v2857
        %v2860 = vtanh.pop %v2858
        %v2861 = vtanh.pop %v2859
        %s2862 = sadd.s32 %s2724, 8
        %s2863 = sld [smem:[#allocation13 + %s2862]]
        %v2864 = vstv %s2863
        %v2865 = vmul.f32 %v2824, %v2864
        %v2866 = vmul.f32 %v2825, %v2864
        %s2867 = sadd.s32 %s2724, 10
        %s2868 = sld [smem:[#allocation13 + %s2867]]
        %v2869 = vstv %s2868
        %v2870 = vmul.f32 %v2836, %v2869
        %v2871 = vmul.f32 %v2837, %v2869
        %v2872 = vadd.f32 %v2865, %v2870
        %v2873 = vadd.f32 %v2866, %v2871
        %s2874 = sadd.s32 %s2724, 12
        %s2875 = sld [smem:[#allocation13 + %s2874]]
        %v2876 = vstv %s2875
        %v2877 = vmul.f32 %v2848, %v2876
        %v2878 = vmul.f32 %v2849, %v2876
        %v2879 = vadd.f32 %v2872, %v2877
        %v2880 = vadd.f32 %v2873, %v2878
        %s2881 = sadd.s32 %s2724, 14
        %s2882 = sld [smem:[#allocation13 + %s2881]]
        %v2883 = vstv %s2882
        %v2884 = vmul.f32 %v2860, %v2883
        %v2885 = vmul.f32 %v2861, %v2883
        %v2886 = vadd.f32 %v2879, %v2884
        %v2887 = vadd.f32 %v2880, %v2885
        %s2888 = sadd.s32 %s2724, 16
        %s2889 = sld [smem:[#allocation13 + %s2888]]
        %v2890 = vstv %s2889
        %v2891 = vadd.f32 %v2886, %v2890
        %v2892 = vadd.f32 %v2887, %v2890
        %v2893 = vtanh.pop %v2891
        %v2894 = vtanh.pop %v2892
        %s2895 = sadd.s32 %s2724, 9
        %s2896 = sld [smem:[#allocation13 + %s2895]]
        %v2897 = vstv %s2896
        %v2898 = vmul.f32 %v2824, %v2897
        %v2899 = vmul.f32 %v2825, %v2897
        %s2900 = sadd.s32 %s2724, 11
        %s2901 = sld [smem:[#allocation13 + %s2900]]
        %v2902 = vstv %s2901
        %v2903 = vmul.f32 %v2836, %v2902
        %v2904 = vmul.f32 %v2837, %v2902
        %v2905 = vadd.f32 %v2898, %v2903
        %v2906 = vadd.f32 %v2899, %v2904
        %s2907 = sadd.s32 %s2724, 13
        %s2908 = sld [smem:[#allocation13 + %s2907]]
        %v2909 = vstv %s2908
        %v2910 = vmul.f32 %v2848, %v2909
        %v2911 = vmul.f32 %v2849, %v2909
        %v2912 = vadd.f32 %v2905, %v2910
        %v2913 = vadd.f32 %v2906, %v2911
        %s2914 = sadd.s32 %s2724, 15
        %s2915 = sld [smem:[#allocation13 + %s2914]]
        %v2916 = vstv %s2915
        %v2917 = vmul.f32 %v2860, %v2916
        %v2918 = vmul.f32 %v2861, %v2916
        %v2919 = vadd.f32 %v2912, %v2917
        %v2920 = vadd.f32 %v2913, %v2918
        %s2921 = sadd.s32 %s2724, 17
        %s2922 = sld [smem:[#allocation13 + %s2921]]
        %v2923 = vstv %s2922
        %v2924 = vadd.f32 %v2919, %v2923
        %v2925 = vadd.f32 %v2920, %v2923
        %v2926 = vtanh.pop %v2924
        %v2927 = vtanh.pop %v2925
        %s2928 = sadd.s32 %s2724, 18
        %s2929 = sld [smem:[#allocation13 + %s2928]]
        %v2930 = vstv %s2929
        %v2931 = vmul.f32 %v2893, %v2930
        %v2932 = vmul.f32 %v2894, %v2930
        %s2933 = sadd.s32 %s2724, 19
        %s2934 = sld [smem:[#allocation13 + %s2933]]
        %v2935 = vstv %s2934
        %v2936 = vmul.f32 %v2926, %v2935
        %v2937 = vmul.f32 %v2927, %v2935
        %v2938 = vadd.f32 %v2931, %v2936
        %v2939 = vadd.f32 %v2932, %v2937
        %s2940 = sadd.s32 %s2724, 20
        %s2941 = sld [smem:[#allocation13 + %s2940]]
        %v2942 = vstv %s2941
        %v2943 = vadd.f32 %v2938, %v2942
        %v2944 = vadd.f32 %v2939, %v2942
        %v2945 = vtanh.pop %v2943
        %v2946 = vtanh.pop %v2944
        %v2949 = vlaneseq
        %v2950 = vshrl.u32 %v2949, 7
        %v2951 = vsub.s32 0, %v2950
        %v2952 = vrot.slane %v2945, %v2951
        %2954 = vbcast.lane.b32.xlu0 %v2952, 256
        %v2955 = vpop.permute.xlu0 %2954
        %v2956 = vlaneseq
        %v2957 = vshrl.u32 %v2956, 7
        %v2958 = vsub.s32 1, %v2957
        %v2959 = vrot.slane %v2945, %v2958
        %2961 = vbcast.lane.b32.xlu0 %v2959, 256
        %v2962 = vpop.permute.xlu0 %2961
        %v2963 = vlaneseq
        %v2964 = vshrl.u32 %v2963, 7
        %v2965 = vsub.s32 2, %v2964
        %v2966 = vrot.slane %v2945, %v2965
        %2968 = vbcast.lane.b32.xlu0 %v2966, 256
        %v2969 = vpop.permute.xlu0 %2968
        %v2970 = vlaneseq
        %v2971 = vshrl.u32 %v2970, 7
        %v2972 = vsub.s32 3, %v2971
        %v2973 = vrot.slane %v2945, %v2972
        %2975 = vbcast.lane.b32.xlu0 %v2973, 256
        %v2976 = vpop.permute.xlu0 %2975
        %v2977 = vlaneseq
        %v2978 = vshrl.u32 %v2977, 7
        %v2979 = vsub.s32 4, %v2978
        %v2980 = vrot.slane %v2945, %v2979
        %2982 = vbcast.lane.b32.xlu0 %v2980, 256
        %v2983 = vpop.permute.xlu0 %2982
        %v2984 = vlaneseq
        %v2985 = vshrl.u32 %v2984, 7
        %v2986 = vsub.s32 5, %v2985
        %v2987 = vrot.slane %v2945, %v2986
        %2989 = vbcast.lane.b32.xlu0 %v2987, 256
        %v2990 = vpop.permute.xlu0 %2989
        %v2991 = vlaneseq
        %v2992 = vshrl.u32 %v2991, 7
        %v2993 = vsub.s32 6, %v2992
        %v2994 = vrot.slane %v2945, %v2993
        %2996 = vbcast.lane.b32.xlu0 %v2994, 256
        %v2997 = vpop.permute.xlu0 %2996
        %v2998 = vlaneseq
        %v2999 = vshrl.u32 %v2998, 7
        %v3000 = vsub.s32 7, %v2999
        %v3001 = vrot.slane %v2945, %v3000
        %3003 = vbcast.lane.b32.xlu0 %v3001, 256
        %v3004 = vpop.permute.xlu0 %3003
        %v3005 = vlaneseq
        %v3006 = vshrl.u32 %v3005, 7
        %v3007 = vsub.s32 0, %v3006
        %v3008 = vrot.slane %v2946, %v3007
        %3010 = vbcast.lane.b32.xlu0 %v3008, 256
        %v3011 = vpop.permute.xlu0 %3010
        %v3012 = vlaneseq
        %v3013 = vshrl.u32 %v3012, 7
        %v3014 = vsub.s32 1, %v3013
        %v3015 = vrot.slane %v2946, %v3014
        %3017 = vbcast.lane.b32.xlu0 %v3015, 256
        %v3018 = vpop.permute.xlu0 %3017
        %v3019 = vlaneseq
        %v3020 = vshrl.u32 %v3019, 7
        %v3021 = vsub.s32 2, %v3020
        %v3022 = vrot.slane %v2946, %v3021
        %3024 = vbcast.lane.b32.xlu0 %v3022, 256
        %v3025 = vpop.permute.xlu0 %3024
        %v3026 = vlaneseq
        %v3027 = vshrl.u32 %v3026, 7
        %v3028 = vsub.s32 3, %v3027
        %v3029 = vrot.slane %v2946, %v3028
        %3031 = vbcast.lane.b32.xlu0 %v3029, 256
        %v3032 = vpop.permute.xlu0 %3031
        %v3033 = vlaneseq
        %v3034 = vshrl.u32 %v3033, 7
        %v3035 = vsub.s32 4, %v3034
        %v3036 = vrot.slane %v2946, %v3035
        %3038 = vbcast.lane.b32.xlu0 %v3036, 256
        %v3039 = vpop.permute.xlu0 %3038
        %v3040 = vlaneseq
        %v3041 = vshrl.u32 %v3040, 7
        %v3042 = vsub.s32 5, %v3041
        %v3043 = vrot.slane %v2946, %v3042
        %3045 = vbcast.lane.b32.xlu0 %v3043, 256
        %v3046 = vpop.permute.xlu0 %3045
        %v3047 = vlaneseq
        %v3048 = vshrl.u32 %v3047, 7
        %v3049 = vsub.s32 6, %v3048
        %v3050 = vrot.slane %v2946, %v3049
        %3052 = vbcast.lane.b32.xlu0 %v3050, 256
        %v3053 = vpop.permute.xlu0 %3052
        %v3054 = vlaneseq
        %v3055 = vshrl.u32 %v3054, 7
        %v3056 = vsub.s32 7, %v3055
        %v3057 = vrot.slane %v2946, %v3056
        %3059 = vbcast.lane.b32.xlu0 %v3057, 256
        %v3060 = vpop.permute.xlu0 %3059
        %v3077 = vmul.f32 %v2799, %v2955
        %v3078 = vmul.f32 %v2800, %v2962
        %v3079 = vmul.f32 %v2801, %v2969
        %v3080 = vmul.f32 %v2802, %v2976
        %v3081 = vmul.f32 %v2803, %v2983
        %v3082 = vmul.f32 %v2804, %v2990
        %v3083 = vmul.f32 %v2805, %v2997
        %v3084 = vmul.f32 %v2806, %v3004
        %v3085 = vmul.f32 %v2807, %v3011
        %v3086 = vmul.f32 %v2808, %v3018
        %v3087 = vmul.f32 %v2809, %v3025
        %v3088 = vmul.f32 %v2810, %v3032
        %v3089 = vmul.f32 %v2811, %v3039
        %v3090 = vmul.f32 %v2812, %v3046
        %v3091 = vmul.f32 %v2813, %v3053
        %v3092 = vmul.f32 %v2814, %v3060
        %v3093 = vadd.f32 %v3077, %v2728
        %v3094 = vadd.f32 %v3078, %v2729
        %v3095 = vadd.f32 %v3079, %v2730
        %v3096 = vadd.f32 %v3080, %v2731
        %v3097 = vadd.f32 %v3081, %v2732
        %v3098 = vadd.f32 %v3082, %v2733
        %v3099 = vadd.f32 %v3083, %v2734
        %v3100 = vadd.f32 %v3084, %v2735
        %v3101 = vadd.f32 %v3085, %v2736
        %v3102 = vadd.f32 %v3086, %v2737
        %v3103 = vadd.f32 %v3087, %v2738
        %v3104 = vadd.f32 %v3088, %v2739
        %v3105 = vadd.f32 %v3089, %v2740
        %v3106 = vadd.f32 %v3090, %v2741
        %v3107 = vadd.f32 %v3091, %v2742
        %v3108 = vadd.f32 %v3092, %v2743
        %v3111 = vlaneseq
        %v3112 = vshrl.u32 %v3111, 7
        %v3113 = vsub.s32 0, %v3112
        %v3114 = vrot.slane %v535, %v3113
        %3116 = vbcast.lane.b32.xlu0 %v3114, 256
        %v3117 = vpop.permute.xlu0 %3116
        %v3118 = vlaneseq
        %v3119 = vshrl.u32 %v3118, 7
        %v3120 = vsub.s32 1, %v3119
        %v3121 = vrot.slane %v535, %v3120
        %3123 = vbcast.lane.b32.xlu0 %v3121, 256
        %v3124 = vpop.permute.xlu0 %3123
        %v3125 = vlaneseq
        %v3126 = vshrl.u32 %v3125, 7
        %v3127 = vsub.s32 2, %v3126
        %v3128 = vrot.slane %v535, %v3127
        %3130 = vbcast.lane.b32.xlu0 %v3128, 256
        %v3131 = vpop.permute.xlu0 %3130
        %v3132 = vlaneseq
        %v3133 = vshrl.u32 %v3132, 7
        %v3134 = vsub.s32 3, %v3133
        %v3135 = vrot.slane %v535, %v3134
        %3137 = vbcast.lane.b32.xlu0 %v3135, 256
        %v3138 = vpop.permute.xlu0 %3137
        %v3139 = vlaneseq
        %v3140 = vshrl.u32 %v3139, 7
        %v3141 = vsub.s32 4, %v3140
        %v3142 = vrot.slane %v535, %v3141
        %3144 = vbcast.lane.b32.xlu0 %v3142, 256
        %v3145 = vpop.permute.xlu0 %3144
        %v3146 = vlaneseq
        %v3147 = vshrl.u32 %v3146, 7
        %v3148 = vsub.s32 5, %v3147
        %v3149 = vrot.slane %v535, %v3148
        %3151 = vbcast.lane.b32.xlu0 %v3149, 256
        %v3152 = vpop.permute.xlu0 %3151
        %v3153 = vlaneseq
        %v3154 = vshrl.u32 %v3153, 7
        %v3155 = vsub.s32 6, %v3154
        %v3156 = vrot.slane %v535, %v3155
        %3158 = vbcast.lane.b32.xlu0 %v3156, 256
        %v3159 = vpop.permute.xlu0 %3158
        %v3160 = vlaneseq
        %v3161 = vshrl.u32 %v3160, 7
        %v3162 = vsub.s32 7, %v3161
        %v3163 = vrot.slane %v535, %v3162
        %3165 = vbcast.lane.b32.xlu0 %v3163, 256
        %v3166 = vpop.permute.xlu0 %3165
        %v3167 = vlaneseq
        %v3168 = vshrl.u32 %v3167, 7
        %v3169 = vsub.s32 0, %v3168
        %v3170 = vrot.slane %v536, %v3169
        %3172 = vbcast.lane.b32.xlu0 %v3170, 256
        %v3173 = vpop.permute.xlu0 %3172
        %v3174 = vlaneseq
        %v3175 = vshrl.u32 %v3174, 7
        %v3176 = vsub.s32 1, %v3175
        %v3177 = vrot.slane %v536, %v3176
        %3179 = vbcast.lane.b32.xlu0 %v3177, 256
        %v3180 = vpop.permute.xlu0 %3179
        %v3181 = vlaneseq
        %v3182 = vshrl.u32 %v3181, 7
        %v3183 = vsub.s32 2, %v3182
        %v3184 = vrot.slane %v536, %v3183
        %3186 = vbcast.lane.b32.xlu0 %v3184, 256
        %v3187 = vpop.permute.xlu0 %3186
        %v3188 = vlaneseq
        %v3189 = vshrl.u32 %v3188, 7
        %v3190 = vsub.s32 3, %v3189
        %v3191 = vrot.slane %v536, %v3190
        %3193 = vbcast.lane.b32.xlu0 %v3191, 256
        %v3194 = vpop.permute.xlu0 %3193
        %v3195 = vlaneseq
        %v3196 = vshrl.u32 %v3195, 7
        %v3197 = vsub.s32 4, %v3196
        %v3198 = vrot.slane %v536, %v3197
        %3200 = vbcast.lane.b32.xlu0 %v3198, 256
        %v3201 = vpop.permute.xlu0 %3200
        %v3202 = vlaneseq
        %v3203 = vshrl.u32 %v3202, 7
        %v3204 = vsub.s32 5, %v3203
        %v3205 = vrot.slane %v536, %v3204
        %3207 = vbcast.lane.b32.xlu0 %v3205, 256
        %v3208 = vpop.permute.xlu0 %3207
        %v3209 = vlaneseq
        %v3210 = vshrl.u32 %v3209, 7
        %v3211 = vsub.s32 6, %v3210
        %v3212 = vrot.slane %v536, %v3211
        %3214 = vbcast.lane.b32.xlu0 %v3212, 256
        %v3215 = vpop.permute.xlu0 %3214
        %v3216 = vlaneseq
        %v3217 = vshrl.u32 %v3216, 7
        %v3218 = vsub.s32 7, %v3217
        %v3219 = vrot.slane %v536, %v3218
        %3221 = vbcast.lane.b32.xlu0 %v3219, 256
        %v3222 = vpop.permute.xlu0 %3221
        %v3239 = vmul.f32 %v3093, %v3117
        %v3240 = vmul.f32 %v3094, %v3124
        %v3241 = vmul.f32 %v3095, %v3131
        %v3242 = vmul.f32 %v3096, %v3138
        %v3243 = vmul.f32 %v3097, %v3145
        %v3244 = vmul.f32 %v3098, %v3152
        %v3245 = vmul.f32 %v3099, %v3159
        %v3246 = vmul.f32 %v3100, %v3166
        %v3247 = vmul.f32 %v3101, %v3173
        %v3248 = vmul.f32 %v3102, %v3180
        %v3249 = vmul.f32 %v3103, %v3187
        %v3250 = vmul.f32 %v3104, %v3194
        %v3251 = vmul.f32 %v3105, %v3201
        %v3252 = vmul.f32 %v3106, %v3208
        %v3253 = vmul.f32 %v3107, %v3215
        %v3254 = vmul.f32 %v3108, %v3222
        %3271 = vset.pattern.permute.xlu0 0
        %3272 = vperm.xlu0 %3271, %v3239
        %v3273 = vpop.permute.xlu0 %3272
        %3274 = vset.pattern.permute.xlu0 0
        %3275 = vperm.xlu0 %3274, %v3240
        %v3276 = vpop.permute.xlu0 %3275
        %3277 = vset.pattern.permute.xlu0 0
        %3278 = vperm.xlu0 %3277, %v3241
        %v3279 = vpop.permute.xlu0 %3278
        %3280 = vset.pattern.permute.xlu0 0
        %3281 = vperm.xlu0 %3280, %v3242
        %v3282 = vpop.permute.xlu0 %3281
        %3283 = vset.pattern.permute.xlu0 0
        %3284 = vperm.xlu0 %3283, %v3243
        %v3285 = vpop.permute.xlu0 %3284
        %3286 = vset.pattern.permute.xlu0 0
        %3287 = vperm.xlu0 %3286, %v3244
        %v3288 = vpop.permute.xlu0 %3287
        %3289 = vset.pattern.permute.xlu0 0
        %3290 = vperm.xlu0 %3289, %v3245
        %v3291 = vpop.permute.xlu0 %3290
        %3292 = vset.pattern.permute.xlu0 0
        %3293 = vperm.xlu0 %3292, %v3246
        %v3294 = vpop.permute.xlu0 %3293
        %3295 = vset.pattern.permute.xlu0 0
        %3296 = vperm.xlu0 %3295, %v3247
        %v3297 = vpop.permute.xlu0 %3296
        %3298 = vset.pattern.permute.xlu0 0
        %3299 = vperm.xlu0 %3298, %v3248
        %v3300 = vpop.permute.xlu0 %3299
        %3301 = vset.pattern.permute.xlu0 0
        %3302 = vperm.xlu0 %3301, %v3249
        %v3303 = vpop.permute.xlu0 %3302
        %3304 = vset.pattern.permute.xlu0 0
        %3305 = vperm.xlu0 %3304, %v3250
        %v3306 = vpop.permute.xlu0 %3305
        %3307 = vset.pattern.permute.xlu0 0
        %3308 = vperm.xlu0 %3307, %v3251
        %v3309 = vpop.permute.xlu0 %3308
        %3310 = vset.pattern.permute.xlu0 0
        %3311 = vperm.xlu0 %3310, %v3252
        %v3312 = vpop.permute.xlu0 %3311
        %3313 = vset.pattern.permute.xlu0 0
        %3314 = vperm.xlu0 %3313, %v3253
        %v3315 = vpop.permute.xlu0 %3314
        %3316 = vset.pattern.permute.xlu0 0
        %3317 = vperm.xlu0 %3316, %v3254
        %v3318 = vpop.permute.xlu0 %3317
        %v3319 = vlaneseq
        %v3320 = vand.u32 %v3319, 127
        %v3321 = vlaneseq
        %v3322 = vshrl.u32 %v3321, 7
        %v3323 = vsub.s32 %v3320, %v3322
        %v3324 = vrot.slane %v3273, %v3323
        %v3325 = vlaneseq
        %v3326 = vshrl.u32 %v3325, 7
        %v3327 = vsub.s32 %v3320, %v3326
        %v3328 = vrot.slane %v3276, %v3327
        %v3329 = vlaneseq
        %v3330 = vshrl.u32 %v3329, 7
        %v3331 = vsub.s32 %v3320, %v3330
        %v3332 = vrot.slane %v3279, %v3331
        %v3333 = vlaneseq
        %v3334 = vshrl.u32 %v3333, 7
        %v3335 = vsub.s32 %v3320, %v3334
        %v3336 = vrot.slane %v3282, %v3335
        %v3337 = vlaneseq
        %v3338 = vshrl.u32 %v3337, 7
        %v3339 = vsub.s32 %v3320, %v3338
        %v3340 = vrot.slane %v3285, %v3339
        %v3341 = vlaneseq
        %v3342 = vshrl.u32 %v3341, 7
        %v3343 = vsub.s32 %v3320, %v3342
        %v3344 = vrot.slane %v3288, %v3343
        %v3345 = vlaneseq
        %v3346 = vshrl.u32 %v3345, 7
        %v3347 = vsub.s32 %v3320, %v3346
        %v3348 = vrot.slane %v3291, %v3347
        %v3349 = vlaneseq
        %v3350 = vshrl.u32 %v3349, 7
        %v3351 = vsub.s32 %v3320, %v3350
        %v3352 = vrot.slane %v3294, %v3351
        %v3353 = vlaneseq
        %v3354 = vshrl.u32 %v3353, 7
        %v3355 = vsub.s32 %v3320, %v3354
        %v3356 = vrot.slane %v3297, %v3355
        %v3357 = vlaneseq
        %v3358 = vshrl.u32 %v3357, 7
        %v3359 = vsub.s32 %v3320, %v3358
        %v3360 = vrot.slane %v3300, %v3359
        %v3361 = vlaneseq
        %v3362 = vshrl.u32 %v3361, 7
        %v3363 = vsub.s32 %v3320, %v3362
        %v3364 = vrot.slane %v3303, %v3363
        %v3365 = vlaneseq
        %v3366 = vshrl.u32 %v3365, 7
        %v3367 = vsub.s32 %v3320, %v3366
        %v3368 = vrot.slane %v3306, %v3367
        %v3369 = vlaneseq
        %v3370 = vshrl.u32 %v3369, 7
        %v3371 = vsub.s32 %v3320, %v3370
        %v3372 = vrot.slane %v3309, %v3371
        %v3373 = vlaneseq
        %v3374 = vshrl.u32 %v3373, 7
        %v3375 = vsub.s32 %v3320, %v3374
        %v3376 = vrot.slane %v3312, %v3375
        %v3377 = vlaneseq
        %v3378 = vshrl.u32 %v3377, 7
        %v3379 = vsub.s32 %v3320, %v3378
        %v3380 = vrot.slane %v3315, %v3379
        %v3381 = vlaneseq
        %v3382 = vshrl.u32 %v3381, 7
        %v3383 = vsub.s32 %v3320, %v3382
        %v3384 = vrot.slane %v3318, %v3383
        %vm3385 = vcmask 1041409
        %v3386 = vsel %vm3385, %v3328, %v3324
        %vm3387 = vcmask 1042434
        %v3388 = vsel %vm3387, %v3332, %v3386
        %vm3389 = vcmask 1043459
        %v3390 = vsel %vm3389, %v3336, %v3388
        %vm3391 = vcmask 1044484
        %v3392 = vsel %vm3391, %v3340, %v3390
        %vm3393 = vcmask 1045509
        %v3394 = vsel %vm3393, %v3344, %v3392
        %vm3395 = vcmask 1046534
        %v3396 = vsel %vm3395, %v3348, %v3394
        %vm3397 = vcmask 1047559
        %v3398 = vsel %vm3397, %v3352, %v3396
        %v3399 = vsel %vm3385, %v3360, %v3356
        %v3400 = vsel %vm3387, %v3364, %v3399
        %v3401 = vsel %vm3389, %v3368, %v3400
        %v3402 = vsel %vm3391, %v3372, %v3401
        %v3403 = vsel %vm3393, %v3376, %v3402
        %v3404 = vsel %vm3395, %v3380, %v3403
        %v3405 = vsel %vm3397, %v3384, %v3404
        %3408 = vxpose.xlu0.b32.start [1/16] %v3398, 128
        %3409 = vxpose.xlu0.b32.cont [2/16] 0.0, 128
        %3410 = vxpose.xlu0.b32.cont [3/16] 0.0, 128
        %3411 = vxpose.xlu0.b32.cont [4/16] 0.0, 128
        %3412 = vxpose.xlu0.b32.cont [5/16] 0.0, 128
        %3413 = vxpose.xlu0.b32.cont [6/16] 0.0, 128
        %3414 = vxpose.xlu0.b32.cont [7/16] 0.0, 128
        %3415 = vxpose.xlu0.b32.cont [8/16] 0.0, 128
        %3416 = vxpose.xlu0.b32.cont [9/16] 0.0, 128
        %3417 = vxpose.xlu0.b32.cont [10/16] 0.0, 128
        %3418 = vxpose.xlu0.b32.cont [11/16] 0.0, 128
        %3419 = vxpose.xlu0.b32.cont [12/16] 0.0, 128
        %3420 = vxpose.xlu0.b32.cont [13/16] 0.0, 128
        %3421 = vxpose.xlu0.b32.cont [14/16] 0.0, 128
        %3422 = vxpose.xlu0.b32.cont [15/16] 0.0, 128
        %3423 = vxpose.xlu0.b32.end [16/16] 0.0, 128
        %v3424 = vpop.trf.xlu0
        %v3425 = vpop.trf.xlu0
        %v3426 = vpop.trf.xlu0
        %v3427 = vpop.trf.xlu0
        %v3428 = vpop.trf.xlu0
        %v3429 = vpop.trf.xlu0
        %v3430 = vpop.trf.xlu0
        %v3431 = vpop.trf.xlu0
        %v3432 = vpop.trf.xlu0
        %v3433 = vpop.trf.xlu0
        %v3434 = vpop.trf.xlu0
        %v3435 = vpop.trf.xlu0
        %v3436 = vpop.trf.xlu0
        %v3437 = vpop.trf.xlu0
        %v3438 = vpop.trf.xlu0
        %v3439 = vpop.trf.xlu0
        %3440 = vxpose.xlu0.b32.start [1/16] %v3405, 128
        %3441 = vxpose.xlu0.b32.cont [2/16] 0.0, 128
        %3442 = vxpose.xlu0.b32.cont [3/16] 0.0, 128
        %3443 = vxpose.xlu0.b32.cont [4/16] 0.0, 128
        %3444 = vxpose.xlu0.b32.cont [5/16] 0.0, 128
        %3445 = vxpose.xlu0.b32.cont [6/16] 0.0, 128
        %3446 = vxpose.xlu0.b32.cont [7/16] 0.0, 128
        %3447 = vxpose.xlu0.b32.cont [8/16] 0.0, 128
        %3448 = vxpose.xlu0.b32.cont [9/16] 0.0, 128
        %3449 = vxpose.xlu0.b32.cont [10/16] 0.0, 128
        %3450 = vxpose.xlu0.b32.cont [11/16] 0.0, 128
        %3451 = vxpose.xlu0.b32.cont [12/16] 0.0, 128
        %3452 = vxpose.xlu0.b32.cont [13/16] 0.0, 128
        %3453 = vxpose.xlu0.b32.cont [14/16] 0.0, 128
        %3454 = vxpose.xlu0.b32.cont [15/16] 0.0, 128
        %3455 = vxpose.xlu0.b32.end [16/16] 0.0, 128
        %v3456 = vpop.trf.xlu0
        %v3457 = vpop.trf.xlu0
        %v3458 = vpop.trf.xlu0
        %v3459 = vpop.trf.xlu0
        %v3460 = vpop.trf.xlu0
        %v3461 = vpop.trf.xlu0
        %v3462 = vpop.trf.xlu0
        %v3463 = vpop.trf.xlu0
        %v3464 = vpop.trf.xlu0
        %v3465 = vpop.trf.xlu0
        %v3466 = vpop.trf.xlu0
        %v3467 = vpop.trf.xlu0
        %v3468 = vpop.trf.xlu0
        %v3469 = vpop.trf.xlu0
        %v3470 = vpop.trf.xlu0
        %v3471 = vpop.trf.xlu0
        %v3474 = vlaneseq
        %v3475 = vshrl.u32 %v3474, 7
        %v3476 = vsub.s32 0, %v3475
        %v3477 = vrot.slane %v3424, %v3476
        %3479 = vbcast.lane.b32.xlu0 %v3477, 256
        %v3480 = vpop.permute.xlu0 %3479
        %v3481 = vlaneseq
        %v3482 = vshrl.u32 %v3481, 7
        %v3483 = vsub.s32 1, %v3482
        %v3484 = vrot.slane %v3424, %v3483
        %3486 = vbcast.lane.b32.xlu0 %v3484, 256
        %v3487 = vpop.permute.xlu0 %3486
        %v3488 = vlaneseq
        %v3489 = vshrl.u32 %v3488, 7
        %v3490 = vsub.s32 2, %v3489
        %v3491 = vrot.slane %v3424, %v3490
        %3493 = vbcast.lane.b32.xlu0 %v3491, 256
        %v3494 = vpop.permute.xlu0 %3493
        %v3495 = vlaneseq
        %v3496 = vshrl.u32 %v3495, 7
        %v3497 = vsub.s32 3, %v3496
        %v3498 = vrot.slane %v3424, %v3497
        %3500 = vbcast.lane.b32.xlu0 %v3498, 256
        %v3501 = vpop.permute.xlu0 %3500
        %v3502 = vlaneseq
        %v3503 = vshrl.u32 %v3502, 7
        %v3504 = vsub.s32 4, %v3503
        %v3505 = vrot.slane %v3424, %v3504
        %3507 = vbcast.lane.b32.xlu0 %v3505, 256
        %v3508 = vpop.permute.xlu0 %3507
        %v3509 = vlaneseq
        %v3510 = vshrl.u32 %v3509, 7
        %v3511 = vsub.s32 5, %v3510
        %v3512 = vrot.slane %v3424, %v3511
        %3514 = vbcast.lane.b32.xlu0 %v3512, 256
        %v3515 = vpop.permute.xlu0 %3514
        %v3516 = vlaneseq
        %v3517 = vshrl.u32 %v3516, 7
        %v3518 = vsub.s32 6, %v3517
        %v3519 = vrot.slane %v3424, %v3518
        %3521 = vbcast.lane.b32.xlu0 %v3519, 256
        %v3522 = vpop.permute.xlu0 %3521
        %v3523 = vlaneseq
        %v3524 = vshrl.u32 %v3523, 7
        %v3525 = vsub.s32 7, %v3524
        %v3526 = vrot.slane %v3424, %v3525
        %3528 = vbcast.lane.b32.xlu0 %v3526, 256
        %v3529 = vpop.permute.xlu0 %3528
        %v3530 = vlaneseq
        %v3531 = vshrl.u32 %v3530, 7
        %v3532 = vsub.s32 0, %v3531
        %v3533 = vrot.slane %v3456, %v3532
        %3535 = vbcast.lane.b32.xlu0 %v3533, 256
        %v3536 = vpop.permute.xlu0 %3535
        %v3537 = vlaneseq
        %v3538 = vshrl.u32 %v3537, 7
        %v3539 = vsub.s32 1, %v3538
        %v3540 = vrot.slane %v3456, %v3539
        %3542 = vbcast.lane.b32.xlu0 %v3540, 256
        %v3543 = vpop.permute.xlu0 %3542
        %v3544 = vlaneseq
        %v3545 = vshrl.u32 %v3544, 7
        %v3546 = vsub.s32 2, %v3545
        %v3547 = vrot.slane %v3456, %v3546
        %3549 = vbcast.lane.b32.xlu0 %v3547, 256
        %v3550 = vpop.permute.xlu0 %3549
        %v3551 = vlaneseq
        %v3552 = vshrl.u32 %v3551, 7
        %v3553 = vsub.s32 3, %v3552
        %v3554 = vrot.slane %v3456, %v3553
        %3556 = vbcast.lane.b32.xlu0 %v3554, 256
        %v3557 = vpop.permute.xlu0 %3556
        %v3558 = vlaneseq
        %v3559 = vshrl.u32 %v3558, 7
        %v3560 = vsub.s32 4, %v3559
        %v3561 = vrot.slane %v3456, %v3560
        %3563 = vbcast.lane.b32.xlu0 %v3561, 256
        %v3564 = vpop.permute.xlu0 %3563
        %v3565 = vlaneseq
        %v3566 = vshrl.u32 %v3565, 7
        %v3567 = vsub.s32 5, %v3566
        %v3568 = vrot.slane %v3456, %v3567
        %3570 = vbcast.lane.b32.xlu0 %v3568, 256
        %v3571 = vpop.permute.xlu0 %3570
        %v3572 = vlaneseq
        %v3573 = vshrl.u32 %v3572, 7
        %v3574 = vsub.s32 6, %v3573
        %v3575 = vrot.slane %v3456, %v3574
        %3577 = vbcast.lane.b32.xlu0 %v3575, 256
        %v3578 = vpop.permute.xlu0 %3577
        %v3579 = vlaneseq
        %v3580 = vshrl.u32 %v3579, 7
        %v3581 = vsub.s32 7, %v3580
        %v3582 = vrot.slane %v3456, %v3581
        %3584 = vbcast.lane.b32.xlu0 %v3582, 256
        %v3585 = vpop.permute.xlu0 %3584
        %v3602 = vadd.f32 %v3239, %v3480
        %v3603 = vadd.f32 %v3240, %v3487
        %v3604 = vadd.f32 %v3241, %v3494
        %v3605 = vadd.f32 %v3242, %v3501
        %v3606 = vadd.f32 %v3243, %v3508
        %v3607 = vadd.f32 %v3244, %v3515
        %v3608 = vadd.f32 %v3245, %v3522
        %v3609 = vadd.f32 %v3246, %v3529
        %v3610 = vadd.f32 %v3247, %v3536
        %v3611 = vadd.f32 %v3248, %v3543
        %v3612 = vadd.f32 %v3249, %v3550
        %v3613 = vadd.f32 %v3250, %v3557
        %v3614 = vadd.f32 %v3251, %v3564
        %v3615 = vadd.f32 %v3252, %v3571
        %v3616 = vadd.f32 %v3253, %v3578
        %v3617 = vadd.f32 %v3254, %v3585
        %3634 = vset.pattern.permute.xlu0 0
        %3635 = vperm.xlu0 %3634, %v3602
        %v3636 = vpop.permute.xlu0 %3635
        %3637 = vset.pattern.permute.xlu0 0
        %3638 = vperm.xlu0 %3637, %v3603
        %v3639 = vpop.permute.xlu0 %3638
        %3640 = vset.pattern.permute.xlu0 0
        %3641 = vperm.xlu0 %3640, %v3604
        %v3642 = vpop.permute.xlu0 %3641
        %3643 = vset.pattern.permute.xlu0 0
        %3644 = vperm.xlu0 %3643, %v3605
        %v3645 = vpop.permute.xlu0 %3644
        %3646 = vset.pattern.permute.xlu0 0
        %3647 = vperm.xlu0 %3646, %v3606
        %v3648 = vpop.permute.xlu0 %3647
        %3649 = vset.pattern.permute.xlu0 0
        %3650 = vperm.xlu0 %3649, %v3607
        %v3651 = vpop.permute.xlu0 %3650
        %3652 = vset.pattern.permute.xlu0 0
        %3653 = vperm.xlu0 %3652, %v3608
        %v3654 = vpop.permute.xlu0 %3653
        %3655 = vset.pattern.permute.xlu0 0
        %3656 = vperm.xlu0 %3655, %v3609
        %v3657 = vpop.permute.xlu0 %3656
        %3658 = vset.pattern.permute.xlu0 0
        %3659 = vperm.xlu0 %3658, %v3610
        %v3660 = vpop.permute.xlu0 %3659
        %3661 = vset.pattern.permute.xlu0 0
        %3662 = vperm.xlu0 %3661, %v3611
        %v3663 = vpop.permute.xlu0 %3662
        %3664 = vset.pattern.permute.xlu0 0
        %3665 = vperm.xlu0 %3664, %v3612
        %v3666 = vpop.permute.xlu0 %3665
        %3667 = vset.pattern.permute.xlu0 0
        %3668 = vperm.xlu0 %3667, %v3613
        %v3669 = vpop.permute.xlu0 %3668
        %3670 = vset.pattern.permute.xlu0 0
        %3671 = vperm.xlu0 %3670, %v3614
        %v3672 = vpop.permute.xlu0 %3671
        %3673 = vset.pattern.permute.xlu0 0
        %3674 = vperm.xlu0 %3673, %v3615
        %v3675 = vpop.permute.xlu0 %3674
        %3676 = vset.pattern.permute.xlu0 0
        %3677 = vperm.xlu0 %3676, %v3616
        %v3678 = vpop.permute.xlu0 %3677
        %3679 = vset.pattern.permute.xlu0 0
        %3680 = vperm.xlu0 %3679, %v3617
        %v3681 = vpop.permute.xlu0 %3680
        %v3682 = vlaneseq
        %v3683 = vshrl.u32 %v3682, 7
        %v3684 = vsub.s32 %v3320, %v3683
        %v3685 = vrot.slane %v3636, %v3684
        %v3686 = vlaneseq
        %v3687 = vshrl.u32 %v3686, 7
        %v3688 = vsub.s32 %v3320, %v3687
        %v3689 = vrot.slane %v3639, %v3688
        %v3690 = vlaneseq
        %v3691 = vshrl.u32 %v3690, 7
        %v3692 = vsub.s32 %v3320, %v3691
        %v3693 = vrot.slane %v3642, %v3692
        %v3694 = vlaneseq
        %v3695 = vshrl.u32 %v3694, 7
        %v3696 = vsub.s32 %v3320, %v3695
        %v3697 = vrot.slane %v3645, %v3696
        %v3698 = vlaneseq
        %v3699 = vshrl.u32 %v3698, 7
        %v3700 = vsub.s32 %v3320, %v3699
        %v3701 = vrot.slane %v3648, %v3700
        %v3702 = vlaneseq
        %v3703 = vshrl.u32 %v3702, 7
        %v3704 = vsub.s32 %v3320, %v3703
        %v3705 = vrot.slane %v3651, %v3704
        %v3706 = vlaneseq
        %v3707 = vshrl.u32 %v3706, 7
        %v3708 = vsub.s32 %v3320, %v3707
        %v3709 = vrot.slane %v3654, %v3708
        %v3710 = vlaneseq
        %v3711 = vshrl.u32 %v3710, 7
        %v3712 = vsub.s32 %v3320, %v3711
        %v3713 = vrot.slane %v3657, %v3712
        %v3714 = vlaneseq
        %v3715 = vshrl.u32 %v3714, 7
        %v3716 = vsub.s32 %v3320, %v3715
        %v3717 = vrot.slane %v3660, %v3716
        %v3718 = vlaneseq
        %v3719 = vshrl.u32 %v3718, 7
        %v3720 = vsub.s32 %v3320, %v3719
        %v3721 = vrot.slane %v3663, %v3720
        %v3722 = vlaneseq
        %v3723 = vshrl.u32 %v3722, 7
        %v3724 = vsub.s32 %v3320, %v3723
        %v3725 = vrot.slane %v3666, %v3724
        %v3726 = vlaneseq
        %v3727 = vshrl.u32 %v3726, 7
        %v3728 = vsub.s32 %v3320, %v3727
        %v3729 = vrot.slane %v3669, %v3728
        %v3730 = vlaneseq
        %v3731 = vshrl.u32 %v3730, 7
        %v3732 = vsub.s32 %v3320, %v3731
        %v3733 = vrot.slane %v3672, %v3732
        %v3734 = vlaneseq
        %v3735 = vshrl.u32 %v3734, 7
        %v3736 = vsub.s32 %v3320, %v3735
        %v3737 = vrot.slane %v3675, %v3736
        %v3738 = vlaneseq
        %v3739 = vshrl.u32 %v3738, 7
        %v3740 = vsub.s32 %v3320, %v3739
        %v3741 = vrot.slane %v3678, %v3740
        %v3742 = vlaneseq
        %v3743 = vshrl.u32 %v3742, 7
        %v3744 = vsub.s32 %v3320, %v3743
        %v3745 = vrot.slane %v3681, %v3744
        %v3746 = vsel %vm3385, %v3689, %v3685
        %v3747 = vsel %vm3387, %v3693, %v3746
        %v3748 = vsel %vm3389, %v3697, %v3747
        %v3749 = vsel %vm3391, %v3701, %v3748
        %v3750 = vsel %vm3393, %v3705, %v3749
        %v3751 = vsel %vm3395, %v3709, %v3750
        %v3752 = vsel %vm3397, %v3713, %v3751
        %v3753 = vsel %vm3385, %v3721, %v3717
        %v3754 = vsel %vm3387, %v3725, %v3753
        %v3755 = vsel %vm3389, %v3729, %v3754
        %v3756 = vsel %vm3391, %v3733, %v3755
        %v3757 = vsel %vm3393, %v3737, %v3756
        %v3758 = vsel %vm3395, %v3741, %v3757
        %v3759 = vsel %vm3397, %v3745, %v3758
        %3762 = vst.msk [vmem:[#allocation14] sm:$0xff] %vm556, %v3752
        %3763 = vst.msk [vmem:[#allocation14 + $0x8] sm:$0xff] %vm556, %v3759
        %v3764 = vmul.f32 %v3602, 0.1
        %v3765 = vmul.f32 %v3603, 0.1
        %v3766 = vmul.f32 %v3604, 0.1
        %v3767 = vmul.f32 %v3605, 0.1
        %v3768 = vmul.f32 %v3606, 0.1
        %v3769 = vmul.f32 %v3607, 0.1
        %v3770 = vmul.f32 %v3608, 0.1
        %v3771 = vmul.f32 %v3609, 0.1
        %v3772 = vmul.f32 %v3610, 0.1
        %v3773 = vmul.f32 %v3611, 0.1
        %v3774 = vmul.f32 %v3612, 0.1
        %v3775 = vmul.f32 %v3613, 0.1
        %v3776 = vmul.f32 %v3614, 0.1
        %v3777 = vmul.f32 %v3615, 0.1
        %v3778 = vmul.f32 %v3616, 0.1
        %v3779 = vmul.f32 %v3617, 0.1
        %3796 = vset.pattern.permute.xlu0 0
        %3797 = vperm.xlu0 %3796, %v3764
        %v3798 = vpop.permute.xlu0 %3797
        %3799 = vset.pattern.permute.xlu0 0
        %3800 = vperm.xlu0 %3799, %v3765
        %v3801 = vpop.permute.xlu0 %3800
        %3802 = vset.pattern.permute.xlu0 0
        %3803 = vperm.xlu0 %3802, %v3766
        %v3804 = vpop.permute.xlu0 %3803
        %3805 = vset.pattern.permute.xlu0 0
        %3806 = vperm.xlu0 %3805, %v3767
        %v3807 = vpop.permute.xlu0 %3806
        %3808 = vset.pattern.permute.xlu0 0
        %3809 = vperm.xlu0 %3808, %v3768
        %v3810 = vpop.permute.xlu0 %3809
        %3811 = vset.pattern.permute.xlu0 0
        %3812 = vperm.xlu0 %3811, %v3769
        %v3813 = vpop.permute.xlu0 %3812
        %3814 = vset.pattern.permute.xlu0 0
        %3815 = vperm.xlu0 %3814, %v3770
        %v3816 = vpop.permute.xlu0 %3815
        %3817 = vset.pattern.permute.xlu0 0
        %3818 = vperm.xlu0 %3817, %v3771
        %v3819 = vpop.permute.xlu0 %3818
        %3820 = vset.pattern.permute.xlu0 0
        %3821 = vperm.xlu0 %3820, %v3772
        %v3822 = vpop.permute.xlu0 %3821
        %3823 = vset.pattern.permute.xlu0 0
        %3824 = vperm.xlu0 %3823, %v3773
        %v3825 = vpop.permute.xlu0 %3824
        %3826 = vset.pattern.permute.xlu0 0
        %3827 = vperm.xlu0 %3826, %v3774
        %v3828 = vpop.permute.xlu0 %3827
        %3829 = vset.pattern.permute.xlu0 0
        %3830 = vperm.xlu0 %3829, %v3775
        %v3831 = vpop.permute.xlu0 %3830
        %3832 = vset.pattern.permute.xlu0 0
        %3833 = vperm.xlu0 %3832, %v3776
        %v3834 = vpop.permute.xlu0 %3833
        %3835 = vset.pattern.permute.xlu0 0
        %3836 = vperm.xlu0 %3835, %v3777
        %v3837 = vpop.permute.xlu0 %3836
        %3838 = vset.pattern.permute.xlu0 0
        %3839 = vperm.xlu0 %3838, %v3778
        %v3840 = vpop.permute.xlu0 %3839
        %3841 = vset.pattern.permute.xlu0 0
        %3842 = vperm.xlu0 %3841, %v3779
        %v3843 = vpop.permute.xlu0 %3842
        %v3844 = vlaneseq
        %v3845 = vshrl.u32 %v3844, 7
        %v3846 = vsub.s32 %v3320, %v3845
        %v3847 = vrot.slane %v3798, %v3846
        %v3848 = vlaneseq
        %v3849 = vshrl.u32 %v3848, 7
        %v3850 = vsub.s32 %v3320, %v3849
        %v3851 = vrot.slane %v3801, %v3850
        %v3852 = vlaneseq
        %v3853 = vshrl.u32 %v3852, 7
        %v3854 = vsub.s32 %v3320, %v3853
        %v3855 = vrot.slane %v3804, %v3854
        %v3856 = vlaneseq
        %v3857 = vshrl.u32 %v3856, 7
        %v3858 = vsub.s32 %v3320, %v3857
        %v3859 = vrot.slane %v3807, %v3858
        %v3860 = vlaneseq
        %v3861 = vshrl.u32 %v3860, 7
        %v3862 = vsub.s32 %v3320, %v3861
        %v3863 = vrot.slane %v3810, %v3862
        %v3864 = vlaneseq
        %v3865 = vshrl.u32 %v3864, 7
        %v3866 = vsub.s32 %v3320, %v3865
        %v3867 = vrot.slane %v3813, %v3866
        %v3868 = vlaneseq
        %v3869 = vshrl.u32 %v3868, 7
        %v3870 = vsub.s32 %v3320, %v3869
        %v3871 = vrot.slane %v3816, %v3870
        %v3872 = vlaneseq
        %v3873 = vshrl.u32 %v3872, 7
        %v3874 = vsub.s32 %v3320, %v3873
        %v3875 = vrot.slane %v3819, %v3874
        %v3876 = vlaneseq
        %v3877 = vshrl.u32 %v3876, 7
        %v3878 = vsub.s32 %v3320, %v3877
        %v3879 = vrot.slane %v3822, %v3878
        %v3880 = vlaneseq
        %v3881 = vshrl.u32 %v3880, 7
        %v3882 = vsub.s32 %v3320, %v3881
        %v3883 = vrot.slane %v3825, %v3882
        %v3884 = vlaneseq
        %v3885 = vshrl.u32 %v3884, 7
        %v3886 = vsub.s32 %v3320, %v3885
        %v3887 = vrot.slane %v3828, %v3886
        %v3888 = vlaneseq
        %v3889 = vshrl.u32 %v3888, 7
        %v3890 = vsub.s32 %v3320, %v3889
        %v3891 = vrot.slane %v3831, %v3890
        %v3892 = vlaneseq
        %v3893 = vshrl.u32 %v3892, 7
        %v3894 = vsub.s32 %v3320, %v3893
        %v3895 = vrot.slane %v3834, %v3894
        %v3896 = vlaneseq
        %v3897 = vshrl.u32 %v3896, 7
        %v3898 = vsub.s32 %v3320, %v3897
        %v3899 = vrot.slane %v3837, %v3898
        %v3900 = vlaneseq
        %v3901 = vshrl.u32 %v3900, 7
        %v3902 = vsub.s32 %v3320, %v3901
        %v3903 = vrot.slane %v3840, %v3902
        %v3904 = vlaneseq
        %v3905 = vshrl.u32 %v3904, 7
        %v3906 = vsub.s32 %v3320, %v3905
        %v3907 = vrot.slane %v3843, %v3906
        %v3908 = vsel %vm3385, %v3851, %v3847
        %v3909 = vsel %vm3387, %v3855, %v3908
        %v3910 = vsel %vm3389, %v3859, %v3909
        %v3911 = vsel %vm3391, %v3863, %v3910
        %v3912 = vsel %vm3393, %v3867, %v3911
        %v3913 = vsel %vm3395, %v3871, %v3912
        %v3914 = vsel %vm3397, %v3875, %v3913
        %v3915 = vsel %vm3385, %v3883, %v3879
        %v3916 = vsel %vm3387, %v3887, %v3915
        %v3917 = vsel %vm3389, %v3891, %v3916
        %v3918 = vsel %vm3391, %v3895, %v3917
        %v3919 = vsel %vm3393, %v3899, %v3918
        %v3920 = vsel %vm3395, %v3903, %v3919
        %v3921 = vsel %vm3397, %v3907, %v3920
        %v3924 = vadd.f32 %v531, %v3914
        %v3925 = vadd.f32 %v532, %v3921
        %3926 = vst.msk [vmem:[#allocation2] sm:$0xff] %vm556, %v3924
        %3927 = vst.msk [vmem:[#allocation2 + $0x8] sm:$0xff] %vm556, %v3925
        // Predicated region
        $region105: #{score_network_forward.1} parent=75 // pred_check
          %p3928 = pneg %p337
        $region106: #{score_network_forward.1} parent=75 // pred_check_branch
          %3930 = sbr.rel (%p3928) target = $region108
        $region107: #{score_network_forward.1} parent=75 // pred_region
          %s3932 = ssub.s32 256, 256
          %3933 = vsyncadd [#allocation5], %s3932
          %s3934 = sshll.u32 [#allocation14], 4
          %s3935 = int_to_ptr.vmem [resolvable:$true] %s3934
          %3940 = dma.vmem_to_hbm [thread:$0]  %s3935, 256, %s14, [#allocation5], 128, 128, 8
        $region108: #{score_network_forward.1} parent=75 // pred_fallthru
          _
        // Predicated region
        $region109: #{score_network_forward.1} parent=75 // pred_check
          %p3941 = pneg %p337
        $region110: #{score_network_forward.1} parent=75 // pred_check_branch
          %3943 = sbr.rel (%p3941) target = $region112
        $region111: #{score_network_forward.1} parent=75 // pred_region
          %3944 = dma.done [#allocation5], 256
        $region112: #{score_network_forward.1} parent=75 // pred_fallthru
          _
      $region76: #{score_network_forward.1} parent=5 // pred_fallthru
        _
      %p3945 = scmp.le.s32.totalorder 2, %s25
      // Predicated region
      $region113: #{score_network_forward.1} parent=5 // pred_check
        %p3946 = pneg %p3945
      $region114: #{score_network_forward.1} parent=5 // pred_check_branch
        %3948 = sbr.rel (%p3946) target = $region116
      $region115: #{score_network_forward.1} parent=5 // pred_region
        %s3949 = ssub.s32 %s25, 2
      $region116: #{score_network_forward.1} parent=5 // pred_fallthru
        _
    $region6: #{score_network_forward.1} parent=1 // loop_footer
      %s29 = sadd.s32 1, %s25
    $region7: #{score_network_forward.1} parent=1 // loop_footer_branch
      %24 = sbr.rel target = $region3
    $region8: #{score_network_forward.1} parent=1 // loop_exit
      _
    %3950 = vsyncpa [#allocation4], 1
    %s3951 = scalar_lea.sflag [#allocation4], 1
    %3952 = vsyncpa %s3951, 1
    %3953 = vsyncpa [#allocation8], 1
    %3954 = vsyncpa [#allocation11], 1
    %3955 = vsyncpa [#allocation5], 1
    %s3956 = scalar_lea.sflag [#allocation5], 1
    %3957 = vsyncpa %s3956, 1
    %3958 = vsyncpa [#allocation6], 1
    %s3959 = scalar_lea.sflag [#allocation6], 1
    %3960 = vsyncpa %s3959, 1

</llo_original>
